<compile_context>
chip_gen: v5e
topology: v5e:2x2
jax: 0.10.0
libtpu: 0.0.40
codegen_flags: <defaults>
</compile_context>

<pallas_src>
import math
import functools

import jax
import jax.numpy as jnp
from jax.experimental import pallas as pl
from jax.experimental.pallas import tpu as pltpu


# ----------------------------------------------------------------------------
# Fused Pallas kernel: [TransformerEncoderLayer x L] + Linear + ReLU
# ----------------------------------------------------------------------------
_PER_LAYER_REFS = 12  # wqkv, bqkv, wo, bo, g1, be1, w1, bf1, w2, bf2, g2, be2


def _com_cog_kernel(B, S, H, n_layers, x_ref, *refs):
    o_ref = refs[-1]
    prefs = refs[:-1]

    D = x_ref.shape[-1]
    Dh = D // H
    eps = 1e-5
    scale = 1.0 / math.sqrt(Dh)

    def layer_norm(y, g, b):
        # single-pass statistics: var = E[y^2] - mu^2
        mu = jnp.mean(y, axis=-1, keepdims=True)
        msq = jnp.mean(y * y, axis=-1, keepdims=True)
        var = msq - mu * mu
        return (y - mu) * jax.lax.rsqrt(var + eps) * g + b

    x = x_ref[...]                                            # (B*S, D) f32 residual

    for l in range(n_layers):                                 # static unroll (L=2)
        (wqkv, bqkv, wo, bo, g1, be1,
         w1, bf1, w2, bf2, g2, be2) = prefs[l * _PER_LAYER_REFS:(l + 1) * _PER_LAYER_REFS]

        # --- fused QKV projection (one MXU matmul, bf16 operands, f32 acc) -------
        qkv = jnp.dot(x.astype(jnp.bfloat16), wqkv[...],
                      preferred_element_type=jnp.float32) + bqkv[...]   # (B*S, 3D)
        qkv3 = qkv.reshape(B, S, 3 * D)                       # leading-dim split only

        # --- multi-head self attention (static loop over heads, batched over B) --
        attn = jnp.zeros((B * S, D), jnp.float32)
        for h in range(H):
            qh = qkv3[:, :, h * Dh:(h + 1) * Dh].astype(jnp.bfloat16)          # (B,S,Dh)
            kh = qkv3[:, :, D + h * Dh:D + (h + 1) * Dh].astype(jnp.bfloat16)
            vh = qkv3[:, :, 2 * D + h * Dh:2 * D + (h + 1) * Dh].astype(jnp.bfloat16)

            s = jnp.einsum('bqd,bkd->bqk', qh, kh,
                           preferred_element_type=jnp.float32) * scale          # (B,S,S)
            s = s - jnp.max(s, axis=-1, keepdims=True)
            p = jnp.exp(s)
            p = p * pl.reciprocal(jnp.sum(p, axis=-1, keepdims=True), approx=True)

            oh = jnp.einsum('bqk,bkd->bqd', p.astype(jnp.bfloat16), vh,
                            preferred_element_type=jnp.float32)                 # (B,S,Dh)

            # concat(heads) @ Wo  ==  sum_h head_h @ Wo_rows[h]
            attn = attn + jnp.dot(oh.reshape(B * S, Dh).astype(jnp.bfloat16), wo[h],
                                  preferred_element_type=jnp.float32)
        attn = attn + bo[...]

        # --- add & norm 1 ---------------------------------------------------------
        x = layer_norm(x + attn, g1[...], be1[...])

        # --- feed forward (ReLU) ---------------------------------------------------
        h1 = jnp.maximum(
            jnp.dot(x.astype(jnp.bfloat16), w1[...],
                    preferred_element_type=jnp.float32) + bf1[...], 0.0)
        h2 = jnp.dot(h1.astype(jnp.bfloat16), w2[...],
                     preferred_element_type=jnp.float32) + bf2[...]

        # --- add & norm 2 ---------------------------------------------------------
        x = layer_norm(x + h2, g2[...], be2[...])

    # --- final Linear + ReLU (dropout is identity in eval mode) --------------------
    w_lin = prefs[n_layers * _PER_LAYER_REFS]
    b_lin = prefs[n_layers * _PER_LAYER_REFS + 1]
    y = jnp.dot(x.astype(jnp.bfloat16), w_lin[...],
                preferred_element_type=jnp.float32) + b_lin[...]
    o_ref[...] = jnp.maximum(y, 0.0)
    # TODO(synk): training-mode nn.Dropout (RNG mask) intentionally omitted (eval semantics).


# ----------------------------------------------------------------------------
# pallas_call wrapper
# ----------------------------------------------------------------------------
def _full_spec(shape):
    nd = len(shape)
    return pl.BlockSpec(shape, lambda *_: (0,) * nd)


def com_cog_forward(cog, params, num_heads):
    B, S, D = cog.shape
    Dh = D // num_heads
    x = cog.reshape(B * S, D).astype(jnp.float32)

    # Flatten / pre-pack parameters: fuse QKV, split Wo by head rows, cast matmul
    # weights to bf16 (biases / LayerNorm params stay f32).
    flat = []
    for lp in params["layers"]:
        wqkv = jnp.concatenate([lp["wq"], lp["wk"], lp["wv"]], axis=1).astype(jnp.bfloat16)
        bqkv = jnp.concatenate([lp["bq"], lp["bk"], lp["bv"]], axis=1)
        wo = lp["wo"].reshape(num_heads, Dh, D).astype(jnp.bfloat16)
        flat += [wqkv, bqkv, wo, lp["bo"], lp["g1"], lp["be1"],
                 lp["w1"].astype(jnp.bfloat16), lp["bf1"],
                 lp["w2"].astype(jnp.bfloat16), lp["bf2"], lp["g2"], lp["be2"]]
    flat += [params["w_lin"].astype(jnp.bfloat16), params["b_lin"]]

    n_layers = len(params["layers"])
    args = (x, *flat)
    kernel = functools.partial(_com_cog_kernel, B, S, num_heads, n_layers)

    out = pl.pallas_call(
        kernel,
        out_shape=jax.ShapeDtypeStruct((B * S, D), jnp.float32),
        grid=(1,),
        in_specs=[_full_spec(a.shape) for a in args],
        out_specs=_full_spec((B * S, D)),
        compiler_params=pltpu.CompilerParams(dimension_semantics=("arbitrary",)),
    )(*args)
    return out.reshape(B, S, D)


# ----------------------------------------------------------------------------
# Deterministic parameter initialization (synthetic, matches module shapes)
# ----------------------------------------------------------------------------
def init_params(key, d_model, num_layers, dim_ff):
    def nrm(k, shape, scale=0.05):
        return scale * jax.random.normal(k, shape, dtype=jnp.float32)

    layers = []
    for _ in range(num_layers):
        key, kq, kk, kv, ko, k1, k2 = jax.random.split(key, 7)
        layers.append(dict(
            # attention projections, stored as (in, out) so kernel does x @ W
            wq=nrm(kq, (d_model, d_model)), bq=jnp.zeros((1, d_model), jnp.float32),
            wk=nrm(kk, (d_model, d_model)), bk=jnp.zeros((1, d_model), jnp.float32),
            wv=nrm(kv, (d_model, d_model)), bv=jnp.zeros((1, d_model), jnp.float32),
            wo=nrm(ko, (d_model, d_model)), bo=jnp.zeros((1, d_model), jnp.float32),
            g1=jnp.ones((1, d_model), jnp.float32), be1=jnp.zeros((1, d_model), jnp.float32),
            w1=nrm(k1, (d_model, dim_ff)), bf1=jnp.zeros((1, dim_ff), jnp.float32),
            w2=nrm(k2, (dim_ff, d_model)), bf2=jnp.zeros((1, d_model), jnp.float32),
            g2=jnp.ones((1, d_model), jnp.float32), be2=jnp.zeros((1, d_model), jnp.float32),
        ))
    key, kl = jax.random.split(key)
    return dict(
        layers=layers,
        w_lin=nrm(kl, (d_model, d_model)),
        b_lin=jnp.zeros((1, d_model), jnp.float32),
    )


# ----------------------------------------------------------------------------
if __name__ == "__main__":
    # setting: word_size=32, cog_head_num=4, cog_layer_num=2, dropout_prob (eval -> no-op)
    BATCH, SEQ, WORD_SIZE, HEADS, LAYERS = 2, 8, 32, 4, 2
    DIM_FF = 2048  # PyTorch TransformerEncoderLayer default dim_feedforward

    key = jax.random.PRNGKey(0)
    key, kx = jax.random.split(key)
    cog = jax.random.normal(kx, (BATCH, SEQ, WORD_SIZE), dtype=jnp.float32)

    params = init_params(key, WORD_SIZE, LAYERS, DIM_FF)

    out = com_cog_forward(cog, params, HEADS)
    out = jax.block_until_ready(out)

    assert out.shape == (BATCH, SEQ, WORD_SIZE)
    assert bool(jnp.all(jnp.isfinite(out)))
    assert bool(jnp.all(out >= 0.0))  # final ReLU
    print("KERNEL_OK")
</pallas_src>

<mosaic_0001>
module attributes {stable_mosaic.version = 11 : i64} {
  func.func @_com_cog_kernel(%arg0: i32, %arg1: memref<16x32xf32, #tpu.memory_space<vmem>>, %arg2: memref<32x96xbf16, #tpu.memory_space<vmem>>, %arg3: memref<1x96xf32, #tpu.memory_space<vmem>>, %arg4: memref<4x8x32xbf16, #tpu.memory_space<vmem>>, %arg5: memref<1x32xf32, #tpu.memory_space<vmem>>, %arg6: memref<1x32xf32, #tpu.memory_space<vmem>>, %arg7: memref<1x32xf32, #tpu.memory_space<vmem>>, %arg8: memref<32x2048xbf16, #tpu.memory_space<vmem>>, %arg9: memref<1x2048xf32, #tpu.memory_space<vmem>>, %arg10: memref<2048x32xbf16, #tpu.memory_space<vmem>>, %arg11: memref<1x32xf32, #tpu.memory_space<vmem>>, %arg12: memref<1x32xf32, #tpu.memory_space<vmem>>, %arg13: memref<1x32xf32, #tpu.memory_space<vmem>>, %arg14: memref<32x96xbf16, #tpu.memory_space<vmem>>, %arg15: memref<1x96xf32, #tpu.memory_space<vmem>>, %arg16: memref<4x8x32xbf16, #tpu.memory_space<vmem>>, %arg17: memref<1x32xf32, #tpu.memory_space<vmem>>, %arg18: memref<1x32xf32, #tpu.memory_space<vmem>>, %arg19: memref<1x32xf32, #tpu.memory_space<vmem>>, %arg20: memref<32x2048xbf16, #tpu.memory_space<vmem>>, %arg21: memref<1x2048xf32, #tpu.memory_space<vmem>>, %arg22: memref<2048x32xbf16, #tpu.memory_space<vmem>>, %arg23: memref<1x32xf32, #tpu.memory_space<vmem>>, %arg24: memref<1x32xf32, #tpu.memory_space<vmem>>, %arg25: memref<1x32xf32, #tpu.memory_space<vmem>>, %arg26: memref<32x32xbf16, #tpu.memory_space<vmem>>, %arg27: memref<1x32xf32, #tpu.memory_space<vmem>>, %arg28: memref<16x32xf32, #tpu.memory_space<vmem>>) attributes {dimension_semantics = [#tpu.dimension_semantics<arbitrary>], iteration_bounds = array<i64: 1>, scalar_prefetch = 0 : i64, scratch_operands = 0 : i64, tpu.core_type = #tpu.core_type<tc>, window_params = [{pipeline_mode = #tpu.pipeline_mode<synchronous>, transform_indices = @transform_0, window_bounds = array<i64: 16, 32>}, {pipeline_mode = #tpu.pipeline_mode<synchronous>, transform_indices = @transform_1, window_bounds = array<i64: 32, 96>}, {pipeline_mode = #tpu.pipeline_mode<synchronous>, transform_indices = @transform_2, window_bounds = array<i64: 1, 96>}, {pipeline_mode = #tpu.pipeline_mode<synchronous>, transform_indices = @transform_3, window_bounds = array<i64: 4, 8, 32>}, {pipeline_mode = #tpu.pipeline_mode<synchronous>, transform_indices = @transform_4, window_bounds = array<i64: 1, 32>}, {pipeline_mode = #tpu.pipeline_mode<synchronous>, transform_indices = @transform_5, window_bounds = array<i64: 1, 32>}, {pipeline_mode = #tpu.pipeline_mode<synchronous>, transform_indices = @transform_6, window_bounds = array<i64: 1, 32>}, {pipeline_mode = #tpu.pipeline_mode<synchronous>, transform_indices = @transform_7, window_bounds = array<i64: 32, 2048>}, {pipeline_mode = #tpu.pipeline_mode<synchronous>, transform_indices = @transform_8, window_bounds = array<i64: 1, 2048>}, {pipeline_mode = #tpu.pipeline_mode<synchronous>, transform_indices = @transform_9, window_bounds = array<i64: 2048, 32>}, {pipeline_mode = #tpu.pipeline_mode<synchronous>, transform_indices = @transform_10, window_bounds = array<i64: 1, 32>}, {pipeline_mode = #tpu.pipeline_mode<synchronous>, transform_indices = @transform_11, window_bounds = array<i64: 1, 32>}, {pipeline_mode = #tpu.pipeline_mode<synchronous>, transform_indices = @transform_12, window_bounds = array<i64: 1, 32>}, {pipeline_mode = #tpu.pipeline_mode<synchronous>, transform_indices = @transform_13, window_bounds = array<i64: 32, 96>}, {pipeline_mode = #tpu.pipeline_mode<synchronous>, transform_indices = @transform_14, window_bounds = array<i64: 1, 96>}, {pipeline_mode = #tpu.pipeline_mode<synchronous>, transform_indices = @transform_15, window_bounds = array<i64: 4, 8, 32>}, {pipeline_mode = #tpu.pipeline_mode<synchronous>, transform_indices = @transform_16, window_bounds = array<i64: 1, 32>}, {pipeline_mode = #tpu.pipeline_mode<synchronous>, transform_indices = @transform_17, window_bounds = array<i64: 1, 32>}, {pipeline_mode = #tpu.pipeline_mode<synchronous>, transform_indices = @transform_18, window_bounds = array<i64: 1, 32>}, {pipeline_mode = #tpu.pipeline_mode<synchronous>, transform_indices = @transform_19, window_bounds = array<i64: 32, 2048>}, {pipeline_mode = #tpu.pipeline_mode<synchronous>, transform_indices = @transform_20, window_bounds = array<i64: 1, 2048>}, {pipeline_mode = #tpu.pipeline_mode<synchronous>, transform_indices = @transform_21, window_bounds = array<i64: 2048, 32>}, {pipeline_mode = #tpu.pipeline_mode<synchronous>, transform_indices = @transform_22, window_bounds = array<i64: 1, 32>}, {pipeline_mode = #tpu.pipeline_mode<synchronous>, transform_indices = @transform_23, window_bounds = array<i64: 1, 32>}, {pipeline_mode = #tpu.pipeline_mode<synchronous>, transform_indices = @transform_24, window_bounds = array<i64: 1, 32>}, {pipeline_mode = #tpu.pipeline_mode<synchronous>, transform_indices = @transform_25, window_bounds = array<i64: 32, 32>}, {pipeline_mode = #tpu.pipeline_mode<synchronous>, transform_indices = @transform_26, window_bounds = array<i64: 1, 32>}, {pipeline_mode = #tpu.pipeline_mode<synchronous>, transform_indices = @transform_27, window_bounds = array<i64: 16, 32>}]} {
    %c0 = arith.constant 0 : index
    %c0_0 = arith.constant 0 : index
    %0 = vector.load %arg1[%c0, %c0_0] : memref<16x32xf32, #tpu.memory_space<vmem>>, vector<16x32xf32>
    %1 = arith.truncf %0 : vector<16x32xf32> to vector<16x32xbf16>
    %c0_1 = arith.constant 0 : index
    %c0_2 = arith.constant 0 : index
    %2 = vector.load %arg2[%c0_1, %c0_2] : memref<32x96xbf16, #tpu.memory_space<vmem>>, vector<32x96xbf16>
    %cst = arith.constant dense<0.000000e+00> : vector<16x96xf32>
    %3 = tpu.matmul %1, %2, %cst {dimension_numbers = #tpu.dot_dimension_numbers<[1], [0], [0], [1], [0, 0, 1, 1], [], []>} : vector<16x32xbf16>, vector<32x96xbf16>, vector<16x96xf32> -> vector<16x96xf32>
    %c0_3 = arith.constant 0 : index
    %c0_4 = arith.constant 0 : index
    %4 = vector.load %arg3[%c0_3, %c0_4] : memref<1x96xf32, #tpu.memory_space<vmem>>, vector<1x96xf32>
    %5 = vector.broadcast %4 : vector<1x96xf32> to vector<16x96xf32>
    %6 = arith.addf %3, %5 : vector<16x96xf32>
    %7 = vector.shape_cast %6 : vector<16x96xf32> to vector<2x8x96xf32>
    %cst_5 = arith.constant 0.000000e+00 : f32
    %8 = vector.broadcast %cst_5 : f32 to vector<16x32xf32>
    %9 = vector.extract_strided_slice %7 {offsets = [0, 0, 0], sizes = [2, 8, 8], strides = [1, 1, 1]} : vector<2x8x96xf32> to vector<2x8x8xf32>
    %10 = arith.truncf %9 : vector<2x8x8xf32> to vector<2x8x8xbf16>
    %11 = vector.extract_strided_slice %7 {offsets = [0, 0, 32], sizes = [2, 8, 8], strides = [1, 1, 1]} : vector<2x8x96xf32> to vector<2x8x8xf32>
    %12 = arith.truncf %11 : vector<2x8x8xf32> to vector<2x8x8xbf16>
    %13 = vector.extract_strided_slice %7 {offsets = [0, 0, 64], sizes = [2, 8, 8], strides = [1, 1, 1]} : vector<2x8x96xf32> to vector<2x8x8xf32>
    %14 = arith.truncf %13 : vector<2x8x8xf32> to vector<2x8x8xbf16>
    "tpu.trace_start"() <{level = 10 : i32, message = "bqd,bkd->bqk"}> : () -> ()
    %cst_6 = arith.constant dense<0.000000e+00> : vector<2x8x8xf32>
    %15 = tpu.matmul %10, %12, %cst_6 {dimension_numbers = #tpu.dot_dimension_numbers<[2], [2], [1], [1], [0, 0, 0, 1, 1, 1], [0], [0]>} : vector<2x8x8xbf16>, vector<2x8x8xbf16>, vector<2x8x8xf32> -> vector<2x8x8xf32>
    "tpu.trace_stop"() : () -> ()
    %cst_7 = arith.constant 0.353553385 : f32
    %16 = vector.broadcast %cst_7 : f32 to vector<2x8x8xf32>
    %17 = arith.mulf %15, %16 : vector<2x8x8xf32>
    %cst_8 = arith.constant dense<0xFF800000> : vector<2x8xf32>
    %18 = vector.multi_reduction <maximumf>, %17, %cst_8 [2] : vector<2x8x8xf32> to vector<2x8xf32>
    %19 = vector.shape_cast %18 : vector<2x8xf32> to vector<2x8x1xf32>
    %20 = vector.broadcast %19 : vector<2x8x1xf32> to vector<2x8x8xf32>
    %21 = arith.subf %17, %20 : vector<2x8x8xf32>
    %22 = math.exp %21 : vector<2x8x8xf32>
    %cst_9 = arith.constant dense<0.000000e+00> : vector<2x8xf32>
    %23 = vector.multi_reduction <add>, %22, %cst_9 [2] : vector<2x8x8xf32> to vector<2x8xf32>
    %24 = vector.shape_cast %23 : vector<2x8xf32> to vector<2x8x1xf32>
    %25 = tpu.reciprocal %24 {approx = true} : vector<2x8x1xf32> -> vector<2x8x1xf32>
    %26 = vector.broadcast %25 : vector<2x8x1xf32> to vector<2x8x8xf32>
    %27 = arith.mulf %22, %26 : vector<2x8x8xf32>
    %28 = arith.truncf %27 : vector<2x8x8xf32> to vector<2x8x8xbf16>
    "tpu.trace_start"() <{level = 10 : i32, message = "bqk,bkd->bqd"}> : () -> ()
    %cst_10 = arith.constant dense<0.000000e+00> : vector<2x8x8xf32>
    %29 = tpu.matmul %28, %14, %cst_10 {dimension_numbers = #tpu.dot_dimension_numbers<[2], [1], [1], [2], [0, 0, 0, 1, 1, 2], [0], [0]>} : vector<2x8x8xbf16>, vector<2x8x8xbf16>, vector<2x8x8xf32> -> vector<2x8x8xf32>
    "tpu.trace_stop"() : () -> ()
    %30 = vector.shape_cast %29 : vector<2x8x8xf32> to vector<16x8xf32>
    %31 = arith.truncf %30 : vector<16x8xf32> to vector<16x8xbf16>
    %c0_11 = arith.constant 0 : index
    %c0_12 = arith.constant 0 : index
    %c0_13 = arith.constant 0 : index
    %32 = vector.load %arg4[%c0_11, %c0_12, %c0_13] : memref<4x8x32xbf16, #tpu.memory_space<vmem>>, vector<1x8x32xbf16>
    %33 = vector.shape_cast %32 : vector<1x8x32xbf16> to vector<8x32xbf16>
    %cst_14 = arith.constant dense<0.000000e+00> : vector<16x32xf32>
    %34 = tpu.matmul %31, %33, %cst_14 {dimension_numbers = #tpu.dot_dimension_numbers<[1], [0], [0], [1], [0, 0, 1, 1], [], []>} : vector<16x8xbf16>, vector<8x32xbf16>, vector<16x32xf32> -> vector<16x32xf32>
    %35 = arith.addf %8, %34 : vector<16x32xf32>
    %36 = vector.extract_strided_slice %7 {offsets = [0, 0, 8], sizes = [2, 8, 8], strides = [1, 1, 1]} : vector<2x8x96xf32> to vector<2x8x8xf32>
    %37 = arith.truncf %36 : vector<2x8x8xf32> to vector<2x8x8xbf16>
    %38 = vector.extract_strided_slice %7 {offsets = [0, 0, 40], sizes = [2, 8, 8], strides = [1, 1, 1]} : vector<2x8x96xf32> to vector<2x8x8xf32>
    %39 = arith.truncf %38 : vector<2x8x8xf32> to vector<2x8x8xbf16>
    %40 = vector.extract_strided_slice %7 {offsets = [0, 0, 72], sizes = [2, 8, 8], strides = [1, 1, 1]} : vector<2x8x96xf32> to vector<2x8x8xf32>
    %41 = arith.truncf %40 : vector<2x8x8xf32> to vector<2x8x8xbf16>
    "tpu.trace_start"() <{level = 10 : i32, message = "bqd,bkd->bqk"}> : () -> ()
    %cst_15 = arith.constant dense<0.000000e+00> : vector<2x8x8xf32>
    %42 = tpu.matmul %37, %39, %cst_15 {dimension_numbers = #tpu.dot_dimension_numbers<[2], [2], [1], [1], [0, 0, 0, 1, 1, 1], [0], [0]>} : vector<2x8x8xbf16>, vector<2x8x8xbf16>, vector<2x8x8xf32> -> vector<2x8x8xf32>
    "tpu.trace_stop"() : () -> ()
    %cst_16 = arith.constant 0.353553385 : f32
    %43 = vector.broadcast %cst_16 : f32 to vector<2x8x8xf32>
    %44 = arith.mulf %42, %43 : vector<2x8x8xf32>
    %cst_17 = arith.constant dense<0xFF800000> : vector<2x8xf32>
    %45 = vector.multi_reduction <maximumf>, %44, %cst_17 [2] : vector<2x8x8xf32> to vector<2x8xf32>
    %46 = vector.shape_cast %45 : vector<2x8xf32> to vector<2x8x1xf32>
    %47 = vector.broadcast %46 : vector<2x8x1xf32> to vector<2x8x8xf32>
    %48 = arith.subf %44, %47 : vector<2x8x8xf32>
    %49 = math.exp %48 : vector<2x8x8xf32>
    %cst_18 = arith.constant dense<0.000000e+00> : vector<2x8xf32>
    %50 = vector.multi_reduction <add>, %49, %cst_18 [2] : vector<2x8x8xf32> to vector<2x8xf32>
    %51 = vector.shape_cast %50 : vector<2x8xf32> to vector<2x8x1xf32>
    %52 = tpu.reciprocal %51 {approx = true} : vector<2x8x1xf32> -> vector<2x8x1xf32>
    %53 = vector.broadcast %52 : vector<2x8x1xf32> to vector<2x8x8xf32>
    %54 = arith.mulf %49, %53 : vector<2x8x8xf32>
    %55 = arith.truncf %54 : vector<2x8x8xf32> to vector<2x8x8xbf16>
    "tpu.trace_start"() <{level = 10 : i32, message = "bqk,bkd->bqd"}> : () -> ()
    %cst_19 = arith.constant dense<0.000000e+00> : vector<2x8x8xf32>
    %56 = tpu.matmul %55, %41, %cst_19 {dimension_numbers = #tpu.dot_dimension_numbers<[2], [1], [1], [2], [0, 0, 0, 1, 1, 2], [0], [0]>} : vector<2x8x8xbf16>, vector<2x8x8xbf16>, vector<2x8x8xf32> -> vector<2x8x8xf32>
    "tpu.trace_stop"() : () -> ()
    %57 = vector.shape_cast %56 : vector<2x8x8xf32> to vector<16x8xf32>
    %58 = arith.truncf %57 : vector<16x8xf32> to vector<16x8xbf16>
    %c1 = arith.constant 1 : index
    %c0_20 = arith.constant 0 : index
    %c0_21 = arith.constant 0 : index
    %59 = vector.load %arg4[%c1, %c0_20, %c0_21] : memref<4x8x32xbf16, #tpu.memory_space<vmem>>, vector<1x8x32xbf16>
    %60 = vector.shape_cast %59 : vector<1x8x32xbf16> to vector<8x32xbf16>
    %cst_22 = arith.constant dense<0.000000e+00> : vector<16x32xf32>
    %61 = tpu.matmul %58, %60, %cst_22 {dimension_numbers = #tpu.dot_dimension_numbers<[1], [0], [0], [1], [0, 0, 1, 1], [], []>} : vector<16x8xbf16>, vector<8x32xbf16>, vector<16x32xf32> -> vector<16x32xf32>
    %62 = arith.addf %35, %61 : vector<16x32xf32>
    %63 = vector.extract_strided_slice %7 {offsets = [0, 0, 16], sizes = [2, 8, 8], strides = [1, 1, 1]} : vector<2x8x96xf32> to vector<2x8x8xf32>
    %64 = arith.truncf %63 : vector<2x8x8xf32> to vector<2x8x8xbf16>
    %65 = vector.extract_strided_slice %7 {offsets = [0, 0, 48], sizes = [2, 8, 8], strides = [1, 1, 1]} : vector<2x8x96xf32> to vector<2x8x8xf32>
    %66 = arith.truncf %65 : vector<2x8x8xf32> to vector<2x8x8xbf16>
    %67 = vector.extract_strided_slice %7 {offsets = [0, 0, 80], sizes = [2, 8, 8], strides = [1, 1, 1]} : vector<2x8x96xf32> to vector<2x8x8xf32>
    %68 = arith.truncf %67 : vector<2x8x8xf32> to vector<2x8x8xbf16>
    "tpu.trace_start"() <{level = 10 : i32, message = "bqd,bkd->bqk"}> : () -> ()
    %cst_23 = arith.constant dense<0.000000e+00> : vector<2x8x8xf32>
    %69 = tpu.matmul %64, %66, %cst_23 {dimension_numbers = #tpu.dot_dimension_numbers<[2], [2], [1], [1], [0, 0, 0, 1, 1, 1], [0], [0]>} : vector<2x8x8xbf16>, vector<2x8x8xbf16>, vector<2x8x8xf32> -> vector<2x8x8xf32>
    "tpu.trace_stop"() : () -> ()
    %cst_24 = arith.constant 0.353553385 : f32
    %70 = vector.broadcast %cst_24 : f32 to vector<2x8x8xf32>
    %71 = arith.mulf %69, %70 : vector<2x8x8xf32>
    %cst_25 = arith.constant dense<0xFF800000> : vector<2x8xf32>
    %72 = vector.multi_reduction <maximumf>, %71, %cst_25 [2] : vector<2x8x8xf32> to vector<2x8xf32>
    %73 = vector.shape_cast %72 : vector<2x8xf32> to vector<2x8x1xf32>
    %74 = vector.broadcast %73 : vector<2x8x1xf32> to vector<2x8x8xf32>
    %75 = arith.subf %71, %74 : vector<2x8x8xf32>
    %76 = math.exp %75 : vector<2x8x8xf32>
    %cst_26 = arith.constant dense<0.000000e+00> : vector<2x8xf32>
    %77 = vector.multi_reduction <add>, %76, %cst_26 [2] : vector<2x8x8xf32> to vector<2x8xf32>
    %78 = vector.shape_cast %77 : vector<2x8xf32> to vector<2x8x1xf32>
    %79 = tpu.reciprocal %78 {approx = true} : vector<2x8x1xf32> -> vector<2x8x1xf32>
    %80 = vector.broadcast %79 : vector<2x8x1xf32> to vector<2x8x8xf32>
    %81 = arith.mulf %76, %80 : vector<2x8x8xf32>
    %82 = arith.truncf %81 : vector<2x8x8xf32> to vector<2x8x8xbf16>
    "tpu.trace_start"() <{level = 10 : i32, message = "bqk,bkd->bqd"}> : () -> ()
    %cst_27 = arith.constant dense<0.000000e+00> : vector<2x8x8xf32>
    %83 = tpu.matmul %82, %68, %cst_27 {dimension_numbers = #tpu.dot_dimension_numbers<[2], [1], [1], [2], [0, 0, 0, 1, 1, 2], [0], [0]>} : vector<2x8x8xbf16>, vector<2x8x8xbf16>, vector<2x8x8xf32> -> vector<2x8x8xf32>
    "tpu.trace_stop"() : () -> ()
    %84 = vector.shape_cast %83 : vector<2x8x8xf32> to vector<16x8xf32>
    %85 = arith.truncf %84 : vector<16x8xf32> to vector<16x8xbf16>
    %c2 = arith.constant 2 : index
    %c0_28 = arith.constant 0 : index
    %c0_29 = arith.constant 0 : index
    %86 = vector.load %arg4[%c2, %c0_28, %c0_29] : memref<4x8x32xbf16, #tpu.memory_space<vmem>>, vector<1x8x32xbf16>
    %87 = vector.shape_cast %86 : vector<1x8x32xbf16> to vector<8x32xbf16>
    %cst_30 = arith.constant dense<0.000000e+00> : vector<16x32xf32>
    %88 = tpu.matmul %85, %87, %cst_30 {dimension_numbers = #tpu.dot_dimension_numbers<[1], [0], [0], [1], [0, 0, 1, 1], [], []>} : vector<16x8xbf16>, vector<8x32xbf16>, vector<16x32xf32> -> vector<16x32xf32>
    %89 = arith.addf %62, %88 : vector<16x32xf32>
    %90 = vector.extract_strided_slice %7 {offsets = [0, 0, 24], sizes = [2, 8, 8], strides = [1, 1, 1]} : vector<2x8x96xf32> to vector<2x8x8xf32>
    %91 = arith.truncf %90 : vector<2x8x8xf32> to vector<2x8x8xbf16>
    %92 = vector.extract_strided_slice %7 {offsets = [0, 0, 56], sizes = [2, 8, 8], strides = [1, 1, 1]} : vector<2x8x96xf32> to vector<2x8x8xf32>
    %93 = arith.truncf %92 : vector<2x8x8xf32> to vector<2x8x8xbf16>
    %94 = vector.extract_strided_slice %7 {offsets = [0, 0, 88], sizes = [2, 8, 8], strides = [1, 1, 1]} : vector<2x8x96xf32> to vector<2x8x8xf32>
    %95 = arith.truncf %94 : vector<2x8x8xf32> to vector<2x8x8xbf16>
    "tpu.trace_start"() <{level = 10 : i32, message = "bqd,bkd->bqk"}> : () -> ()
    %cst_31 = arith.constant dense<0.000000e+00> : vector<2x8x8xf32>
    %96 = tpu.matmul %91, %93, %cst_31 {dimension_numbers = #tpu.dot_dimension_numbers<[2], [2], [1], [1], [0, 0, 0, 1, 1, 1], [0], [0]>} : vector<2x8x8xbf16>, vector<2x8x8xbf16>, vector<2x8x8xf32> -> vector<2x8x8xf32>
    "tpu.trace_stop"() : () -> ()
    %cst_32 = arith.constant 0.353553385 : f32
    %97 = vector.broadcast %cst_32 : f32 to vector<2x8x8xf32>
    %98 = arith.mulf %96, %97 : vector<2x8x8xf32>
    %cst_33 = arith.constant dense<0xFF800000> : vector<2x8xf32>
    %99 = vector.multi_reduction <maximumf>, %98, %cst_33 [2] : vector<2x8x8xf32> to vector<2x8xf32>
    %100 = vector.shape_cast %99 : vector<2x8xf32> to vector<2x8x1xf32>
    %101 = vector.broadcast %100 : vector<2x8x1xf32> to vector<2x8x8xf32>
    %102 = arith.subf %98, %101 : vector<2x8x8xf32>
    %103 = math.exp %102 : vector<2x8x8xf32>
    %cst_34 = arith.constant dense<0.000000e+00> : vector<2x8xf32>
    %104 = vector.multi_reduction <add>, %103, %cst_34 [2] : vector<2x8x8xf32> to vector<2x8xf32>
    %105 = vector.shape_cast %104 : vector<2x8xf32> to vector<2x8x1xf32>
    %106 = tpu.reciprocal %105 {approx = true} : vector<2x8x1xf32> -> vector<2x8x1xf32>
    %107 = vector.broadcast %106 : vector<2x8x1xf32> to vector<2x8x8xf32>
    %108 = arith.mulf %103, %107 : vector<2x8x8xf32>
    %109 = arith.truncf %108 : vector<2x8x8xf32> to vector<2x8x8xbf16>
    "tpu.trace_start"() <{level = 10 : i32, message = "bqk,bkd->bqd"}> : () -> ()
    %cst_35 = arith.constant dense<0.000000e+00> : vector<2x8x8xf32>
    %110 = tpu.matmul %109, %95, %cst_35 {dimension_numbers = #tpu.dot_dimension_numbers<[2], [1], [1], [2], [0, 0, 0, 1, 1, 2], [0], [0]>} : vector<2x8x8xbf16>, vector<2x8x8xbf16>, vector<2x8x8xf32> -> vector<2x8x8xf32>
    "tpu.trace_stop"() : () -> ()
    %111 = vector.shape_cast %110 : vector<2x8x8xf32> to vector<16x8xf32>
    %112 = arith.truncf %111 : vector<16x8xf32> to vector<16x8xbf16>
    %c3 = arith.constant 3 : index
    %c0_36 = arith.constant 0 : index
    %c0_37 = arith.constant 0 : index
    %113 = vector.load %arg4[%c3, %c0_36, %c0_37] : memref<4x8x32xbf16, #tpu.memory_space<vmem>>, vector<1x8x32xbf16>
    %114 = vector.shape_cast %113 : vector<1x8x32xbf16> to vector<8x32xbf16>
    %cst_38 = arith.constant dense<0.000000e+00> : vector<16x32xf32>
    %115 = tpu.matmul %112, %114, %cst_38 {dimension_numbers = #tpu.dot_dimension_numbers<[1], [0], [0], [1], [0, 0, 1, 1], [], []>} : vector<16x8xbf16>, vector<8x32xbf16>, vector<16x32xf32> -> vector<16x32xf32>
    %116 = arith.addf %89, %115 : vector<16x32xf32>
    %c0_39 = arith.constant 0 : index
    %c0_40 = arith.constant 0 : index
    %117 = vector.load %arg5[%c0_39, %c0_40] : memref<1x32xf32, #tpu.memory_space<vmem>>, vector<1x32xf32>
    %118 = vector.broadcast %117 : vector<1x32xf32> to vector<16x32xf32>
    %119 = arith.addf %116, %118 : vector<16x32xf32>
    %120 = arith.addf %0, %119 : vector<16x32xf32>
    %c0_41 = arith.constant 0 : index
    %c0_42 = arith.constant 0 : index
    %121 = vector.load %arg6[%c0_41, %c0_42] : memref<1x32xf32, #tpu.memory_space<vmem>>, vector<1x32xf32>
    %c0_43 = arith.constant 0 : index
    %c0_44 = arith.constant 0 : index
    %122 = vector.load %arg7[%c0_43, %c0_44] : memref<1x32xf32, #tpu.memory_space<vmem>>, vector<1x32xf32>
    %cst_45 = arith.constant dense<0.000000e+00> : vector<16xf32>
    %123 = vector.multi_reduction <add>, %120, %cst_45 [1] : vector<16x32xf32> to vector<16xf32>
    %124 = vector.shape_cast %123 : vector<16xf32> to vector<16x1xf32>
    %cst_46 = arith.constant 3.200000e+01 : f32
    %125 = vector.broadcast %cst_46 : f32 to vector<16x1xf32>
    %126 = arith.divf %124, %125 : vector<16x1xf32>
    %127 = arith.mulf %120, %120 : vector<16x32xf32>
    %cst_47 = arith.constant dense<0.000000e+00> : vector<16xf32>
    %128 = vector.multi_reduction <add>, %127, %cst_47 [1] : vector<16x32xf32> to vector<16xf32>
    %129 = vector.shape_cast %128 : vector<16xf32> to vector<16x1xf32>
    %cst_48 = arith.constant 3.200000e+01 : f32
    %130 = vector.broadcast %cst_48 : f32 to vector<16x1xf32>
    %131 = arith.divf %129, %130 : vector<16x1xf32>
    %132 = arith.mulf %126, %126 : vector<16x1xf32>
    %133 = arith.subf %131, %132 : vector<16x1xf32>
    %134 = vector.broadcast %126 : vector<16x1xf32> to vector<16x32xf32>
    %135 = arith.subf %120, %134 : vector<16x32xf32>
    %cst_49 = arith.constant 9.99999974E-6 : f32
    %136 = vector.broadcast %cst_49 : f32 to vector<16x1xf32>
    %137 = arith.addf %133, %136 : vector<16x1xf32>
    %138 = math.rsqrt %137 : vector<16x1xf32>
    %139 = vector.broadcast %138 : vector<16x1xf32> to vector<16x32xf32>
    %140 = arith.mulf %135, %139 : vector<16x32xf32>
    %141 = vector.broadcast %121 : vector<1x32xf32> to vector<16x32xf32>
    %142 = arith.mulf %140, %141 : vector<16x32xf32>
    %143 = vector.broadcast %122 : vector<1x32xf32> to vector<16x32xf32>
    %144 = arith.addf %142, %143 : vector<16x32xf32>
    %145 = arith.truncf %144 : vector<16x32xf32> to vector<16x32xbf16>
    %c0_50 = arith.constant 0 : index
    %c0_51 = arith.constant 0 : index
    %146 = vector.load %arg8[%c0_50, %c0_51] : memref<32x2048xbf16, #tpu.memory_space<vmem>>, vector<32x2048xbf16>
    %cst_52 = arith.constant dense<0.000000e+00> : vector<16x2048xf32>
    %147 = tpu.matmul %145, %146, %cst_52 {dimension_numbers = #tpu.dot_dimension_numbers<[1], [0], [0], [1], [0, 0, 1, 1], [], []>} : vector<16x32xbf16>, vector<32x2048xbf16>, vector<16x2048xf32> -> vector<16x2048xf32>
    %c0_53 = arith.constant 0 : index
    %c0_54 = arith.constant 0 : index
    %148 = vector.load %arg9[%c0_53, %c0_54] : memref<1x2048xf32, #tpu.memory_space<vmem>>, vector<1x2048xf32>
    %149 = vector.broadcast %148 : vector<1x2048xf32> to vector<16x2048xf32>
    %150 = arith.addf %147, %149 : vector<16x2048xf32>
    %cst_55 = arith.constant 0.000000e+00 : f32
    %151 = vector.broadcast %cst_55 : f32 to vector<16x2048xf32>
    %152 = arith.maximumf %150, %151 : vector<16x2048xf32>
    %153 = arith.truncf %152 : vector<16x2048xf32> to vector<16x2048xbf16>
    %c0_56 = arith.constant 0 : index
    %c0_57 = arith.constant 0 : index
    %154 = vector.load %arg10[%c0_56, %c0_57] : memref<2048x32xbf16, #tpu.memory_space<vmem>>, vector<2048x32xbf16>
    %cst_58 = arith.constant dense<0.000000e+00> : vector<16x32xf32>
    %155 = tpu.matmul %153, %154, %cst_58 {dimension_numbers = #tpu.dot_dimension_numbers<[1], [0], [0], [1], [0, 0, 1, 1], [], []>} : vector<16x2048xbf16>, vector<2048x32xbf16>, vector<16x32xf32> -> vector<16x32xf32>
    %c0_59 = arith.constant 0 : index
    %c0_60 = arith.constant 0 : index
    %156 = vector.load %arg11[%c0_59, %c0_60] : memref<1x32xf32, #tpu.memory_space<vmem>>, vector<1x32xf32>
    %157 = vector.broadcast %156 : vector<1x32xf32> to vector<16x32xf32>
    %158 = arith.addf %155, %157 : vector<16x32xf32>
    %159 = arith.addf %144, %158 : vector<16x32xf32>
    %c0_61 = arith.constant 0 : index
    %c0_62 = arith.constant 0 : index
    %160 = vector.load %arg12[%c0_61, %c0_62] : memref<1x32xf32, #tpu.memory_space<vmem>>, vector<1x32xf32>
    %c0_63 = arith.constant 0 : index
    %c0_64 = arith.constant 0 : index
    %161 = vector.load %arg13[%c0_63, %c0_64] : memref<1x32xf32, #tpu.memory_space<vmem>>, vector<1x32xf32>
    %cst_65 = arith.constant dense<0.000000e+00> : vector<16xf32>
    %162 = vector.multi_reduction <add>, %159, %cst_65 [1] : vector<16x32xf32> to vector<16xf32>
    %163 = vector.shape_cast %162 : vector<16xf32> to vector<16x1xf32>
    %cst_66 = arith.constant 3.200000e+01 : f32
    %164 = vector.broadcast %cst_66 : f32 to vector<16x1xf32>
    %165 = arith.divf %163, %164 : vector<16x1xf32>
    %166 = arith.mulf %159, %159 : vector<16x32xf32>
    %cst_67 = arith.constant dense<0.000000e+00> : vector<16xf32>
    %167 = vector.multi_reduction <add>, %166, %cst_67 [1] : vector<16x32xf32> to vector<16xf32>
    %168 = vector.shape_cast %167 : vector<16xf32> to vector<16x1xf32>
    %cst_68 = arith.constant 3.200000e+01 : f32
    %169 = vector.broadcast %cst_68 : f32 to vector<16x1xf32>
    %170 = arith.divf %168, %169 : vector<16x1xf32>
    %171 = arith.mulf %165, %165 : vector<16x1xf32>
    %172 = arith.subf %170, %171 : vector<16x1xf32>
    %173 = vector.broadcast %165 : vector<16x1xf32> to vector<16x32xf32>
    %174 = arith.subf %159, %173 : vector<16x32xf32>
    %cst_69 = arith.constant 9.99999974E-6 : f32
    %175 = vector.broadcast %cst_69 : f32 to vector<16x1xf32>
    %176 = arith.addf %172, %175 : vector<16x1xf32>
    %177 = math.rsqrt %176 : vector<16x1xf32>
    %178 = vector.broadcast %177 : vector<16x1xf32> to vector<16x32xf32>
    %179 = arith.mulf %174, %178 : vector<16x32xf32>
    %180 = vector.broadcast %160 : vector<1x32xf32> to vector<16x32xf32>
    %181 = arith.mulf %179, %180 : vector<16x32xf32>
    %182 = vector.broadcast %161 : vector<1x32xf32> to vector<16x32xf32>
    %183 = arith.addf %181, %182 : vector<16x32xf32>
    %184 = arith.truncf %183 : vector<16x32xf32> to vector<16x32xbf16>
    %c0_70 = arith.constant 0 : index
    %c0_71 = arith.constant 0 : index
    %185 = vector.load %arg14[%c0_70, %c0_71] : memref<32x96xbf16, #tpu.memory_space<vmem>>, vector<32x96xbf16>
    %cst_72 = arith.constant dense<0.000000e+00> : vector<16x96xf32>
    %186 = tpu.matmul %184, %185, %cst_72 {dimension_numbers = #tpu.dot_dimension_numbers<[1], [0], [0], [1], [0, 0, 1, 1], [], []>} : vector<16x32xbf16>, vector<32x96xbf16>, vector<16x96xf32> -> vector<16x96xf32>
    %c0_73 = arith.constant 0 : index
    %c0_74 = arith.constant 0 : index
    %187 = vector.load %arg15[%c0_73, %c0_74] : memref<1x96xf32, #tpu.memory_space<vmem>>, vector<1x96xf32>
    %188 = vector.broadcast %187 : vector<1x96xf32> to vector<16x96xf32>
    %189 = arith.addf %186, %188 : vector<16x96xf32>
    %190 = vector.shape_cast %189 : vector<16x96xf32> to vector<2x8x96xf32>
    %cst_75 = arith.constant 0.000000e+00 : f32
    %191 = vector.broadcast %cst_75 : f32 to vector<16x32xf32>
    %192 = vector.extract_strided_slice %190 {offsets = [0, 0, 0], sizes = [2, 8, 8], strides = [1, 1, 1]} : vector<2x8x96xf32> to vector<2x8x8xf32>
    %193 = arith.truncf %192 : vector<2x8x8xf32> to vector<2x8x8xbf16>
    %194 = vector.extract_strided_slice %190 {offsets = [0, 0, 32], sizes = [2, 8, 8], strides = [1, 1, 1]} : vector<2x8x96xf32> to vector<2x8x8xf32>
    %195 = arith.truncf %194 : vector<2x8x8xf32> to vector<2x8x8xbf16>
    %196 = vector.extract_strided_slice %190 {offsets = [0, 0, 64], sizes = [2, 8, 8], strides = [1, 1, 1]} : vector<2x8x96xf32> to vector<2x8x8xf32>
    %197 = arith.truncf %196 : vector<2x8x8xf32> to vector<2x8x8xbf16>
    "tpu.trace_start"() <{level = 10 : i32, message = "bqd,bkd->bqk"}> : () -> ()
    %cst_76 = arith.constant dense<0.000000e+00> : vector<2x8x8xf32>
    %198 = tpu.matmul %193, %195, %cst_76 {dimension_numbers = #tpu.dot_dimension_numbers<[2], [2], [1], [1], [0, 0, 0, 1, 1, 1], [0], [0]>} : vector<2x8x8xbf16>, vector<2x8x8xbf16>, vector<2x8x8xf32> -> vector<2x8x8xf32>
    "tpu.trace_stop"() : () -> ()
    %cst_77 = arith.constant 0.353553385 : f32
    %199 = vector.broadcast %cst_77 : f32 to vector<2x8x8xf32>
    %200 = arith.mulf %198, %199 : vector<2x8x8xf32>
    %cst_78 = arith.constant dense<0xFF800000> : vector<2x8xf32>
    %201 = vector.multi_reduction <maximumf>, %200, %cst_78 [2] : vector<2x8x8xf32> to vector<2x8xf32>
    %202 = vector.shape_cast %201 : vector<2x8xf32> to vector<2x8x1xf32>
    %203 = vector.broadcast %202 : vector<2x8x1xf32> to vector<2x8x8xf32>
    %204 = arith.subf %200, %203 : vector<2x8x8xf32>
    %205 = math.exp %204 : vector<2x8x8xf32>
    %cst_79 = arith.constant dense<0.000000e+00> : vector<2x8xf32>
    %206 = vector.multi_reduction <add>, %205, %cst_79 [2] : vector<2x8x8xf32> to vector<2x8xf32>
    %207 = vector.shape_cast %206 : vector<2x8xf32> to vector<2x8x1xf32>
    %208 = tpu.reciprocal %207 {approx = true} : vector<2x8x1xf32> -> vector<2x8x1xf32>
    %209 = vector.broadcast %208 : vector<2x8x1xf32> to vector<2x8x8xf32>
    %210 = arith.mulf %205, %209 : vector<2x8x8xf32>
    %211 = arith.truncf %210 : vector<2x8x8xf32> to vector<2x8x8xbf16>
    "tpu.trace_start"() <{level = 10 : i32, message = "bqk,bkd->bqd"}> : () -> ()
    %cst_80 = arith.constant dense<0.000000e+00> : vector<2x8x8xf32>
    %212 = tpu.matmul %211, %197, %cst_80 {dimension_numbers = #tpu.dot_dimension_numbers<[2], [1], [1], [2], [0, 0, 0, 1, 1, 2], [0], [0]>} : vector<2x8x8xbf16>, vector<2x8x8xbf16>, vector<2x8x8xf32> -> vector<2x8x8xf32>
    "tpu.trace_stop"() : () -> ()
    %213 = vector.shape_cast %212 : vector<2x8x8xf32> to vector<16x8xf32>
    %214 = arith.truncf %213 : vector<16x8xf32> to vector<16x8xbf16>
    %c0_81 = arith.constant 0 : index
    %c0_82 = arith.constant 0 : index
    %c0_83 = arith.constant 0 : index
    %215 = vector.load %arg16[%c0_81, %c0_82, %c0_83] : memref<4x8x32xbf16, #tpu.memory_space<vmem>>, vector<1x8x32xbf16>
    %216 = vector.shape_cast %215 : vector<1x8x32xbf16> to vector<8x32xbf16>
    %cst_84 = arith.constant dense<0.000000e+00> : vector<16x32xf32>
    %217 = tpu.matmul %214, %216, %cst_84 {dimension_numbers = #tpu.dot_dimension_numbers<[1], [0], [0], [1], [0, 0, 1, 1], [], []>} : vector<16x8xbf16>, vector<8x32xbf16>, vector<16x32xf32> -> vector<16x32xf32>
    %218 = arith.addf %191, %217 : vector<16x32xf32>
    %219 = vector.extract_strided_slice %190 {offsets = [0, 0, 8], sizes = [2, 8, 8], strides = [1, 1, 1]} : vector<2x8x96xf32> to vector<2x8x8xf32>
    %220 = arith.truncf %219 : vector<2x8x8xf32> to vector<2x8x8xbf16>
    %221 = vector.extract_strided_slice %190 {offsets = [0, 0, 40], sizes = [2, 8, 8], strides = [1, 1, 1]} : vector<2x8x96xf32> to vector<2x8x8xf32>
    %222 = arith.truncf %221 : vector<2x8x8xf32> to vector<2x8x8xbf16>
    %223 = vector.extract_strided_slice %190 {offsets = [0, 0, 72], sizes = [2, 8, 8], strides = [1, 1, 1]} : vector<2x8x96xf32> to vector<2x8x8xf32>
    %224 = arith.truncf %223 : vector<2x8x8xf32> to vector<2x8x8xbf16>
    "tpu.trace_start"() <{level = 10 : i32, message = "bqd,bkd->bqk"}> : () -> ()
    %cst_85 = arith.constant dense<0.000000e+00> : vector<2x8x8xf32>
    %225 = tpu.matmul %220, %222, %cst_85 {dimension_numbers = #tpu.dot_dimension_numbers<[2], [2], [1], [1], [0, 0, 0, 1, 1, 1], [0], [0]>} : vector<2x8x8xbf16>, vector<2x8x8xbf16>, vector<2x8x8xf32> -> vector<2x8x8xf32>
    "tpu.trace_stop"() : () -> ()
    %cst_86 = arith.constant 0.353553385 : f32
    %226 = vector.broadcast %cst_86 : f32 to vector<2x8x8xf32>
    %227 = arith.mulf %225, %226 : vector<2x8x8xf32>
    %cst_87 = arith.constant dense<0xFF800000> : vector<2x8xf32>
    %228 = vector.multi_reduction <maximumf>, %227, %cst_87 [2] : vector<2x8x8xf32> to vector<2x8xf32>
    %229 = vector.shape_cast %228 : vector<2x8xf32> to vector<2x8x1xf32>
    %230 = vector.broadcast %229 : vector<2x8x1xf32> to vector<2x8x8xf32>
    %231 = arith.subf %227, %230 : vector<2x8x8xf32>
    %232 = math.exp %231 : vector<2x8x8xf32>
    %cst_88 = arith.constant dense<0.000000e+00> : vector<2x8xf32>
    %233 = vector.multi_reduction <add>, %232, %cst_88 [2] : vector<2x8x8xf32> to vector<2x8xf32>
    %234 = vector.shape_cast %233 : vector<2x8xf32> to vector<2x8x1xf32>
    %235 = tpu.reciprocal %234 {approx = true} : vector<2x8x1xf32> -> vector<2x8x1xf32>
    %236 = vector.broadcast %235 : vector<2x8x1xf32> to vector<2x8x8xf32>
    %237 = arith.mulf %232, %236 : vector<2x8x8xf32>
    %238 = arith.truncf %237 : vector<2x8x8xf32> to vector<2x8x8xbf16>
    "tpu.trace_start"() <{level = 10 : i32, message = "bqk,bkd->bqd"}> : () -> ()
    %cst_89 = arith.constant dense<0.000000e+00> : vector<2x8x8xf32>
    %239 = tpu.matmul %238, %224, %cst_89 {dimension_numbers = #tpu.dot_dimension_numbers<[2], [1], [1], [2], [0, 0, 0, 1, 1, 2], [0], [0]>} : vector<2x8x8xbf16>, vector<2x8x8xbf16>, vector<2x8x8xf32> -> vector<2x8x8xf32>
    "tpu.trace_stop"() : () -> ()
    %240 = vector.shape_cast %239 : vector<2x8x8xf32> to vector<16x8xf32>
    %241 = arith.truncf %240 : vector<16x8xf32> to vector<16x8xbf16>
    %c1_90 = arith.constant 1 : index
    %c0_91 = arith.constant 0 : index
    %c0_92 = arith.constant 0 : index
    %242 = vector.load %arg16[%c1_90, %c0_91, %c0_92] : memref<4x8x32xbf16, #tpu.memory_space<vmem>>, vector<1x8x32xbf16>
    %243 = vector.shape_cast %242 : vector<1x8x32xbf16> to vector<8x32xbf16>
    %cst_93 = arith.constant dense<0.000000e+00> : vector<16x32xf32>
    %244 = tpu.matmul %241, %243, %cst_93 {dimension_numbers = #tpu.dot_dimension_numbers<[1], [0], [0], [1], [0, 0, 1, 1], [], []>} : vector<16x8xbf16>, vector<8x32xbf16>, vector<16x32xf32> -> vector<16x32xf32>
    %245 = arith.addf %218, %244 : vector<16x32xf32>
    %246 = vector.extract_strided_slice %190 {offsets = [0, 0, 16], sizes = [2, 8, 8], strides = [1, 1, 1]} : vector<2x8x96xf32> to vector<2x8x8xf32>
    %247 = arith.truncf %246 : vector<2x8x8xf32> to vector<2x8x8xbf16>
    %248 = vector.extract_strided_slice %190 {offsets = [0, 0, 48], sizes = [2, 8, 8], strides = [1, 1, 1]} : vector<2x8x96xf32> to vector<2x8x8xf32>
    %249 = arith.truncf %248 : vector<2x8x8xf32> to vector<2x8x8xbf16>
    %250 = vector.extract_strided_slice %190 {offsets = [0, 0, 80], sizes = [2, 8, 8], strides = [1, 1, 1]} : vector<2x8x96xf32> to vector<2x8x8xf32>
    %251 = arith.truncf %250 : vector<2x8x8xf32> to vector<2x8x8xbf16>
    "tpu.trace_start"() <{level = 10 : i32, message = "bqd,bkd->bqk"}> : () -> ()
    %cst_94 = arith.constant dense<0.000000e+00> : vector<2x8x8xf32>
    %252 = tpu.matmul %247, %249, %cst_94 {dimension_numbers = #tpu.dot_dimension_numbers<[2], [2], [1], [1], [0, 0, 0, 1, 1, 1], [0], [0]>} : vector<2x8x8xbf16>, vector<2x8x8xbf16>, vector<2x8x8xf32> -> vector<2x8x8xf32>
    "tpu.trace_stop"() : () -> ()
    %cst_95 = arith.constant 0.353553385 : f32
    %253 = vector.broadcast %cst_95 : f32 to vector<2x8x8xf32>
    %254 = arith.mulf %252, %253 : vector<2x8x8xf32>
    %cst_96 = arith.constant dense<0xFF800000> : vector<2x8xf32>
    %255 = vector.multi_reduction <maximumf>, %254, %cst_96 [2] : vector<2x8x8xf32> to vector<2x8xf32>
    %256 = vector.shape_cast %255 : vector<2x8xf32> to vector<2x8x1xf32>
    %257 = vector.broadcast %256 : vector<2x8x1xf32> to vector<2x8x8xf32>
    %258 = arith.subf %254, %257 : vector<2x8x8xf32>
    %259 = math.exp %258 : vector<2x8x8xf32>
    %cst_97 = arith.constant dense<0.000000e+00> : vector<2x8xf32>
    %260 = vector.multi_reduction <add>, %259, %cst_97 [2] : vector<2x8x8xf32> to vector<2x8xf32>
    %261 = vector.shape_cast %260 : vector<2x8xf32> to vector<2x8x1xf32>
    %262 = tpu.reciprocal %261 {approx = true} : vector<2x8x1xf32> -> vector<2x8x1xf32>
    %263 = vector.broadcast %262 : vector<2x8x1xf32> to vector<2x8x8xf32>
    %264 = arith.mulf %259, %263 : vector<2x8x8xf32>
    %265 = arith.truncf %264 : vector<2x8x8xf32> to vector<2x8x8xbf16>
    "tpu.trace_start"() <{level = 10 : i32, message = "bqk,bkd->bqd"}> : () -> ()
    %cst_98 = arith.constant dense<0.000000e+00> : vector<2x8x8xf32>
    %266 = tpu.matmul %265, %251, %cst_98 {dimension_numbers = #tpu.dot_dimension_numbers<[2], [1], [1], [2], [0, 0, 0, 1, 1, 2], [0], [0]>} : vector<2x8x8xbf16>, vector<2x8x8xbf16>, vector<2x8x8xf32> -> vector<2x8x8xf32>
    "tpu.trace_stop"() : () -> ()
    %267 = vector.shape_cast %266 : vector<2x8x8xf32> to vector<16x8xf32>
    %268 = arith.truncf %267 : vector<16x8xf32> to vector<16x8xbf16>
    %c2_99 = arith.constant 2 : index
    %c0_100 = arith.constant 0 : index
    %c0_101 = arith.constant 0 : index
    %269 = vector.load %arg16[%c2_99, %c0_100, %c0_101] : memref<4x8x32xbf16, #tpu.memory_space<vmem>>, vector<1x8x32xbf16>
    %270 = vector.shape_cast %269 : vector<1x8x32xbf16> to vector<8x32xbf16>
    %cst_102 = arith.constant dense<0.000000e+00> : vector<16x32xf32>
    %271 = tpu.matmul %268, %270, %cst_102 {dimension_numbers = #tpu.dot_dimension_numbers<[1], [0], [0], [1], [0, 0, 1, 1], [], []>} : vector<16x8xbf16>, vector<8x32xbf16>, vector<16x32xf32> -> vector<16x32xf32>
    %272 = arith.addf %245, %271 : vector<16x32xf32>
    %273 = vector.extract_strided_slice %190 {offsets = [0, 0, 24], sizes = [2, 8, 8], strides = [1, 1, 1]} : vector<2x8x96xf32> to vector<2x8x8xf32>
    %274 = arith.truncf %273 : vector<2x8x8xf32> to vector<2x8x8xbf16>
    %275 = vector.extract_strided_slice %190 {offsets = [0, 0, 56], sizes = [2, 8, 8], strides = [1, 1, 1]} : vector<2x8x96xf32> to vector<2x8x8xf32>
    %276 = arith.truncf %275 : vector<2x8x8xf32> to vector<2x8x8xbf16>
    %277 = vector.extract_strided_slice %190 {offsets = [0, 0, 88], sizes = [2, 8, 8], strides = [1, 1, 1]} : vector<2x8x96xf32> to vector<2x8x8xf32>
    %278 = arith.truncf %277 : vector<2x8x8xf32> to vector<2x8x8xbf16>
    "tpu.trace_start"() <{level = 10 : i32, message = "bqd,bkd->bqk"}> : () -> ()
    %cst_103 = arith.constant dense<0.000000e+00> : vector<2x8x8xf32>
    %279 = tpu.matmul %274, %276, %cst_103 {dimension_numbers = #tpu.dot_dimension_numbers<[2], [2], [1], [1], [0, 0, 0, 1, 1, 1], [0], [0]>} : vector<2x8x8xbf16>, vector<2x8x8xbf16>, vector<2x8x8xf32> -> vector<2x8x8xf32>
    "tpu.trace_stop"() : () -> ()
    %cst_104 = arith.constant 0.353553385 : f32
    %280 = vector.broadcast %cst_104 : f32 to vector<2x8x8xf32>
    %281 = arith.mulf %279, %280 : vector<2x8x8xf32>
    %cst_105 = arith.constant dense<0xFF800000> : vector<2x8xf32>
    %282 = vector.multi_reduction <maximumf>, %281, %cst_105 [2] : vector<2x8x8xf32> to vector<2x8xf32>
    %283 = vector.shape_cast %282 : vector<2x8xf32> to vector<2x8x1xf32>
    %284 = vector.broadcast %283 : vector<2x8x1xf32> to vector<2x8x8xf32>
    %285 = arith.subf %281, %284 : vector<2x8x8xf32>
    %286 = math.exp %285 : vector<2x8x8xf32>
    %cst_106 = arith.constant dense<0.000000e+00> : vector<2x8xf32>
    %287 = vector.multi_reduction <add>, %286, %cst_106 [2] : vector<2x8x8xf32> to vector<2x8xf32>
    %288 = vector.shape_cast %287 : vector<2x8xf32> to vector<2x8x1xf32>
    %289 = tpu.reciprocal %288 {approx = true} : vector<2x8x1xf32> -> vector<2x8x1xf32>
    %290 = vector.broadcast %289 : vector<2x8x1xf32> to vector<2x8x8xf32>
    %291 = arith.mulf %286, %290 : vector<2x8x8xf32>
    %292 = arith.truncf %291 : vector<2x8x8xf32> to vector<2x8x8xbf16>
    "tpu.trace_start"() <{level = 10 : i32, message = "bqk,bkd->bqd"}> : () -> ()
    %cst_107 = arith.constant dense<0.000000e+00> : vector<2x8x8xf32>
    %293 = tpu.matmul %292, %278, %cst_107 {dimension_numbers = #tpu.dot_dimension_numbers<[2], [1], [1], [2], [0, 0, 0, 1, 1, 2], [0], [0]>} : vector<2x8x8xbf16>, vector<2x8x8xbf16>, vector<2x8x8xf32> -> vector<2x8x8xf32>
    "tpu.trace_stop"() : () -> ()
    %294 = vector.shape_cast %293 : vector<2x8x8xf32> to vector<16x8xf32>
    %295 = arith.truncf %294 : vector<16x8xf32> to vector<16x8xbf16>
    %c3_108 = arith.constant 3 : index
    %c0_109 = arith.constant 0 : index
    %c0_110 = arith.constant 0 : index
    %296 = vector.load %arg16[%c3_108, %c0_109, %c0_110] : memref<4x8x32xbf16, #tpu.memory_space<vmem>>, vector<1x8x32xbf16>
    %297 = vector.shape_cast %296 : vector<1x8x32xbf16> to vector<8x32xbf16>
    %cst_111 = arith.constant dense<0.000000e+00> : vector<16x32xf32>
    %298 = tpu.matmul %295, %297, %cst_111 {dimension_numbers = #tpu.dot_dimension_numbers<[1], [0], [0], [1], [0, 0, 1, 1], [], []>} : vector<16x8xbf16>, vector<8x32xbf16>, vector<16x32xf32> -> vector<16x32xf32>
    %299 = arith.addf %272, %298 : vector<16x32xf32>
    %c0_112 = arith.constant 0 : index
    %c0_113 = arith.constant 0 : index
    %300 = vector.load %arg17[%c0_112, %c0_113] : memref<1x32xf32, #tpu.memory_space<vmem>>, vector<1x32xf32>
    %301 = vector.broadcast %300 : vector<1x32xf32> to vector<16x32xf32>
    %302 = arith.addf %299, %301 : vector<16x32xf32>
    %303 = arith.addf %183, %302 : vector<16x32xf32>
    %c0_114 = arith.constant 0 : index
    %c0_115 = arith.constant 0 : index
    %304 = vector.load %arg18[%c0_114, %c0_115] : memref<1x32xf32, #tpu.memory_space<vmem>>, vector<1x32xf32>
    %c0_116 = arith.constant 0 : index
    %c0_117 = arith.constant 0 : index
    %305 = vector.load %arg19[%c0_116, %c0_117] : memref<1x32xf32, #tpu.memory_space<vmem>>, vector<1x32xf32>
    %cst_118 = arith.constant dense<0.000000e+00> : vector<16xf32>
    %306 = vector.multi_reduction <add>, %303, %cst_118 [1] : vector<16x32xf32> to vector<16xf32>
    %307 = vector.shape_cast %306 : vector<16xf32> to vector<16x1xf32>
    %cst_119 = arith.constant 3.200000e+01 : f32
    %308 = vector.broadcast %cst_119 : f32 to vector<16x1xf32>
    %309 = arith.divf %307, %308 : vector<16x1xf32>
    %310 = arith.mulf %303, %303 : vector<16x32xf32>
    %cst_120 = arith.constant dense<0.000000e+00> : vector<16xf32>
    %311 = vector.multi_reduction <add>, %310, %cst_120 [1] : vector<16x32xf32> to vector<16xf32>
    %312 = vector.shape_cast %311 : vector<16xf32> to vector<16x1xf32>
    %cst_121 = arith.constant 3.200000e+01 : f32
    %313 = vector.broadcast %cst_121 : f32 to vector<16x1xf32>
    %314 = arith.divf %312, %313 : vector<16x1xf32>
    %315 = arith.mulf %309, %309 : vector<16x1xf32>
    %316 = arith.subf %314, %315 : vector<16x1xf32>
    %317 = vector.broadcast %309 : vector<16x1xf32> to vector<16x32xf32>
    %318 = arith.subf %303, %317 : vector<16x32xf32>
    %cst_122 = arith.constant 9.99999974E-6 : f32
    %319 = vector.broadcast %cst_122 : f32 to vector<16x1xf32>
    %320 = arith.addf %316, %319 : vector<16x1xf32>
    %321 = math.rsqrt %320 : vector<16x1xf32>
    %322 = vector.broadcast %321 : vector<16x1xf32> to vector<16x32xf32>
    %323 = arith.mulf %318, %322 : vector<16x32xf32>
    %324 = vector.broadcast %304 : vector<1x32xf32> to vector<16x32xf32>
    %325 = arith.mulf %323, %324 : vector<16x32xf32>
    %326 = vector.broadcast %305 : vector<1x32xf32> to vector<16x32xf32>
    %327 = arith.addf %325, %326 : vector<16x32xf32>
    %328 = arith.truncf %327 : vector<16x32xf32> to vector<16x32xbf16>
    %c0_123 = arith.constant 0 : index
    %c0_124 = arith.constant 0 : index
    %329 = vector.load %arg20[%c0_123, %c0_124] : memref<32x2048xbf16, #tpu.memory_space<vmem>>, vector<32x2048xbf16>
    %cst_125 = arith.constant dense<0.000000e+00> : vector<16x2048xf32>
    %330 = tpu.matmul %328, %329, %cst_125 {dimension_numbers = #tpu.dot_dimension_numbers<[1], [0], [0], [1], [0, 0, 1, 1], [], []>} : vector<16x32xbf16>, vector<32x2048xbf16>, vector<16x2048xf32> -> vector<16x2048xf32>
    %c0_126 = arith.constant 0 : index
    %c0_127 = arith.constant 0 : index
    %331 = vector.load %arg21[%c0_126, %c0_127] : memref<1x2048xf32, #tpu.memory_space<vmem>>, vector<1x2048xf32>
    %332 = vector.broadcast %331 : vector<1x2048xf32> to vector<16x2048xf32>
    %333 = arith.addf %330, %332 : vector<16x2048xf32>
    %cst_128 = arith.constant 0.000000e+00 : f32
    %334 = vector.broadcast %cst_128 : f32 to vector<16x2048xf32>
    %335 = arith.maximumf %333, %334 : vector<16x2048xf32>
    %336 = arith.truncf %335 : vector<16x2048xf32> to vector<16x2048xbf16>
    %c0_129 = arith.constant 0 : index
    %c0_130 = arith.constant 0 : index
    %337 = vector.load %arg22[%c0_129, %c0_130] : memref<2048x32xbf16, #tpu.memory_space<vmem>>, vector<2048x32xbf16>
    %cst_131 = arith.constant dense<0.000000e+00> : vector<16x32xf32>
    %338 = tpu.matmul %336, %337, %cst_131 {dimension_numbers = #tpu.dot_dimension_numbers<[1], [0], [0], [1], [0, 0, 1, 1], [], []>} : vector<16x2048xbf16>, vector<2048x32xbf16>, vector<16x32xf32> -> vector<16x32xf32>
    %c0_132 = arith.constant 0 : index
    %c0_133 = arith.constant 0 : index
    %339 = vector.load %arg23[%c0_132, %c0_133] : memref<1x32xf32, #tpu.memory_space<vmem>>, vector<1x32xf32>
    %340 = vector.broadcast %339 : vector<1x32xf32> to vector<16x32xf32>
    %341 = arith.addf %338, %340 : vector<16x32xf32>
    %342 = arith.addf %327, %341 : vector<16x32xf32>
    %c0_134 = arith.constant 0 : index
    %c0_135 = arith.constant 0 : index
    %343 = vector.load %arg24[%c0_134, %c0_135] : memref<1x32xf32, #tpu.memory_space<vmem>>, vector<1x32xf32>
    %c0_136 = arith.constant 0 : index
    %c0_137 = arith.constant 0 : index
    %344 = vector.load %arg25[%c0_136, %c0_137] : memref<1x32xf32, #tpu.memory_space<vmem>>, vector<1x32xf32>
    %cst_138 = arith.constant dense<0.000000e+00> : vector<16xf32>
    %345 = vector.multi_reduction <add>, %342, %cst_138 [1] : vector<16x32xf32> to vector<16xf32>
    %346 = vector.shape_cast %345 : vector<16xf32> to vector<16x1xf32>
    %cst_139 = arith.constant 3.200000e+01 : f32
    %347 = vector.broadcast %cst_139 : f32 to vector<16x1xf32>
    %348 = arith.divf %346, %347 : vector<16x1xf32>
    %349 = arith.mulf %342, %342 : vector<16x32xf32>
    %cst_140 = arith.constant dense<0.000000e+00> : vector<16xf32>
    %350 = vector.multi_reduction <add>, %349, %cst_140 [1] : vector<16x32xf32> to vector<16xf32>
    %351 = vector.shape_cast %350 : vector<16xf32> to vector<16x1xf32>
    %cst_141 = arith.constant 3.200000e+01 : f32
    %352 = vector.broadcast %cst_141 : f32 to vector<16x1xf32>
    %353 = arith.divf %351, %352 : vector<16x1xf32>
    %354 = arith.mulf %348, %348 : vector<16x1xf32>
    %355 = arith.subf %353, %354 : vector<16x1xf32>
    %356 = vector.broadcast %348 : vector<16x1xf32> to vector<16x32xf32>
    %357 = arith.subf %342, %356 : vector<16x32xf32>
    %cst_142 = arith.constant 9.99999974E-6 : f32
    %358 = vector.broadcast %cst_142 : f32 to vector<16x1xf32>
    %359 = arith.addf %355, %358 : vector<16x1xf32>
    %360 = math.rsqrt %359 : vector<16x1xf32>
    %361 = vector.broadcast %360 : vector<16x1xf32> to vector<16x32xf32>
    %362 = arith.mulf %357, %361 : vector<16x32xf32>
    %363 = vector.broadcast %343 : vector<1x32xf32> to vector<16x32xf32>
    %364 = arith.mulf %362, %363 : vector<16x32xf32>
    %365 = vector.broadcast %344 : vector<1x32xf32> to vector<16x32xf32>
    %366 = arith.addf %364, %365 : vector<16x32xf32>
    %367 = arith.truncf %366 : vector<16x32xf32> to vector<16x32xbf16>
    %c0_143 = arith.constant 0 : index
    %c0_144 = arith.constant 0 : index
    %368 = vector.load %arg26[%c0_143, %c0_144] : memref<32x32xbf16, #tpu.memory_space<vmem>>, vector<32x32xbf16>
    %cst_145 = arith.constant dense<0.000000e+00> : vector<16x32xf32>
    %369 = tpu.matmul %367, %368, %cst_145 {dimension_numbers = #tpu.dot_dimension_numbers<[1], [0], [0], [1], [0, 0, 1, 1], [], []>} : vector<16x32xbf16>, vector<32x32xbf16>, vector<16x32xf32> -> vector<16x32xf32>
    %c0_146 = arith.constant 0 : index
    %c0_147 = arith.constant 0 : index
    %370 = vector.load %arg27[%c0_146, %c0_147] : memref<1x32xf32, #tpu.memory_space<vmem>>, vector<1x32xf32>
    %371 = vector.broadcast %370 : vector<1x32xf32> to vector<16x32xf32>
    %372 = arith.addf %369, %371 : vector<16x32xf32>
    %cst_148 = arith.constant 0.000000e+00 : f32
    %373 = vector.broadcast %cst_148 : f32 to vector<16x32xf32>
    %374 = arith.maximumf %372, %373 : vector<16x32xf32>
    %c0_149 = arith.constant 0 : index
    %c0_150 = arith.constant 0 : index
    %375 = vector.load %arg28[%c0_149, %c0_150] : memref<16x32xf32, #tpu.memory_space<vmem>>, vector<16x32xf32>
    tpu.vector_store %arg28[%c0_149, %c0_150], %374 {strides = array<i32>} : memref<16x32xf32, #tpu.memory_space<vmem>>, vector<16x32xf32>,
    return
  }
  func.func @transform_0(%arg0: i32) -> (i32, i32) {
    %c0_i32 = arith.constant 0 : i32
    %c0_i32_0 = arith.constant 0 : i32
    %c0_i32_1 = arith.constant 0 : i32
    return %c0_i32, %c0_i32_0 : i32, i32
  }
  func.func @transform_1(%arg0: i32) -> (i32, i32) {
    %c0_i32 = arith.constant 0 : i32
    %c0_i32_0 = arith.constant 0 : i32
    %c0_i32_1 = arith.constant 0 : i32
    return %c0_i32, %c0_i32_0 : i32, i32
  }
  func.func @transform_2(%arg0: i32) -> (i32, i32) {
    %c0_i32 = arith.constant 0 : i32
    %c0_i32_0 = arith.constant 0 : i32
    %c0_i32_1 = arith.constant 0 : i32
    return %c0_i32, %c0_i32_0 : i32, i32
  }
  func.func @transform_3(%arg0: i32) -> (i32, i32, i32) {
    %c0_i32 = arith.constant 0 : i32
    %c0_i32_0 = arith.constant 0 : i32
    %c0_i32_1 = arith.constant 0 : i32
    %c0_i32_2 = arith.constant 0 : i32
    return %c0_i32, %c0_i32_0, %c0_i32_1 : i32, i32, i32
  }
  func.func @transform_4(%arg0: i32) -> (i32, i32) {
    %c0_i32 = arith.constant 0 : i32
    %c0_i32_0 = arith.constant 0 : i32
    %c0_i32_1 = arith.constant 0 : i32
    return %c0_i32, %c0_i32_0 : i32, i32
  }
  func.func @transform_5(%arg0: i32) -> (i32, i32) {
    %c0_i32 = arith.constant 0 : i32
    %c0_i32_0 = arith.constant 0 : i32
    %c0_i32_1 = arith.constant 0 : i32
    return %c0_i32, %c0_i32_0 : i32, i32
  }
  func.func @transform_6(%arg0: i32) -> (i32, i32) {
    %c0_i32 = arith.constant 0 : i32
    %c0_i32_0 = arith.constant 0 : i32
    %c0_i32_1 = arith.constant 0 : i32
    return %c0_i32, %c0_i32_0 : i32, i32
  }
  func.func @transform_7(%arg0: i32) -> (i32, i32) {
    %c0_i32 = arith.constant 0 : i32
    %c0_i32_0 = arith.constant 0 : i32
    %c0_i32_1 = arith.constant 0 : i32
    return %c0_i32, %c0_i32_0 : i32, i32
  }
  func.func @transform_8(%arg0: i32) -> (i32, i32) {
    %c0_i32 = arith.constant 0 : i32
    %c0_i32_0 = arith.constant 0 : i32
    %c0_i32_1 = arith.constant 0 : i32
    return %c0_i32, %c0_i32_0 : i32, i32
  }
  func.func @transform_9(%arg0: i32) -> (i32, i32) {
    %c0_i32 = arith.constant 0 : i32
    %c0_i32_0 = arith.constant 0 : i32
    %c0_i32_1 = arith.constant 0 : i32
    return %c0_i32, %c0_i32_0 : i32, i32
  }
  func.func @transform_10(%arg0: i32) -> (i32, i32) {
    %c0_i32 = arith.constant 0 : i32
    %c0_i32_0 = arith.constant 0 : i32
    %c0_i32_1 = arith.constant 0 : i32
    return %c0_i32, %c0_i32_0 : i32, i32
  }
  func.func @transform_11(%arg0: i32) -> (i32, i32) {
    %c0_i32 = arith.constant 0 : i32
    %c0_i32_0 = arith.constant 0 : i32
    %c0_i32_1 = arith.constant 0 : i32
    return %c0_i32, %c0_i32_0 : i32, i32
  }
  func.func @transform_12(%arg0: i32) -> (i32, i32) {
    %c0_i32 = arith.constant 0 : i32
    %c0_i32_0 = arith.constant 0 : i32
    %c0_i32_1 = arith.constant 0 : i32
    return %c0_i32, %c0_i32_0 : i32, i32
  }
  func.func @transform_13(%arg0: i32) -> (i32, i32) {
    %c0_i32 = arith.constant 0 : i32
    %c0_i32_0 = arith.constant 0 : i32
    %c0_i32_1 = arith.constant 0 : i32
    return %c0_i32, %c0_i32_0 : i32, i32
  }
  func.func @transform_14(%arg0: i32) -> (i32, i32) {
    %c0_i32 = arith.constant 0 : i32
    %c0_i32_0 = arith.constant 0 : i32
    %c0_i32_1 = arith.constant 0 : i32
    return %c0_i32, %c0_i32_0 : i32, i32
  }
  func.func @transform_15(%arg0: i32) -> (i32, i32, i32) {
    %c0_i32 = arith.constant 0 : i32
    %c0_i32_0 = arith.constant 0 : i32
    %c0_i32_1 = arith.constant 0 : i32
    %c0_i32_2 = arith.constant 0 : i32
    return %c0_i32, %c0_i32_0, %c0_i32_1 : i32, i32, i32
  }
  func.func @transform_16(%arg0: i32) -> (i32, i32) {
    %c0_i32 = arith.constant 0 : i32
    %c0_i32_0 = arith.constant 0 : i32
    %c0_i32_1 = arith.constant 0 : i32
    return %c0_i32, %c0_i32_0 : i32, i32
  }
  func.func @transform_17(%arg0: i32) -> (i32, i32) {
    %c0_i32 = arith.constant 0 : i32
    %c0_i32_0 = arith.constant 0 : i32
    %c0_i32_1 = arith.constant 0 : i32
    return %c0_i32, %c0_i32_0 : i32, i32
  }
  func.func @transform_18(%arg0: i32) -> (i32, i32) {
    %c0_i32 = arith.constant 0 : i32
    %c0_i32_0 = arith.constant 0 : i32
    %c0_i32_1 = arith.constant 0 : i32
    return %c0_i32, %c0_i32_0 : i32, i32
  }
  func.func @transform_19(%arg0: i32) -> (i32, i32) {
    %c0_i32 = arith.constant 0 : i32
    %c0_i32_0 = arith.constant 0 : i32
    %c0_i32_1 = arith.constant 0 : i32
    return %c0_i32, %c0_i32_0 : i32, i32
  }
  func.func @transform_20(%arg0: i32) -> (i32, i32) {
    %c0_i32 = arith.constant 0 : i32
    %c0_i32_0 = arith.constant 0 : i32
    %c0_i32_1 = arith.constant 0 : i32
    return %c0_i32, %c0_i32_0 : i32, i32
  }
  func.func @transform_21(%arg0: i32) -> (i32, i32) {
    %c0_i32 = arith.constant 0 : i32
    %c0_i32_0 = arith.constant 0 : i32
    %c0_i32_1 = arith.constant 0 : i32
    return %c0_i32, %c0_i32_0 : i32, i32
  }
  func.func @transform_22(%arg0: i32) -> (i32, i32) {
    %c0_i32 = arith.constant 0 : i32
    %c0_i32_0 = arith.constant 0 : i32
    %c0_i32_1 = arith.constant 0 : i32
    return %c0_i32, %c0_i32_0 : i32, i32
  }
  func.func @transform_23(%arg0: i32) -> (i32, i32) {
    %c0_i32 = arith.constant 0 : i32
    %c0_i32_0 = arith.constant 0 : i32
    %c0_i32_1 = arith.constant 0 : i32
    return %c0_i32, %c0_i32_0 : i32, i32
  }
  func.func @transform_24(%arg0: i32) -> (i32, i32) {
    %c0_i32 = arith.constant 0 : i32
    %c0_i32_0 = arith.constant 0 : i32
    %c0_i32_1 = arith.constant 0 : i32
    return %c0_i32, %c0_i32_0 : i32, i32
  }
  func.func @transform_25(%arg0: i32) -> (i32, i32) {
    %c0_i32 = arith.constant 0 : i32
    %c0_i32_0 = arith.constant 0 : i32
    %c0_i32_1 = arith.constant 0 : i32
    return %c0_i32, %c0_i32_0 : i32, i32
  }
  func.func @transform_26(%arg0: i32) -> (i32, i32) {
    %c0_i32 = arith.constant 0 : i32
    %c0_i32_0 = arith.constant 0 : i32
    %c0_i32_1 = arith.constant 0 : i32
    return %c0_i32, %c0_i32_0 : i32, i32
  }
  func.func @transform_27(%arg0: i32) -> (i32, i32) {
    %c0_i32 = arith.constant 0 : i32
    %c0_i32_0 = arith.constant 0 : i32
    %c0_i32_1 = arith.constant 0 : i32
    return %c0_i32, %c0_i32_0 : i32, i32
  }
}

</mosaic_0001>

<llo_original>
// kernel: tpu_custom_call.1
$region0: #{tpu_custom_call.1}
  #allocation0 [shape = 'u32[]', space=smem, size = 0x4, offset = 0x4, fixed_abs, tag = 'smem constant byte address 0x4 - core index']
  #allocation1 [shape = 'u32[72,128]{1,0:T(1,128)}', space=vmem, size = 0x9000, scoped, tag = 'internal scratch']
  %s0 = inlined_call_operand.vmem [shape: f32[16,32], index: 0, kind: input, shape index: {}]
  %s1 = inlined_call_operand.vmem [shape: bf16[32,96], index: 1, kind: input, shape index: {}]
  %s2 = inlined_call_operand.vmem [shape: f32[1,96], index: 2, kind: input, shape index: {}]
  %s3 = inlined_call_operand.vmem [shape: bf16[4,8,32], index: 3, kind: input, shape index: {}]
  %s4 = inlined_call_operand.vmem [shape: f32[1,32], index: 4, kind: input, shape index: {}]
  %s5 = inlined_call_operand.vmem [shape: f32[1,32], index: 5, kind: input, shape index: {}]
  %s6 = inlined_call_operand.vmem [shape: f32[1,32], index: 6, kind: input, shape index: {}]
  %s7 = inlined_call_operand.vmem [shape: bf16[32,2048], index: 7, kind: input, shape index: {}]
  %s8 = inlined_call_operand.vmem [shape: f32[1,2048], index: 8, kind: input, shape index: {}]
  %s9 = inlined_call_operand.vmem [shape: bf16[2048,32], index: 9, kind: input, shape index: {}]
  %s10 = inlined_call_operand.vmem [shape: f32[1,32], index: 10, kind: input, shape index: {}]
  %s11 = inlined_call_operand.vmem [shape: f32[1,32], index: 11, kind: input, shape index: {}]
  %s12 = inlined_call_operand.vmem [shape: f32[1,32], index: 12, kind: input, shape index: {}]
  %s13 = inlined_call_operand.vmem [shape: bf16[32,96], index: 13, kind: input, shape index: {}]
  %s14 = inlined_call_operand.vmem [shape: f32[1,96], index: 14, kind: input, shape index: {}]
  %s15 = inlined_call_operand.vmem [shape: bf16[4,8,32], index: 15, kind: input, shape index: {}]
  %s16 = inlined_call_operand.vmem [shape: f32[1,32], index: 16, kind: input, shape index: {}]
  %s17 = inlined_call_operand.vmem [shape: f32[1,32], index: 17, kind: input, shape index: {}]
  %s18 = inlined_call_operand.vmem [shape: f32[1,32], index: 18, kind: input, shape index: {}]
  %s19 = inlined_call_operand.vmem [shape: bf16[32,2048], index: 19, kind: input, shape index: {}]
  %s20 = inlined_call_operand.vmem [shape: f32[1,2048], index: 20, kind: input, shape index: {}]
  %s21 = inlined_call_operand.vmem [shape: bf16[2048,32], index: 21, kind: input, shape index: {}]
  %s22 = inlined_call_operand.vmem [shape: f32[1,32], index: 22, kind: input, shape index: {}]
  %s23 = inlined_call_operand.vmem [shape: f32[1,32], index: 23, kind: input, shape index: {}]
  %s24 = inlined_call_operand.vmem [shape: f32[1,32], index: 24, kind: input, shape index: {}]
  %s25 = inlined_call_operand.vmem [shape: bf16[32,32], index: 25, kind: input, shape index: {}]
  %s26 = inlined_call_operand.vmem [shape: f32[1,32], index: 26, kind: input, shape index: {}]
  %s27 = inlined_call_operand.hbm [shape: f32[16,32], index: 27, kind: output, shape index: {}]
  %s28 = sld [smem:[#allocation0]]
  $region118: #{tpu_custom_call.1} parent=0
    _
  %s30 = ssub.s32 1, %s28
  %s31 = scalar_select 0, %s30, %s28
  $region1: #{tpu_custom_call.1} parent=0
    #allocation2 [shape = 'u8[8192]{0}', space=vmem, size = 0x2000, scoped, tag = 'output window, operand 0, single buffered']
    #allocation3 [shape = 's32[1]{0}', space=sflag, size = 0x4, scoped, tag = 'scoped memory for tpu_custom_call.1']
    %32 = vsyncpa [#allocation3], 0
    // Predicated region
    $region2: #{tpu_custom_call.1} parent=1 // pred_check
      _
    $region3: #{tpu_custom_call.1} parent=1 // pred_check_branch
      %34 = sbr.rel (0) target = $region5
    $region4: #{tpu_custom_call.1} parent=1 // pred_region
      _
    $region5: #{tpu_custom_call.1} parent=1 // pred_fallthru
      _
    // Predicated region
    $region6: #{tpu_custom_call.1} parent=1 // pred_check
      _
    $region7: #{tpu_custom_call.1} parent=1 // pred_check_branch
      %36 = sbr.rel (0) target = $region9
    $region8: #{tpu_custom_call.1} parent=1 // pred_region
      _
    $region9: #{tpu_custom_call.1} parent=1 // pred_fallthru
      _
    // Predicated region
    $region10: #{tpu_custom_call.1} parent=1 // pred_check
      _
    $region11: #{tpu_custom_call.1} parent=1 // pred_check_branch
      %38 = sbr.rel (0) target = $region13
    $region12: #{tpu_custom_call.1} parent=1 // pred_region
      _
    $region13: #{tpu_custom_call.1} parent=1 // pred_fallthru
      _
    // Predicated region
    $region14: #{tpu_custom_call.1} parent=1 // pred_check
      _
    $region15: #{tpu_custom_call.1} parent=1 // pred_check_branch
      %40 = sbr.rel (0) target = $region17
    $region16: #{tpu_custom_call.1} parent=1 // pred_region
      _
    $region17: #{tpu_custom_call.1} parent=1 // pred_fallthru
      _
    // Predicated region
    $region18: #{tpu_custom_call.1} parent=1 // pred_check
      _
    $region19: #{tpu_custom_call.1} parent=1 // pred_check_branch
      %42 = sbr.rel (0) target = $region21
    $region20: #{tpu_custom_call.1} parent=1 // pred_region
      _
    $region21: #{tpu_custom_call.1} parent=1 // pred_fallthru
      _
    // Predicated region
    $region22: #{tpu_custom_call.1} parent=1 // pred_check
      _
    $region23: #{tpu_custom_call.1} parent=1 // pred_check_branch
      %44 = sbr.rel (0) target = $region25
    $region24: #{tpu_custom_call.1} parent=1 // pred_region
      _
    $region25: #{tpu_custom_call.1} parent=1 // pred_fallthru
      _
    // Predicated region
    $region26: #{tpu_custom_call.1} parent=1 // pred_check
      _
    $region27: #{tpu_custom_call.1} parent=1 // pred_check_branch
      %46 = sbr.rel (0) target = $region29
    $region28: #{tpu_custom_call.1} parent=1 // pred_region
      _
    $region29: #{tpu_custom_call.1} parent=1 // pred_fallthru
      _
    // Predicated region
    $region30: #{tpu_custom_call.1} parent=1 // pred_check
      _
    $region31: #{tpu_custom_call.1} parent=1 // pred_check_branch
      %48 = sbr.rel (0) target = $region33
    $region32: #{tpu_custom_call.1} parent=1 // pred_region
      _
    $region33: #{tpu_custom_call.1} parent=1 // pred_fallthru
      _
    // Predicated region
    $region34: #{tpu_custom_call.1} parent=1 // pred_check
      _
    $region35: #{tpu_custom_call.1} parent=1 // pred_check_branch
      %50 = sbr.rel (0) target = $region37
    $region36: #{tpu_custom_call.1} parent=1 // pred_region
      _
    $region37: #{tpu_custom_call.1} parent=1 // pred_fallthru
      _
    // Predicated region
    $region38: #{tpu_custom_call.1} parent=1 // pred_check
      _
    $region39: #{tpu_custom_call.1} parent=1 // pred_check_branch
      %52 = sbr.rel (0) target = $region41
    $region40: #{tpu_custom_call.1} parent=1 // pred_region
      _
    $region41: #{tpu_custom_call.1} parent=1 // pred_fallthru
      _
    // Predicated region
    $region42: #{tpu_custom_call.1} parent=1 // pred_check
      _
    $region43: #{tpu_custom_call.1} parent=1 // pred_check_branch
      %54 = sbr.rel (0) target = $region45
    $region44: #{tpu_custom_call.1} parent=1 // pred_region
      _
    $region45: #{tpu_custom_call.1} parent=1 // pred_fallthru
      _
    // Predicated region
    $region46: #{tpu_custom_call.1} parent=1 // pred_check
      _
    $region47: #{tpu_custom_call.1} parent=1 // pred_check_branch
      %56 = sbr.rel (0) target = $region49
    $region48: #{tpu_custom_call.1} parent=1 // pred_region
      _
    $region49: #{tpu_custom_call.1} parent=1 // pred_fallthru
      _
    // Predicated region
    $region50: #{tpu_custom_call.1} parent=1 // pred_check
      _
    $region51: #{tpu_custom_call.1} parent=1 // pred_check_branch
      %58 = sbr.rel (0) target = $region53
    $region52: #{tpu_custom_call.1} parent=1 // pred_region
      _
    $region53: #{tpu_custom_call.1} parent=1 // pred_fallthru
      _
    // Predicated region
    $region54: #{tpu_custom_call.1} parent=1 // pred_check
      _
    $region55: #{tpu_custom_call.1} parent=1 // pred_check_branch
      %60 = sbr.rel (0) target = $region57
    $region56: #{tpu_custom_call.1} parent=1 // pred_region
      _
    $region57: #{tpu_custom_call.1} parent=1 // pred_fallthru
      _
    // Predicated region
    $region58: #{tpu_custom_call.1} parent=1 // pred_check
      _
    $region59: #{tpu_custom_call.1} parent=1 // pred_check_branch
      %62 = sbr.rel (0) target = $region61
    $region60: #{tpu_custom_call.1} parent=1 // pred_region
      _
    $region61: #{tpu_custom_call.1} parent=1 // pred_fallthru
      _
    // Predicated region
    $region62: #{tpu_custom_call.1} parent=1 // pred_check
      _
    $region63: #{tpu_custom_call.1} parent=1 // pred_check_branch
      %64 = sbr.rel (0) target = $region65
    $region64: #{tpu_custom_call.1} parent=1 // pred_region
      _
    $region65: #{tpu_custom_call.1} parent=1 // pred_fallthru
      _
    // Predicated region
    $region66: #{tpu_custom_call.1} parent=1 // pred_check
      _
    $region67: #{tpu_custom_call.1} parent=1 // pred_check_branch
      %66 = sbr.rel (0) target = $region69
    $region68: #{tpu_custom_call.1} parent=1 // pred_region
      _
    $region69: #{tpu_custom_call.1} parent=1 // pred_fallthru
      _
    // Predicated region
    $region70: #{tpu_custom_call.1} parent=1 // pred_check
      _
    $region71: #{tpu_custom_call.1} parent=1 // pred_check_branch
      %68 = sbr.rel (0) target = $region73
    $region72: #{tpu_custom_call.1} parent=1 // pred_region
      _
    $region73: #{tpu_custom_call.1} parent=1 // pred_fallthru
      _
    // Predicated region
    $region74: #{tpu_custom_call.1} parent=1 // pred_check
      _
    $region75: #{tpu_custom_call.1} parent=1 // pred_check_branch
      %70 = sbr.rel (0) target = $region77
    $region76: #{tpu_custom_call.1} parent=1 // pred_region
      _
    $region77: #{tpu_custom_call.1} parent=1 // pred_fallthru
      _
    // Predicated region
    $region78: #{tpu_custom_call.1} parent=1 // pred_check
      _
    $region79: #{tpu_custom_call.1} parent=1 // pred_check_branch
      %72 = sbr.rel (0) target = $region81
    $region80: #{tpu_custom_call.1} parent=1 // pred_region
      _
    $region81: #{tpu_custom_call.1} parent=1 // pred_fallthru
      _
    // Predicated region
    $region82: #{tpu_custom_call.1} parent=1 // pred_check
      _
    $region83: #{tpu_custom_call.1} parent=1 // pred_check_branch
      %74 = sbr.rel (0) target = $region85
    $region84: #{tpu_custom_call.1} parent=1 // pred_region
      _
    $region85: #{tpu_custom_call.1} parent=1 // pred_fallthru
      _
    // Predicated region
    $region86: #{tpu_custom_call.1} parent=1 // pred_check
      _
    $region87: #{tpu_custom_call.1} parent=1 // pred_check_branch
      %76 = sbr.rel (0) target = $region89
    $region88: #{tpu_custom_call.1} parent=1 // pred_region
      _
    $region89: #{tpu_custom_call.1} parent=1 // pred_fallthru
      _
    // Predicated region
    $region90: #{tpu_custom_call.1} parent=1 // pred_check
      _
    $region91: #{tpu_custom_call.1} parent=1 // pred_check_branch
      %78 = sbr.rel (0) target = $region93
    $region92: #{tpu_custom_call.1} parent=1 // pred_region
      _
    $region93: #{tpu_custom_call.1} parent=1 // pred_fallthru
      _
    // Predicated region
    $region94: #{tpu_custom_call.1} parent=1 // pred_check
      _
    $region95: #{tpu_custom_call.1} parent=1 // pred_check_branch
      %80 = sbr.rel (0) target = $region97
    $region96: #{tpu_custom_call.1} parent=1 // pred_region
      _
    $region97: #{tpu_custom_call.1} parent=1 // pred_fallthru
      _
    // Predicated region
    $region98: #{tpu_custom_call.1} parent=1 // pred_check
      _
    $region99: #{tpu_custom_call.1} parent=1 // pred_check_branch
      %82 = sbr.rel (0) target = $region101
    $region100: #{tpu_custom_call.1} parent=1 // pred_region
      _
    $region101: #{tpu_custom_call.1} parent=1 // pred_fallthru
      _
    // Predicated region
    $region102: #{tpu_custom_call.1} parent=1 // pred_check
      _
    $region103: #{tpu_custom_call.1} parent=1 // pred_check_branch
      %84 = sbr.rel (0) target = $region105
    $region104: #{tpu_custom_call.1} parent=1 // pred_region
      _
    $region105: #{tpu_custom_call.1} parent=1 // pred_fallthru
      _
    // Predicated region
    $region106: #{tpu_custom_call.1} parent=1 // pred_check
      _
    $region107: #{tpu_custom_call.1} parent=1 // pred_check_branch
      %86 = sbr.rel (0) target = $region109
    $region108: #{tpu_custom_call.1} parent=1 // pred_region
      _
    $region109: #{tpu_custom_call.1} parent=1 // pred_fallthru
      _
    %v88 = vld [vmem:[%s0] sm:$0xff]
    %v89 = vld [vmem:[%s0 + $0x8] sm:$0xff]
    %v90 = vpack.c.bf16 %v89, %v88
    %v91 = vld [vmem:[%s1] sm:$0xf]
    %v92 = vld [vmem:[%s1 + $0x4] sm:$0xf]
    %v93 = vld [vmem:[%s1 + $0x8] sm:$0xf]
    %v94 = vld [vmem:[%s1 + $0xc] sm:$0xf]
    %v95 = vld [vmem:[%s2] sm:$0x1]
    %v97 = vperm.slane %v95, 0
    %v103 = vunpack.c.l.b16 %v91
    %v104 = vunpack.c.l.b16 %v92
    %v105 = vunpack.c.l.b16 %v93
    %v106 = vunpack.c.l.b16 %v94
    %v107 = vpack.c.b16 %v104, %v103
    %v108 = vpack.c.b16 %v106, %v105
    %vm111 = vcmask 261120
    %v113 = vsel %vm111, %v90, 0
    %115 = vmatpush.bf16.msra.mxu0 0
    %116 = vmatpush.bf16.msra.mxu0 0
    %117 = vmatpush.bf16.msra.mxu0 0
    %118 = vmatpush.bf16.msra.mxu0 0
    %119 = vmatpush.bf16.msra.mxu0 0
    %120 = vmatpush.bf16.msra.mxu0 0
    %121 = vmatpush.bf16.msra.mxu0 %v108
    %122 = vmatpush.bf16.msra.mxu0 %v107
    %123 = vmatmul.bf16.gmra.mxu0 %v113
    %v124 = vpop.f32.mrf.mxu0
    %v125 = vadd.f32 %v97, %v124
    %v126 = vpop.f32.mrf.mxu0
    %v127 = vadd.f32 %v97, %v126
    %128 = vdwg.mxu0
    %v129 = vpack.c.bf16 %v125, %v125
    %v130 = vpack.c.bf16 %v127, %v127
    %v132 = vunpack.c.l.b16 %v129
    %v133 = vpack.c.b16 %v132, %v132
    %134 = vrot.lane.b32.xlu0 %v133, 96
    %v135 = vpop.permute.xlu0 %134
    %vm136 = vcmask 64512
    %v138 = vsel %vm136, %v129, 0
    %v141 = vsel %vm136, %v135, 0
    %143 = vmatpush.bf16.xpose.msra.mxu0 0
    %144 = vmatpush.bf16.xpose.msra.mxu0 0
    %145 = vmatpush.bf16.xpose.msra.mxu0 0
    %146 = vmatpush.bf16.xpose.msra.mxu0 0
    %147 = vmatpush.bf16.xpose.msra.mxu0 0
    %148 = vmatpush.bf16.xpose.msra.mxu0 0
    %149 = vmatpush.bf16.xpose.msra.mxu0 0
    %150 = vmatpush.bf16.xpose.msra.mxu0 %v141
    %151 = vmatmul.bf16.gmra.mxu0 %v138
    %v152 = vpop.f32.mrf.mxu0
    %v153 = vadd.f32 0.0, %v152
    %v154 = vpop.f32.mrf.mxu0
    %155 = vdwg.mxu0
    %v157 = vunpack.c.l.b16 %v130
    %v158 = vpack.c.b16 %v157, %v157
    %159 = vrot.lane.b32.xlu0 %v158, 96
    %v160 = vpop.permute.xlu0 %159
    %v162 = vsel %vm136, %v130, 0
    %v165 = vsel %vm136, %v160, 0
    %167 = vmatpush.bf16.xpose.msra.mxu0 0
    %168 = vmatpush.bf16.xpose.msra.mxu0 0
    %169 = vmatpush.bf16.xpose.msra.mxu0 0
    %170 = vmatpush.bf16.xpose.msra.mxu0 0
    %171 = vmatpush.bf16.xpose.msra.mxu0 0
    %172 = vmatpush.bf16.xpose.msra.mxu0 0
    %173 = vmatpush.bf16.xpose.msra.mxu0 0
    %174 = vmatpush.bf16.xpose.msra.mxu0 %v165
    %175 = vmatmul.bf16.gmra.mxu0 %v162
    %v176 = vpop.f32.mrf.mxu0
    %v177 = vadd.f32 0.0, %v176
    %v178 = vpop.f32.mrf.mxu0
    %179 = vdwg.mxu0
    %v180 = vmul.f32 %v153, 0.35355338
    %v181 = vmul.f32 %v177, 0.35355338
    %v182 = vsel %vm136, %v180, -inf
    %183 = vmax.xlane.f32.xlu0 %v182
    %v184 = vpop.xlane.xlu0 %183
    %v185 = vsel %vm136, %v181, -inf
    %186 = vmax.xlane.f32.xlu0 %v185
    %v187 = vpop.xlane.xlu0 %186
    %v188 = vsub.f32 %v180, %v184
    %v189 = vsub.f32 %v181, %v187
    %v190 = vmul.f32 %v188, 1.442695
    %v191 = vpow.pop %v190
    %v192 = vmul.f32 %v189, 1.442695
    %v193 = vpow.pop %v192
    %v194 = vsel %vm136, %v191, 0.0
    %195 = vadd.xlane.f32.xlu0 %v194
    %v196 = vpop.xlane.xlu0 %195
    %v197 = vsel %vm136, %v193, 0.0
    %198 = vadd.xlane.f32.xlu0 %v197
    %v199 = vpop.xlane.xlu0 %198
    %v200 = vrcp.pop %v196
    %v201 = vrcp.pop %v199
    %v202 = vmul.f32 %v191, %v200
    %v203 = vmul.f32 %v193, %v201
    %v204 = vpack.c.bf16 %v202, %v202
    %v205 = vpack.c.bf16 %v203, %v203
    %206 = vrot.lane.b32.xlu0 %v133, 64
    %v207 = vpop.permute.xlu0 %206
    %v209 = vsel %vm136, %v204, 0
    %vm211 = vcmask 1043456
    %v213 = vsel %vm211, %v207, 0
    %215 = vmatpush.bf16.msra.mxu0 0
    %216 = vmatpush.bf16.msra.mxu0 0
    %217 = vmatpush.bf16.msra.mxu0 0
    %218 = vmatpush.bf16.msra.mxu0 0
    %219 = vmatpush.bf16.msra.mxu0 0
    %220 = vmatpush.bf16.msra.mxu0 0
    %221 = vmatpush.bf16.msra.mxu0 0
    %222 = vmatpush.bf16.msra.mxu0 %v213
    %223 = vmatmul.bf16.gmra.mxu0 %v209
    %v224 = vpop.f32.mrf.mxu0
    %v225 = vadd.f32 0.0, %v224
    %v226 = vpop.f32.mrf.mxu0
    %227 = vdwg.mxu0
    %228 = vrot.lane.b32.xlu0 %v158, 64
    %v229 = vpop.permute.xlu0 %228
    %v231 = vsel %vm136, %v205, 0
    %v234 = vsel %vm211, %v229, 0
    %236 = vmatpush.bf16.msra.mxu0 0
    %237 = vmatpush.bf16.msra.mxu0 0
    %238 = vmatpush.bf16.msra.mxu0 0
    %239 = vmatpush.bf16.msra.mxu0 0
    %240 = vmatpush.bf16.msra.mxu0 0
    %241 = vmatpush.bf16.msra.mxu0 0
    %242 = vmatpush.bf16.msra.mxu0 0
    %243 = vmatpush.bf16.msra.mxu0 %v234
    %244 = vmatmul.bf16.gmra.mxu0 %v231
    %v245 = vpop.f32.mrf.mxu0
    %v246 = vadd.f32 0.0, %v245
    %v247 = vpop.f32.mrf.mxu0
    %248 = vdwg.mxu0
    %v249 = vpack.c.bf16 %v246, %v225
    %v250 = vld [vmem:[%s3] sm:$0xf]
    %251 = vrot.lane.b32.xlu0 %v133, 120
    %v252 = vpop.permute.xlu0 %251
    %253 = vrot.lane.b32.xlu0 %v133, 88
    %v254 = vpop.permute.xlu0 %253
    %v256 = vsel %vm136, %v252, 0
    %v259 = vsel %vm136, %v254, 0
    %261 = vmatpush.bf16.xpose.msra.mxu0 0
    %262 = vmatpush.bf16.xpose.msra.mxu0 0
    %263 = vmatpush.bf16.xpose.msra.mxu0 0
    %264 = vmatpush.bf16.xpose.msra.mxu0 0
    %265 = vmatpush.bf16.xpose.msra.mxu0 0
    %266 = vmatpush.bf16.xpose.msra.mxu0 0
    %267 = vmatpush.bf16.xpose.msra.mxu0 0
    %268 = vmatpush.bf16.xpose.msra.mxu0 %v259
    %269 = vmatmul.bf16.gmra.mxu0 %v256
    %v270 = vpop.f32.mrf.mxu0
    %v271 = vadd.f32 0.0, %v270
    %v272 = vpop.f32.mrf.mxu0
    %273 = vdwg.mxu0
    %274 = vrot.lane.b32.xlu0 %v158, 120
    %v275 = vpop.permute.xlu0 %274
    %276 = vrot.lane.b32.xlu0 %v158, 88
    %v277 = vpop.permute.xlu0 %276
    %v279 = vsel %vm136, %v275, 0
    %v282 = vsel %vm136, %v277, 0
    %284 = vmatpush.bf16.xpose.msra.mxu0 0
    %285 = vmatpush.bf16.xpose.msra.mxu0 0
    %286 = vmatpush.bf16.xpose.msra.mxu0 0
    %287 = vmatpush.bf16.xpose.msra.mxu0 0
    %288 = vmatpush.bf16.xpose.msra.mxu0 0
    %289 = vmatpush.bf16.xpose.msra.mxu0 0
    %290 = vmatpush.bf16.xpose.msra.mxu0 0
    %291 = vmatpush.bf16.xpose.msra.mxu0 %v282
    %292 = vmatmul.bf16.gmra.mxu0 %v279
    %v293 = vpop.f32.mrf.mxu0
    %v294 = vadd.f32 0.0, %v293
    %v295 = vpop.f32.mrf.mxu0
    %296 = vdwg.mxu0
    %v297 = vmul.f32 %v271, 0.35355338
    %v298 = vmul.f32 %v294, 0.35355338
    %v299 = vsel %vm136, %v297, -inf
    %300 = vmax.xlane.f32.xlu0 %v299
    %v301 = vpop.xlane.xlu0 %300
    %v302 = vsel %vm136, %v298, -inf
    %303 = vmax.xlane.f32.xlu0 %v302
    %v304 = vpop.xlane.xlu0 %303
    %v305 = vsub.f32 %v297, %v301
    %v306 = vsub.f32 %v298, %v304
    %v307 = vmul.f32 %v305, 1.442695
    %v308 = vpow.pop %v307
    %v309 = vmul.f32 %v306, 1.442695
    %v310 = vpow.pop %v309
    %v311 = vsel %vm136, %v308, 0.0
    %312 = vadd.xlane.f32.xlu0 %v311
    %v313 = vpop.xlane.xlu0 %312
    %v314 = vsel %vm136, %v310, 0.0
    %315 = vadd.xlane.f32.xlu0 %v314
    %v316 = vpop.xlane.xlu0 %315
    %v317 = vrcp.pop %v313
    %v318 = vrcp.pop %v316
    %v319 = vmul.f32 %v308, %v317
    %v320 = vmul.f32 %v310, %v318
    %v321 = vpack.c.bf16 %v319, %v319
    %v322 = vpack.c.bf16 %v320, %v320
    %323 = vrot.lane.b32.xlu0 %v133, 56
    %v324 = vpop.permute.xlu0 %323
    %v326 = vsel %vm136, %v321, 0
    %v329 = vsel %vm211, %v324, 0
    %331 = vmatpush.bf16.msra.mxu0 0
    %332 = vmatpush.bf16.msra.mxu0 0
    %333 = vmatpush.bf16.msra.mxu0 0
    %334 = vmatpush.bf16.msra.mxu0 0
    %335 = vmatpush.bf16.msra.mxu0 0
    %336 = vmatpush.bf16.msra.mxu0 0
    %337 = vmatpush.bf16.msra.mxu0 0
    %338 = vmatpush.bf16.msra.mxu0 %v329
    %339 = vmatmul.bf16.gmra.mxu0 %v326
    %v340 = vpop.f32.mrf.mxu0
    %v341 = vadd.f32 0.0, %v340
    %v342 = vpop.f32.mrf.mxu0
    %343 = vdwg.mxu0
    %344 = vrot.lane.b32.xlu0 %v158, 56
    %v345 = vpop.permute.xlu0 %344
    %v347 = vsel %vm136, %v322, 0
    %v350 = vsel %vm211, %v345, 0
    %352 = vmatpush.bf16.msra.mxu0 0
    %353 = vmatpush.bf16.msra.mxu0 0
    %354 = vmatpush.bf16.msra.mxu0 0
    %355 = vmatpush.bf16.msra.mxu0 0
    %356 = vmatpush.bf16.msra.mxu0 0
    %357 = vmatpush.bf16.msra.mxu0 0
    %358 = vmatpush.bf16.msra.mxu0 0
    %359 = vmatpush.bf16.msra.mxu0 %v350
    %360 = vmatmul.bf16.gmra.mxu0 %v347
    %v361 = vpop.f32.mrf.mxu0
    %v362 = vadd.f32 0.0, %v361
    %v363 = vpop.f32.mrf.mxu0
    %364 = vdwg.mxu0
    %v365 = vpack.c.bf16 %v362, %v341
    %s366 = scalar_lea.vmem %s3, 4
    %v367 = vld [vmem:[%s366] sm:$0xf]
    %v369 = vsel %vm136, %v365, 0
    %v372 = vsel %vm211, %v367, 0
    %374 = vmatpush.bf16.msra.mxu0 0
    %375 = vmatpush.bf16.msra.mxu0 0
    %376 = vmatpush.bf16.msra.mxu0 0
    %377 = vmatpush.bf16.msra.mxu0 0
    %378 = vmatpush.bf16.msra.mxu0 0
    %379 = vmatpush.bf16.msra.mxu0 0
    %380 = vmatpush.bf16.msra.mxu0 0
    %381 = vmatpush.bf16.msra.mxu0 %v372
    %382 = vmatmul.bf16.gmra.mxu0 %v369
    %v383 = vpop.f32.mrf.mxu0
    %v384 = vadd.f32 0.0, %v383
    %v385 = vpop.f32.mrf.mxu0
    %v386 = vadd.f32 0.0, %v385
    %387 = vdwg.mxu0
    %v389 = vsel %vm136, %v249, 0
    %v392 = vsel %vm211, %v250, 0
    %394 = vmatpush.bf16.msra.mxu0 0
    %395 = vmatpush.bf16.msra.mxu0 0
    %396 = vmatpush.bf16.msra.mxu0 0
    %397 = vmatpush.bf16.msra.mxu0 0
    %398 = vmatpush.bf16.msra.mxu0 0
    %399 = vmatpush.bf16.msra.mxu0 0
    %400 = vmatpush.bf16.msra.mxu0 0
    %401 = vmatpush.bf16.msra.mxu0 %v392
    %402 = vmatmul.bf16.gmra.mxu0 %v389
    %v403 = vpop.f32.mrf.mxu0
    %v404 = vadd.f32 %v384, %v403
    %v405 = vpop.f32.mrf.mxu0
    %v406 = vadd.f32 %v386, %v405
    %407 = vdwg.mxu0
    %408 = vrot.lane.b32.xlu0 %v133, 112
    %v409 = vpop.permute.xlu0 %408
    %410 = vrot.lane.b32.xlu0 %v133, 80
    %v411 = vpop.permute.xlu0 %410
    %v413 = vsel %vm136, %v409, 0
    %v416 = vsel %vm136, %v411, 0
    %418 = vmatpush.bf16.xpose.msra.mxu0 0
    %419 = vmatpush.bf16.xpose.msra.mxu0 0
    %420 = vmatpush.bf16.xpose.msra.mxu0 0
    %421 = vmatpush.bf16.xpose.msra.mxu0 0
    %422 = vmatpush.bf16.xpose.msra.mxu0 0
    %423 = vmatpush.bf16.xpose.msra.mxu0 0
    %424 = vmatpush.bf16.xpose.msra.mxu0 0
    %425 = vmatpush.bf16.xpose.msra.mxu0 %v416
    %426 = vmatmul.bf16.gmra.mxu0 %v413
    %v427 = vpop.f32.mrf.mxu0
    %v428 = vadd.f32 0.0, %v427
    %v429 = vpop.f32.mrf.mxu0
    %430 = vdwg.mxu0
    %431 = vrot.lane.b32.xlu0 %v158, 112
    %v432 = vpop.permute.xlu0 %431
    %433 = vrot.lane.b32.xlu0 %v158, 80
    %v434 = vpop.permute.xlu0 %433
    %v436 = vsel %vm136, %v432, 0
    %v439 = vsel %vm136, %v434, 0
    %441 = vmatpush.bf16.xpose.msra.mxu0 0
    %442 = vmatpush.bf16.xpose.msra.mxu0 0
    %443 = vmatpush.bf16.xpose.msra.mxu0 0
    %444 = vmatpush.bf16.xpose.msra.mxu0 0
    %445 = vmatpush.bf16.xpose.msra.mxu0 0
    %446 = vmatpush.bf16.xpose.msra.mxu0 0
    %447 = vmatpush.bf16.xpose.msra.mxu0 0
    %448 = vmatpush.bf16.xpose.msra.mxu0 %v439
    %449 = vmatmul.bf16.gmra.mxu0 %v436
    %v450 = vpop.f32.mrf.mxu0
    %v451 = vadd.f32 0.0, %v450
    %v452 = vpop.f32.mrf.mxu0
    %453 = vdwg.mxu0
    %v454 = vmul.f32 %v428, 0.35355338
    %v455 = vmul.f32 %v451, 0.35355338
    %v456 = vsel %vm136, %v454, -inf
    %457 = vmax.xlane.f32.xlu0 %v456
    %v458 = vpop.xlane.xlu0 %457
    %v459 = vsel %vm136, %v455, -inf
    %460 = vmax.xlane.f32.xlu0 %v459
    %v461 = vpop.xlane.xlu0 %460
    %v462 = vsub.f32 %v454, %v458
    %v463 = vsub.f32 %v455, %v461
    %v464 = vmul.f32 %v462, 1.442695
    %v465 = vpow.pop %v464
    %v466 = vmul.f32 %v463, 1.442695
    %v467 = vpow.pop %v466
    %v468 = vsel %vm136, %v465, 0.0
    %469 = vadd.xlane.f32.xlu0 %v468
    %v470 = vpop.xlane.xlu0 %469
    %v471 = vsel %vm136, %v467, 0.0
    %472 = vadd.xlane.f32.xlu0 %v471
    %v473 = vpop.xlane.xlu0 %472
    %v474 = vrcp.pop %v470
    %v475 = vrcp.pop %v473
    %v476 = vmul.f32 %v465, %v474
    %v477 = vmul.f32 %v467, %v475
    %v478 = vpack.c.bf16 %v476, %v476
    %v479 = vpack.c.bf16 %v477, %v477
    %480 = vrot.lane.b32.xlu0 %v133, 48
    %v481 = vpop.permute.xlu0 %480
    %v483 = vsel %vm136, %v478, 0
    %v486 = vsel %vm211, %v481, 0
    %488 = vmatpush.bf16.msra.mxu0 0
    %489 = vmatpush.bf16.msra.mxu0 0
    %490 = vmatpush.bf16.msra.mxu0 0
    %491 = vmatpush.bf16.msra.mxu0 0
    %492 = vmatpush.bf16.msra.mxu0 0
    %493 = vmatpush.bf16.msra.mxu0 0
    %494 = vmatpush.bf16.msra.mxu0 0
    %495 = vmatpush.bf16.msra.mxu0 %v486
    %496 = vmatmul.bf16.gmra.mxu0 %v483
    %v497 = vpop.f32.mrf.mxu0
    %v498 = vadd.f32 0.0, %v497
    %v499 = vpop.f32.mrf.mxu0
    %500 = vdwg.mxu0
    %501 = vrot.lane.b32.xlu0 %v158, 48
    %v502 = vpop.permute.xlu0 %501
    %v504 = vsel %vm136, %v479, 0
    %v507 = vsel %vm211, %v502, 0
    %509 = vmatpush.bf16.msra.mxu0 0
    %510 = vmatpush.bf16.msra.mxu0 0
    %511 = vmatpush.bf16.msra.mxu0 0
    %512 = vmatpush.bf16.msra.mxu0 0
    %513 = vmatpush.bf16.msra.mxu0 0
    %514 = vmatpush.bf16.msra.mxu0 0
    %515 = vmatpush.bf16.msra.mxu0 0
    %516 = vmatpush.bf16.msra.mxu0 %v507
    %517 = vmatmul.bf16.gmra.mxu0 %v504
    %v518 = vpop.f32.mrf.mxu0
    %v519 = vadd.f32 0.0, %v518
    %v520 = vpop.f32.mrf.mxu0
    %521 = vdwg.mxu0
    %v522 = vpack.c.bf16 %v519, %v498
    %s523 = scalar_lea.vmem %s3, 8
    %v524 = vld [vmem:[%s523] sm:$0xf]
    %v526 = vsel %vm136, %v522, 0
    %v529 = vsel %vm211, %v524, 0
    %531 = vmatpush.bf16.msra.mxu0 0
    %532 = vmatpush.bf16.msra.mxu0 0
    %533 = vmatpush.bf16.msra.mxu0 0
    %534 = vmatpush.bf16.msra.mxu0 0
    %535 = vmatpush.bf16.msra.mxu0 0
    %536 = vmatpush.bf16.msra.mxu0 0
    %537 = vmatpush.bf16.msra.mxu0 0
    %538 = vmatpush.bf16.msra.mxu0 %v529
    %539 = vmatmul.bf16.gmra.mxu0 %v526
    %v540 = vpop.f32.mrf.mxu0
    %v541 = vadd.f32 0.0, %v540
    %v542 = vpop.f32.mrf.mxu0
    %v543 = vadd.f32 0.0, %v542
    %544 = vdwg.mxu0
    %v545 = vadd.f32 %v404, %v541
    %v546 = vadd.f32 %v406, %v543
    %547 = vrot.lane.b32.xlu0 %v133, 104
    %v548 = vpop.permute.xlu0 %547
    %549 = vrot.lane.b32.xlu0 %v133, 72
    %v550 = vpop.permute.xlu0 %549
    %v552 = vsel %vm136, %v548, 0
    %v555 = vsel %vm136, %v550, 0
    %557 = vmatpush.bf16.xpose.msra.mxu0 0
    %558 = vmatpush.bf16.xpose.msra.mxu0 0
    %559 = vmatpush.bf16.xpose.msra.mxu0 0
    %560 = vmatpush.bf16.xpose.msra.mxu0 0
    %561 = vmatpush.bf16.xpose.msra.mxu0 0
    %562 = vmatpush.bf16.xpose.msra.mxu0 0
    %563 = vmatpush.bf16.xpose.msra.mxu0 0
    %564 = vmatpush.bf16.xpose.msra.mxu0 %v555
    %565 = vmatmul.bf16.gmra.mxu0 %v552
    %v566 = vpop.f32.mrf.mxu0
    %v567 = vadd.f32 0.0, %v566
    %v568 = vpop.f32.mrf.mxu0
    %569 = vdwg.mxu0
    %570 = vrot.lane.b32.xlu0 %v158, 104
    %v571 = vpop.permute.xlu0 %570
    %572 = vrot.lane.b32.xlu0 %v158, 72
    %v573 = vpop.permute.xlu0 %572
    %v575 = vsel %vm136, %v571, 0
    %v578 = vsel %vm136, %v573, 0
    %580 = vmatpush.bf16.xpose.msra.mxu0 0
    %581 = vmatpush.bf16.xpose.msra.mxu0 0
    %582 = vmatpush.bf16.xpose.msra.mxu0 0
    %583 = vmatpush.bf16.xpose.msra.mxu0 0
    %584 = vmatpush.bf16.xpose.msra.mxu0 0
    %585 = vmatpush.bf16.xpose.msra.mxu0 0
    %586 = vmatpush.bf16.xpose.msra.mxu0 0
    %587 = vmatpush.bf16.xpose.msra.mxu0 %v578
    %588 = vmatmul.bf16.gmra.mxu0 %v575
    %v589 = vpop.f32.mrf.mxu0
    %v590 = vadd.f32 0.0, %v589
    %v591 = vpop.f32.mrf.mxu0
    %592 = vdwg.mxu0
    %v593 = vmul.f32 %v567, 0.35355338
    %v594 = vmul.f32 %v590, 0.35355338
    %v595 = vsel %vm136, %v593, -inf
    %596 = vmax.xlane.f32.xlu0 %v595
    %v597 = vpop.xlane.xlu0 %596
    %v598 = vsel %vm136, %v594, -inf
    %599 = vmax.xlane.f32.xlu0 %v598
    %v600 = vpop.xlane.xlu0 %599
    %v601 = vsub.f32 %v593, %v597
    %v602 = vsub.f32 %v594, %v600
    %v603 = vmul.f32 %v601, 1.442695
    %v604 = vpow.pop %v603
    %v605 = vmul.f32 %v602, 1.442695
    %v606 = vpow.pop %v605
    %v607 = vsel %vm136, %v604, 0.0
    %608 = vadd.xlane.f32.xlu0 %v607
    %v609 = vpop.xlane.xlu0 %608
    %v610 = vsel %vm136, %v606, 0.0
    %611 = vadd.xlane.f32.xlu0 %v610
    %v612 = vpop.xlane.xlu0 %611
    %v613 = vrcp.pop %v609
    %v614 = vrcp.pop %v612
    %v615 = vmul.f32 %v604, %v613
    %v616 = vmul.f32 %v606, %v614
    %v617 = vpack.c.bf16 %v615, %v615
    %v618 = vpack.c.bf16 %v616, %v616
    %619 = vrot.lane.b32.xlu0 %v133, 40
    %v620 = vpop.permute.xlu0 %619
    %v622 = vsel %vm136, %v617, 0
    %v625 = vsel %vm211, %v620, 0
    %627 = vmatpush.bf16.msra.mxu0 0
    %628 = vmatpush.bf16.msra.mxu0 0
    %629 = vmatpush.bf16.msra.mxu0 0
    %630 = vmatpush.bf16.msra.mxu0 0
    %631 = vmatpush.bf16.msra.mxu0 0
    %632 = vmatpush.bf16.msra.mxu0 0
    %633 = vmatpush.bf16.msra.mxu0 0
    %634 = vmatpush.bf16.msra.mxu0 %v625
    %635 = vmatmul.bf16.gmra.mxu0 %v622
    %v636 = vpop.f32.mrf.mxu0
    %v637 = vadd.f32 0.0, %v636
    %v638 = vpop.f32.mrf.mxu0
    %639 = vdwg.mxu0
    %640 = vrot.lane.b32.xlu0 %v158, 40
    %v641 = vpop.permute.xlu0 %640
    %v643 = vsel %vm136, %v618, 0
    %v646 = vsel %vm211, %v641, 0
    %648 = vmatpush.bf16.msra.mxu0 0
    %649 = vmatpush.bf16.msra.mxu0 0
    %650 = vmatpush.bf16.msra.mxu0 0
    %651 = vmatpush.bf16.msra.mxu0 0
    %652 = vmatpush.bf16.msra.mxu0 0
    %653 = vmatpush.bf16.msra.mxu0 0
    %654 = vmatpush.bf16.msra.mxu0 0
    %655 = vmatpush.bf16.msra.mxu0 %v646
    %656 = vmatmul.bf16.gmra.mxu0 %v643
    %v657 = vpop.f32.mrf.mxu0
    %v658 = vadd.f32 0.0, %v657
    %v659 = vpop.f32.mrf.mxu0
    %660 = vdwg.mxu0
    %v661 = vpack.c.bf16 %v658, %v637
    %s662 = scalar_lea.vmem %s3, 12
    %v663 = vld [vmem:[%s662] sm:$0xf]
    %v665 = vsel %vm136, %v661, 0
    %v668 = vsel %vm211, %v663, 0
    %670 = vmatpush.bf16.msra.mxu0 0
    %671 = vmatpush.bf16.msra.mxu0 0
    %672 = vmatpush.bf16.msra.mxu0 0
    %673 = vmatpush.bf16.msra.mxu0 0
    %674 = vmatpush.bf16.msra.mxu0 0
    %675 = vmatpush.bf16.msra.mxu0 0
    %676 = vmatpush.bf16.msra.mxu0 0
    %677 = vmatpush.bf16.msra.mxu0 %v668
    %678 = vmatmul.bf16.gmra.mxu0 %v665
    %v679 = vpop.f32.mrf.mxu0
    %v680 = vadd.f32 0.0, %v679
    %v681 = vpop.f32.mrf.mxu0
    %v682 = vadd.f32 0.0, %v681
    %683 = vdwg.mxu0
    %v684 = vadd.f32 %v545, %v680
    %v685 = vadd.f32 %v546, %v682
    %v686 = vld [vmem:[%s4] sm:$0x1]
    %v688 = vperm.slane %v686, 0
    %v690 = vadd.f32 %v684, %v688
    %v691 = vadd.f32 %v685, %v688
    %v692 = vadd.f32 %v88, %v690
    %v693 = vadd.f32 %v89, %v691
    %v694 = vld [vmem:[%s5] sm:$0x1]
    %v695 = vld [vmem:[%s6] sm:$0x1]
    %v696 = vsel %vm111, %v692, 0.0
    %697 = vadd.xlane.f32.xlu0 %v696
    %v698 = vpop.xlane.xlu0 %697
    %v699 = vsel %vm111, %v693, 0.0
    %700 = vadd.xlane.f32.xlu0 %v699
    %v701 = vpop.xlane.xlu0 %700
    %v702 = vrcp.pop 32.0
    %v703 = vmul.f32 32.0, %v702
    %v704 = vsub.f32 1.0, %v703
    %v705 = vmul.f32 %v702, %v704
    %v706 = vadd.f32 %v702, %v705
    %vm707 = vweird.f32 %v702
    %v708 = vsel %vm707, %v702, %v706
    %v709 = vmul.f32 %v698, %v708
    %v710 = vmul.f32 %v701, %v708
    %v711 = vmul.f32 %v692, %v692
    %v712 = vmul.f32 %v693, %v693
    %v713 = vsel %vm111, %v711, 0.0
    %714 = vadd.xlane.f32.xlu0 %v713
    %v715 = vpop.xlane.xlu0 %714
    %v716 = vsel %vm111, %v712, 0.0
    %717 = vadd.xlane.f32.xlu0 %v716
    %v718 = vpop.xlane.xlu0 %717
    %v719 = vmul.f32 %v715, %v708
    %v720 = vmul.f32 %v718, %v708
    %v721 = vmul.f32 %v709, %v709
    %v722 = vmul.f32 %v710, %v710
    %v723 = vsub.f32 %v719, %v721
    %v724 = vsub.f32 %v720, %v722
    %v725 = vsub.f32 %v692, %v709
    %v726 = vsub.f32 %v693, %v710
    %v727 = vadd.f32 %v723, 1e-05
    %v728 = vadd.f32 %v724, 1e-05
    %v729 = vrsqrt.pop %v727
    %v730 = vmul.f32 %v729, %v727
    %v731 = vmul.f32 %v730, %v729
    %v732 = vmul.f32 0.5, %v731
    %v733 = vsub.f32 1.5, %v732
    %v734 = vmul.f32 %v729, %v733
    %vm735 = vweird.f32 %v727
    %vm736 = vweird.f32 %v729
    %vm737 = vmor %vm735, %vm736
    %v738 = vsel %vm737, %v729, %v734
    %v739 = vrsqrt.pop %v728
    %v740 = vmul.f32 %v739, %v728
    %v741 = vmul.f32 %v740, %v739
    %v742 = vmul.f32 0.5, %v741
    %v743 = vsub.f32 1.5, %v742
    %v744 = vmul.f32 %v739, %v743
    %vm745 = vweird.f32 %v728
    %vm746 = vweird.f32 %v739
    %vm747 = vmor %vm745, %vm746
    %v748 = vsel %vm747, %v739, %v744
    %v749 = vmul.f32 %v725, %v738
    %v750 = vmul.f32 %v726, %v748
    %v752 = vperm.slane %v694, 0
    %v754 = vmul.f32 %v749, %v752
    %v755 = vmul.f32 %v750, %v752
    %v757 = vperm.slane %v695, 0
    %v759 = vadd.f32 %v754, %v757
    %v760 = vadd.f32 %v755, %v757
    %v761 = vpack.c.bf16 %v760, %v759
    %v762 = vld [vmem:[%s7] sm:$0xff]
    %v763 = vld [vmem:[%s7 + $0x8] sm:$0xff]
    %v764 = vld [vmem:[%s7 + $0x10] sm:$0xff]
    %v765 = vld [vmem:[%s7 + $0x18] sm:$0xff]
    %v766 = vld [vmem:[%s7 + $0x20] sm:$0xff]
    %v767 = vld [vmem:[%s7 + $0x28] sm:$0xff]
    %v768 = vld [vmem:[%s7 + $0x30] sm:$0xff]
    %v769 = vld [vmem:[%s7 + $0x38] sm:$0xff]
    %v770 = vld [vmem:[%s7 + $0x40] sm:$0xff]
    %v771 = vld [vmem:[%s7 + $0x48] sm:$0xff]
    %v772 = vld [vmem:[%s7 + $0x50] sm:$0xff]
    %v773 = vld [vmem:[%s7 + $0x58] sm:$0xff]
    %v774 = vld [vmem:[%s7 + $0x60] sm:$0xff]
    %v775 = vld [vmem:[%s7 + $0x68] sm:$0xff]
    %v776 = vld [vmem:[%s7 + $0x70] sm:$0xff]
    %v777 = vld [vmem:[%s7 + $0x78] sm:$0xff]
    %v778 = vld [vmem:[%s7 + $0x80] sm:$0xff]
    %v779 = vld [vmem:[%s7 + $0x88] sm:$0xff]
    %v780 = vld [vmem:[%s7 + $0x90] sm:$0xff]
    %v781 = vld [vmem:[%s7 + $0x98] sm:$0xff]
    %v782 = vld [vmem:[%s7 + $0xa0] sm:$0xff]
    %v783 = vld [vmem:[%s7 + $0xa8] sm:$0xff]
    %v784 = vld [vmem:[%s7 + $0xb0] sm:$0xff]
    %v785 = vld [vmem:[%s7 + $0xb8] sm:$0xff]
    %v786 = vld [vmem:[%s7 + $0xc0] sm:$0xff]
    %v787 = vld [vmem:[%s7 + $0xc8] sm:$0xff]
    %v788 = vld [vmem:[%s7 + $0xd0] sm:$0xff]
    %v789 = vld [vmem:[%s7 + $0xd8] sm:$0xff]
    %v790 = vld [vmem:[%s7 + $0xe0] sm:$0xff]
    %v791 = vld [vmem:[%s7 + $0xe8] sm:$0xff]
    %v792 = vld [vmem:[%s7 + $0xf0] sm:$0xff]
    %v793 = vld [vmem:[%s7 + $0xf8] sm:$0xff]
    %v794 = vld [vmem:[%s8] sm:$0xff]
    %v795 = vld [vmem:[%s8 + $0x8] sm:$0xff]
    %v798 = vperm.slane %v794, 0
    %v799 = vperm.slane %v794, 1
    %v800 = vperm.slane %v794, 2
    %v801 = vperm.slane %v794, 3
    %v802 = vperm.slane %v794, 4
    %v803 = vperm.slane %v794, 5
    %v804 = vperm.slane %v794, 6
    %v805 = vperm.slane %v794, 7
    %v806 = vperm.slane %v795, 0
    %v807 = vperm.slane %v795, 1
    %v808 = vperm.slane %v795, 2
    %v809 = vperm.slane %v795, 3
    %v810 = vperm.slane %v795, 4
    %v811 = vperm.slane %v795, 5
    %v812 = vperm.slane %v795, 6
    %v813 = vperm.slane %v795, 7
    %v862 = vunpack.c.l.b16 %v762
    %v863 = vunpack.c.h.b16 %v762
    %v864 = vunpack.c.l.b16 %v763
    %v865 = vunpack.c.h.b16 %v763
    %v866 = vunpack.c.l.b16 %v764
    %v867 = vunpack.c.h.b16 %v764
    %v868 = vunpack.c.l.b16 %v765
    %v869 = vunpack.c.h.b16 %v765
    %v870 = vunpack.c.l.b16 %v766
    %v871 = vunpack.c.h.b16 %v766
    %v872 = vunpack.c.l.b16 %v767
    %v873 = vunpack.c.h.b16 %v767
    %v874 = vunpack.c.l.b16 %v768
    %v875 = vunpack.c.h.b16 %v768
    %v876 = vunpack.c.l.b16 %v769
    %v877 = vunpack.c.h.b16 %v769
    %v878 = vunpack.c.l.b16 %v770
    %v879 = vunpack.c.h.b16 %v770
    %v880 = vunpack.c.l.b16 %v771
    %v881 = vunpack.c.h.b16 %v771
    %v882 = vunpack.c.l.b16 %v772
    %v883 = vunpack.c.h.b16 %v772
    %v884 = vunpack.c.l.b16 %v773
    %v885 = vunpack.c.h.b16 %v773
    %v886 = vunpack.c.l.b16 %v774
    %v887 = vunpack.c.h.b16 %v774
    %v888 = vunpack.c.l.b16 %v775
    %v889 = vunpack.c.h.b16 %v775
    %v890 = vunpack.c.l.b16 %v776
    %v891 = vunpack.c.h.b16 %v776
    %v892 = vunpack.c.l.b16 %v777
    %v893 = vunpack.c.h.b16 %v777
    %v894 = vunpack.c.l.b16 %v778
    %v895 = vunpack.c.h.b16 %v778
    %v896 = vunpack.c.l.b16 %v779
    %v897 = vunpack.c.h.b16 %v779
    %v898 = vunpack.c.l.b16 %v780
    %v899 = vunpack.c.h.b16 %v780
    %v900 = vunpack.c.l.b16 %v781
    %v901 = vunpack.c.h.b16 %v781
    %v902 = vunpack.c.l.b16 %v782
    %v903 = vunpack.c.h.b16 %v782
    %v904 = vunpack.c.l.b16 %v783
    %v905 = vunpack.c.h.b16 %v783
    %v906 = vunpack.c.l.b16 %v784
    %v907 = vunpack.c.h.b16 %v784
    %v908 = vunpack.c.l.b16 %v785
    %v909 = vunpack.c.h.b16 %v785
    %v910 = vunpack.c.l.b16 %v786
    %v911 = vunpack.c.h.b16 %v786
    %v912 = vunpack.c.l.b16 %v787
    %v913 = vunpack.c.h.b16 %v787
    %v914 = vunpack.c.l.b16 %v788
    %v915 = vunpack.c.h.b16 %v788
    %v916 = vunpack.c.l.b16 %v789
    %v917 = vunpack.c.h.b16 %v789
    %v918 = vunpack.c.l.b16 %v790
    %v919 = vunpack.c.h.b16 %v790
    %v920 = vunpack.c.l.b16 %v791
    %v921 = vunpack.c.h.b16 %v791
    %v922 = vunpack.c.l.b16 %v792
    %v923 = vunpack.c.h.b16 %v792
    %v924 = vunpack.c.l.b16 %v793
    %v925 = vunpack.c.h.b16 %v793
    %v926 = vpack.c.b16 %v878, %v862
    %v927 = vpack.c.b16 %v879, %v863
    %v928 = vpack.c.b16 %v880, %v864
    %v929 = vpack.c.b16 %v881, %v865
    %v930 = vpack.c.b16 %v882, %v866
    %v931 = vpack.c.b16 %v883, %v867
    %v932 = vpack.c.b16 %v884, %v868
    %v933 = vpack.c.b16 %v885, %v869
    %v934 = vpack.c.b16 %v886, %v870
    %v935 = vpack.c.b16 %v887, %v871
    %v936 = vpack.c.b16 %v888, %v872
    %v937 = vpack.c.b16 %v889, %v873
    %v938 = vpack.c.b16 %v890, %v874
    %v939 = vpack.c.b16 %v891, %v875
    %v940 = vpack.c.b16 %v892, %v876
    %v941 = vpack.c.b16 %v893, %v877
    %v942 = vpack.c.b16 %v910, %v894
    %v943 = vpack.c.b16 %v911, %v895
    %v944 = vpack.c.b16 %v912, %v896
    %v945 = vpack.c.b16 %v913, %v897
    %v946 = vpack.c.b16 %v914, %v898
    %v947 = vpack.c.b16 %v915, %v899
    %v948 = vpack.c.b16 %v916, %v900
    %v949 = vpack.c.b16 %v917, %v901
    %v950 = vpack.c.b16 %v918, %v902
    %v951 = vpack.c.b16 %v919, %v903
    %v952 = vpack.c.b16 %v920, %v904
    %v953 = vpack.c.b16 %v921, %v905
    %v954 = vpack.c.b16 %v922, %v906
    %v955 = vpack.c.b16 %v923, %v907
    %v956 = vpack.c.b16 %v924, %v908
    %v957 = vpack.c.b16 %v925, %v909
    %v991 = vsel %vm111, %v761, 0
    %993 = vmatpush.bf16.msra.mxu0 0
    %994 = vmatpush.bf16.msra.mxu0 0
    %995 = vmatpush.bf16.msra.mxu0 0
    %996 = vmatpush.bf16.msra.mxu0 0
    %997 = vmatpush.bf16.msra.mxu0 0
    %998 = vmatpush.bf16.msra.mxu0 0
    %999 = vmatpush.bf16.msra.mxu0 %v942
    %1000 = vmatpush.bf16.msra.mxu0 %v926
    %1001 = vmatmul.bf16.gmra.mxu0 %v991
    %v1002 = vpop.f32.mrf.mxu0
    %v1003 = vadd.f32 %v798, %v1002
    %v1004 = vpop.f32.mrf.mxu0
    %v1005 = vadd.f32 %v798, %v1004
    %1006 = vdwg.mxu0
    %1007 = vmatpush.bf16.msra.mxu0 0
    %1008 = vmatpush.bf16.msra.mxu0 0
    %1009 = vmatpush.bf16.msra.mxu0 0
    %1010 = vmatpush.bf16.msra.mxu0 0
    %1011 = vmatpush.bf16.msra.mxu0 0
    %1012 = vmatpush.bf16.msra.mxu0 0
    %1013 = vmatpush.bf16.msra.mxu0 %v943
    %1014 = vmatpush.bf16.msra.mxu0 %v927
    %1015 = vmatmul.bf16.gmra.mxu0 %v991
    %v1016 = vpop.f32.mrf.mxu0
    %v1017 = vadd.f32 %v799, %v1016
    %v1018 = vpop.f32.mrf.mxu0
    %v1019 = vadd.f32 %v799, %v1018
    %1020 = vdwg.mxu0
    %1021 = vmatpush.bf16.msra.mxu0 0
    %1022 = vmatpush.bf16.msra.mxu0 0
    %1023 = vmatpush.bf16.msra.mxu0 0
    %1024 = vmatpush.bf16.msra.mxu0 0
    %1025 = vmatpush.bf16.msra.mxu0 0
    %1026 = vmatpush.bf16.msra.mxu0 0
    %1027 = vmatpush.bf16.msra.mxu0 %v944
    %1028 = vmatpush.bf16.msra.mxu0 %v928
    %1029 = vmatmul.bf16.gmra.mxu0 %v991
    %v1030 = vpop.f32.mrf.mxu0
    %v1031 = vadd.f32 %v800, %v1030
    %v1032 = vpop.f32.mrf.mxu0
    %v1033 = vadd.f32 %v800, %v1032
    %1034 = vdwg.mxu0
    %1035 = vmatpush.bf16.msra.mxu0 0
    %1036 = vmatpush.bf16.msra.mxu0 0
    %1037 = vmatpush.bf16.msra.mxu0 0
    %1038 = vmatpush.bf16.msra.mxu0 0
    %1039 = vmatpush.bf16.msra.mxu0 0
    %1040 = vmatpush.bf16.msra.mxu0 0
    %1041 = vmatpush.bf16.msra.mxu0 %v945
    %1042 = vmatpush.bf16.msra.mxu0 %v929
    %1043 = vmatmul.bf16.gmra.mxu0 %v991
    %v1044 = vpop.f32.mrf.mxu0
    %v1045 = vadd.f32 %v801, %v1044
    %v1046 = vpop.f32.mrf.mxu0
    %v1047 = vadd.f32 %v801, %v1046
    %1048 = vdwg.mxu0
    %1049 = vmatpush.bf16.msra.mxu0 0
    %1050 = vmatpush.bf16.msra.mxu0 0
    %1051 = vmatpush.bf16.msra.mxu0 0
    %1052 = vmatpush.bf16.msra.mxu0 0
    %1053 = vmatpush.bf16.msra.mxu0 0
    %1054 = vmatpush.bf16.msra.mxu0 0
    %1055 = vmatpush.bf16.msra.mxu0 %v946
    %1056 = vmatpush.bf16.msra.mxu0 %v930
    %1057 = vmatmul.bf16.gmra.mxu0 %v991
    %v1058 = vpop.f32.mrf.mxu0
    %v1059 = vadd.f32 %v802, %v1058
    %v1060 = vpop.f32.mrf.mxu0
    %v1061 = vadd.f32 %v802, %v1060
    %1062 = vdwg.mxu0
    %1063 = vmatpush.bf16.msra.mxu0 0
    %1064 = vmatpush.bf16.msra.mxu0 0
    %1065 = vmatpush.bf16.msra.mxu0 0
    %1066 = vmatpush.bf16.msra.mxu0 0
    %1067 = vmatpush.bf16.msra.mxu0 0
    %1068 = vmatpush.bf16.msra.mxu0 0
    %1069 = vmatpush.bf16.msra.mxu0 %v947
    %1070 = vmatpush.bf16.msra.mxu0 %v931
    %1071 = vmatmul.bf16.gmra.mxu0 %v991
    %v1072 = vpop.f32.mrf.mxu0
    %v1073 = vadd.f32 %v803, %v1072
    %v1074 = vpop.f32.mrf.mxu0
    %v1075 = vadd.f32 %v803, %v1074
    %1076 = vdwg.mxu0
    %1077 = vmatpush.bf16.msra.mxu0 0
    %1078 = vmatpush.bf16.msra.mxu0 0
    %1079 = vmatpush.bf16.msra.mxu0 0
    %1080 = vmatpush.bf16.msra.mxu0 0
    %1081 = vmatpush.bf16.msra.mxu0 0
    %1082 = vmatpush.bf16.msra.mxu0 0
    %1083 = vmatpush.bf16.msra.mxu0 %v948
    %1084 = vmatpush.bf16.msra.mxu0 %v932
    %1085 = vmatmul.bf16.gmra.mxu0 %v991
    %v1086 = vpop.f32.mrf.mxu0
    %v1087 = vadd.f32 %v804, %v1086
    %v1088 = vpop.f32.mrf.mxu0
    %v1089 = vadd.f32 %v804, %v1088
    %1090 = vdwg.mxu0
    %1091 = vmatpush.bf16.msra.mxu0 0
    %1092 = vmatpush.bf16.msra.mxu0 0
    %1093 = vmatpush.bf16.msra.mxu0 0
    %1094 = vmatpush.bf16.msra.mxu0 0
    %1095 = vmatpush.bf16.msra.mxu0 0
    %1096 = vmatpush.bf16.msra.mxu0 0
    %1097 = vmatpush.bf16.msra.mxu0 %v949
    %1098 = vmatpush.bf16.msra.mxu0 %v933
    %1099 = vmatmul.bf16.gmra.mxu0 %v991
    %v1100 = vpop.f32.mrf.mxu0
    %v1101 = vadd.f32 %v805, %v1100
    %v1102 = vpop.f32.mrf.mxu0
    %v1103 = vadd.f32 %v805, %v1102
    %1104 = vdwg.mxu0
    %1105 = vmatpush.bf16.msra.mxu0 0
    %1106 = vmatpush.bf16.msra.mxu0 0
    %1107 = vmatpush.bf16.msra.mxu0 0
    %1108 = vmatpush.bf16.msra.mxu0 0
    %1109 = vmatpush.bf16.msra.mxu0 0
    %1110 = vmatpush.bf16.msra.mxu0 0
    %1111 = vmatpush.bf16.msra.mxu0 %v950
    %1112 = vmatpush.bf16.msra.mxu0 %v934
    %1113 = vmatmul.bf16.gmra.mxu0 %v991
    %v1114 = vpop.f32.mrf.mxu0
    %v1115 = vadd.f32 %v806, %v1114
    %v1116 = vpop.f32.mrf.mxu0
    %v1117 = vadd.f32 %v806, %v1116
    %1118 = vdwg.mxu0
    %1119 = vmatpush.bf16.msra.mxu0 0
    %1120 = vmatpush.bf16.msra.mxu0 0
    %1121 = vmatpush.bf16.msra.mxu0 0
    %1122 = vmatpush.bf16.msra.mxu0 0
    %1123 = vmatpush.bf16.msra.mxu0 0
    %1124 = vmatpush.bf16.msra.mxu0 0
    %1125 = vmatpush.bf16.msra.mxu0 %v951
    %1126 = vmatpush.bf16.msra.mxu0 %v935
    %1127 = vmatmul.bf16.gmra.mxu0 %v991
    %v1128 = vpop.f32.mrf.mxu0
    %v1129 = vadd.f32 %v807, %v1128
    %v1130 = vpop.f32.mrf.mxu0
    %v1131 = vadd.f32 %v807, %v1130
    %1132 = vdwg.mxu0
    %1133 = vmatpush.bf16.msra.mxu0 0
    %1134 = vmatpush.bf16.msra.mxu0 0
    %1135 = vmatpush.bf16.msra.mxu0 0
    %1136 = vmatpush.bf16.msra.mxu0 0
    %1137 = vmatpush.bf16.msra.mxu0 0
    %1138 = vmatpush.bf16.msra.mxu0 0
    %1139 = vmatpush.bf16.msra.mxu0 %v952
    %1140 = vmatpush.bf16.msra.mxu0 %v936
    %1141 = vmatmul.bf16.gmra.mxu0 %v991
    %v1142 = vpop.f32.mrf.mxu0
    %v1143 = vadd.f32 %v808, %v1142
    %v1144 = vpop.f32.mrf.mxu0
    %v1145 = vadd.f32 %v808, %v1144
    %1146 = vdwg.mxu0
    %1147 = vmatpush.bf16.msra.mxu0 0
    %1148 = vmatpush.bf16.msra.mxu0 0
    %1149 = vmatpush.bf16.msra.mxu0 0
    %1150 = vmatpush.bf16.msra.mxu0 0
    %1151 = vmatpush.bf16.msra.mxu0 0
    %1152 = vmatpush.bf16.msra.mxu0 0
    %1153 = vmatpush.bf16.msra.mxu0 %v953
    %1154 = vmatpush.bf16.msra.mxu0 %v937
    %1155 = vmatmul.bf16.gmra.mxu0 %v991
    %v1156 = vpop.f32.mrf.mxu0
    %v1157 = vadd.f32 %v809, %v1156
    %v1158 = vpop.f32.mrf.mxu0
    %v1159 = vadd.f32 %v809, %v1158
    %1160 = vdwg.mxu0
    %1161 = vmatpush.bf16.msra.mxu0 0
    %1162 = vmatpush.bf16.msra.mxu0 0
    %1163 = vmatpush.bf16.msra.mxu0 0
    %1164 = vmatpush.bf16.msra.mxu0 0
    %1165 = vmatpush.bf16.msra.mxu0 0
    %1166 = vmatpush.bf16.msra.mxu0 0
    %1167 = vmatpush.bf16.msra.mxu0 %v954
    %1168 = vmatpush.bf16.msra.mxu0 %v938
    %1169 = vmatmul.bf16.gmra.mxu0 %v991
    %v1170 = vpop.f32.mrf.mxu0
    %v1171 = vadd.f32 %v810, %v1170
    %v1172 = vpop.f32.mrf.mxu0
    %v1173 = vadd.f32 %v810, %v1172
    %1174 = vdwg.mxu0
    %1175 = vmatpush.bf16.msra.mxu0 0
    %1176 = vmatpush.bf16.msra.mxu0 0
    %1177 = vmatpush.bf16.msra.mxu0 0
    %1178 = vmatpush.bf16.msra.mxu0 0
    %1179 = vmatpush.bf16.msra.mxu0 0
    %1180 = vmatpush.bf16.msra.mxu0 0
    %1181 = vmatpush.bf16.msra.mxu0 %v955
    %1182 = vmatpush.bf16.msra.mxu0 %v939
    %1183 = vmatmul.bf16.gmra.mxu0 %v991
    %v1184 = vpop.f32.mrf.mxu0
    %v1185 = vadd.f32 %v811, %v1184
    %v1186 = vpop.f32.mrf.mxu0
    %v1187 = vadd.f32 %v811, %v1186
    %1188 = vdwg.mxu0
    %1189 = vmatpush.bf16.msra.mxu0 0
    %1190 = vmatpush.bf16.msra.mxu0 0
    %1191 = vmatpush.bf16.msra.mxu0 0
    %1192 = vmatpush.bf16.msra.mxu0 0
    %1193 = vmatpush.bf16.msra.mxu0 0
    %1194 = vmatpush.bf16.msra.mxu0 0
    %1195 = vmatpush.bf16.msra.mxu0 %v956
    %1196 = vmatpush.bf16.msra.mxu0 %v940
    %1197 = vmatmul.bf16.gmra.mxu0 %v991
    %v1198 = vpop.f32.mrf.mxu0
    %v1199 = vadd.f32 %v812, %v1198
    %v1200 = vpop.f32.mrf.mxu0
    %v1201 = vadd.f32 %v812, %v1200
    %1202 = vdwg.mxu0
    %1203 = vmatpush.bf16.msra.mxu0 0
    %1204 = vmatpush.bf16.msra.mxu0 0
    %1205 = vmatpush.bf16.msra.mxu0 0
    %1206 = vmatpush.bf16.msra.mxu0 0
    %1207 = vmatpush.bf16.msra.mxu0 0
    %1208 = vmatpush.bf16.msra.mxu0 0
    %1209 = vmatpush.bf16.msra.mxu0 %v957
    %1210 = vmatpush.bf16.msra.mxu0 %v941
    %1211 = vmatmul.bf16.gmra.mxu0 %v991
    %v1212 = vpop.f32.mrf.mxu0
    %v1213 = vadd.f32 %v813, %v1212
    %v1214 = vpop.f32.mrf.mxu0
    %v1215 = vadd.f32 %v813, %v1214
    %1216 = vdwg.mxu0
    %v1217 = vmax.f32 %v1003, 0.0
    %v1218 = vmax.f32 %v1017, 0.0
    %v1219 = vmax.f32 %v1031, 0.0
    %v1220 = vmax.f32 %v1045, 0.0
    %v1221 = vmax.f32 %v1059, 0.0
    %v1222 = vmax.f32 %v1073, 0.0
    %v1223 = vmax.f32 %v1087, 0.0
    %v1224 = vmax.f32 %v1101, 0.0
    %v1225 = vmax.f32 %v1115, 0.0
    %v1226 = vmax.f32 %v1129, 0.0
    %v1227 = vmax.f32 %v1143, 0.0
    %v1228 = vmax.f32 %v1157, 0.0
    %v1229 = vmax.f32 %v1171, 0.0
    %v1230 = vmax.f32 %v1185, 0.0
    %v1231 = vmax.f32 %v1199, 0.0
    %v1232 = vmax.f32 %v1213, 0.0
    %v1233 = vmax.f32 %v1005, 0.0
    %v1234 = vmax.f32 %v1019, 0.0
    %v1235 = vmax.f32 %v1033, 0.0
    %v1236 = vmax.f32 %v1047, 0.0
    %v1237 = vmax.f32 %v1061, 0.0
    %v1238 = vmax.f32 %v1075, 0.0
    %v1239 = vmax.f32 %v1089, 0.0
    %v1240 = vmax.f32 %v1103, 0.0
    %v1241 = vmax.f32 %v1117, 0.0
    %v1242 = vmax.f32 %v1131, 0.0
    %v1243 = vmax.f32 %v1145, 0.0
    %v1244 = vmax.f32 %v1159, 0.0
    %v1245 = vmax.f32 %v1173, 0.0
    %v1246 = vmax.f32 %v1187, 0.0
    %v1247 = vmax.f32 %v1201, 0.0
    %v1248 = vmax.f32 %v1215, 0.0
    %v1249 = vpack.c.bf16 %v1233, %v1217
    %v1250 = vpack.c.bf16 %v1234, %v1218
    %v1251 = vpack.c.bf16 %v1235, %v1219
    %v1252 = vpack.c.bf16 %v1236, %v1220
    %v1253 = vpack.c.bf16 %v1237, %v1221
    %v1254 = vpack.c.bf16 %v1238, %v1222
    %v1255 = vpack.c.bf16 %v1239, %v1223
    %v1256 = vpack.c.bf16 %v1240, %v1224
    %v1257 = vpack.c.bf16 %v1241, %v1225
    %v1258 = vpack.c.bf16 %v1242, %v1226
    %v1259 = vpack.c.bf16 %v1243, %v1227
    %v1260 = vpack.c.bf16 %v1244, %v1228
    %v1261 = vpack.c.bf16 %v1245, %v1229
    %v1262 = vpack.c.bf16 %v1246, %v1230
    %v1263 = vpack.c.bf16 %v1247, %v1231
    %v1264 = vpack.c.bf16 %v1248, %v1232
    %v1265 = vld [vmem:[%s9] sm:$0xf]
    %v1266 = vld [vmem:[%s9 + $0x4] sm:$0xf]
    %v1267 = vld [vmem:[%s9 + $0x8] sm:$0xf]
    %v1268 = vld [vmem:[%s9 + $0xc] sm:$0xf]
    %v1269 = vld [vmem:[%s9 + $0x10] sm:$0xf]
    %v1270 = vld [vmem:[%s9 + $0x14] sm:$0xf]
    %v1271 = vld [vmem:[%s9 + $0x18] sm:$0xf]
    %v1272 = vld [vmem:[%s9 + $0x1c] sm:$0xf]
    %v1273 = vld [vmem:[%s9 + $0x20] sm:$0xf]
    %v1274 = vld [vmem:[%s9 + $0x24] sm:$0xf]
    %v1275 = vld [vmem:[%s9 + $0x28] sm:$0xf]
    %v1276 = vld [vmem:[%s9 + $0x2c] sm:$0xf]
    %v1277 = vld [vmem:[%s9 + $0x30] sm:$0xf]
    %v1278 = vld [vmem:[%s9 + $0x34] sm:$0xf]
    %v1279 = vld [vmem:[%s9 + $0x38] sm:$0xf]
    %v1280 = vld [vmem:[%s9 + $0x3c] sm:$0xf]
    %v1281 = vld [vmem:[%s9 + $0x40] sm:$0xf]
    %v1282 = vld [vmem:[%s9 + $0x44] sm:$0xf]
    %v1283 = vld [vmem:[%s9 + $0x48] sm:$0xf]
    %v1284 = vld [vmem:[%s9 + $0x4c] sm:$0xf]
    %v1285 = vld [vmem:[%s9 + $0x50] sm:$0xf]
    %v1286 = vld [vmem:[%s9 + $0x54] sm:$0xf]
    %v1287 = vld [vmem:[%s9 + $0x58] sm:$0xf]
    %v1288 = vld [vmem:[%s9 + $0x5c] sm:$0xf]
    %v1289 = vld [vmem:[%s9 + $0x60] sm:$0xf]
    %v1290 = vld [vmem:[%s9 + $0x64] sm:$0xf]
    %v1291 = vld [vmem:[%s9 + $0x68] sm:$0xf]
    %v1292 = vld [vmem:[%s9 + $0x6c] sm:$0xf]
    %v1293 = vld [vmem:[%s9 + $0x70] sm:$0xf]
    %v1294 = vld [vmem:[%s9 + $0x74] sm:$0xf]
    %v1295 = vld [vmem:[%s9 + $0x78] sm:$0xf]
    %v1296 = vld [vmem:[%s9 + $0x7c] sm:$0xf]
    %v1297 = vld [vmem:[%s9 + $0x80] sm:$0xf]
    %v1298 = vld [vmem:[%s9 + $0x84] sm:$0xf]
    %v1299 = vld [vmem:[%s9 + $0x88] sm:$0xf]
    %v1300 = vld [vmem:[%s9 + $0x8c] sm:$0xf]
    %v1301 = vld [vmem:[%s9 + $0x90] sm:$0xf]
    %v1302 = vld [vmem:[%s9 + $0x94] sm:$0xf]
    %v1303 = vld [vmem:[%s9 + $0x98] sm:$0xf]
    %v1304 = vld [vmem:[%s9 + $0x9c] sm:$0xf]
    %v1305 = vld [vmem:[%s9 + $0xa0] sm:$0xf]
    %v1306 = vld [vmem:[%s9 + $0xa4] sm:$0xf]
    %v1307 = vld [vmem:[%s9 + $0xa8] sm:$0xf]
    %v1308 = vld [vmem:[%s9 + $0xac] sm:$0xf]
    %v1309 = vld [vmem:[%s9 + $0xb0] sm:$0xf]
    %v1310 = vld [vmem:[%s9 + $0xb4] sm:$0xf]
    %v1311 = vld [vmem:[%s9 + $0xb8] sm:$0xf]
    %v1312 = vld [vmem:[%s9 + $0xbc] sm:$0xf]
    %v1313 = vld [vmem:[%s9 + $0xc0] sm:$0xf]
    %v1314 = vld [vmem:[%s9 + $0xc4] sm:$0xf]
    %v1315 = vld [vmem:[%s9 + $0xc8] sm:$0xf]
    %v1316 = vld [vmem:[%s9 + $0xcc] sm:$0xf]
    %v1317 = vld [vmem:[%s9 + $0xd0] sm:$0xf]
    %v1318 = vld [vmem:[%s9 + $0xd4] sm:$0xf]
    %v1319 = vld [vmem:[%s9 + $0xd8] sm:$0xf]
    %v1320 = vld [vmem:[%s9 + $0xdc] sm:$0xf]
    %v1321 = vld [vmem:[%s9 + $0xe0] sm:$0xf]
    %v1322 = vld [vmem:[%s9 + $0xe4] sm:$0xf]
    %v1323 = vld [vmem:[%s9 + $0xe8] sm:$0xf]
    %v1324 = vld [vmem:[%s9 + $0xec] sm:$0xf]
    %v1325 = vld [vmem:[%s9 + $0xf0] sm:$0xf]
    %v1326 = vld [vmem:[%s9 + $0xf4] sm:$0xf]
    %v1327 = vld [vmem:[%s9 + $0xf8] sm:$0xf]
    %v1328 = vld [vmem:[%s9 + $0xfc] sm:$0xf]
    %v1329 = vld [vmem:[%s9 + $0x100] sm:$0xf]
    %v1330 = vld [vmem:[%s9 + $0x104] sm:$0xf]
    %v1331 = vld [vmem:[%s9 + $0x108] sm:$0xf]
    %v1332 = vld [vmem:[%s9 + $0x10c] sm:$0xf]
    %v1333 = vld [vmem:[%s9 + $0x110] sm:$0xf]
    %v1334 = vld [vmem:[%s9 + $0x114] sm:$0xf]
    %v1335 = vld [vmem:[%s9 + $0x118] sm:$0xf]
    %v1336 = vld [vmem:[%s9 + $0x11c] sm:$0xf]
    %v1337 = vld [vmem:[%s9 + $0x120] sm:$0xf]
    %v1338 = vld [vmem:[%s9 + $0x124] sm:$0xf]
    %v1339 = vld [vmem:[%s9 + $0x128] sm:$0xf]
    %v1340 = vld [vmem:[%s9 + $0x12c] sm:$0xf]
    %v1341 = vld [vmem:[%s9 + $0x130] sm:$0xf]
    %v1342 = vld [vmem:[%s9 + $0x134] sm:$0xf]
    %v1343 = vld [vmem:[%s9 + $0x138] sm:$0xf]
    %v1344 = vld [vmem:[%s9 + $0x13c] sm:$0xf]
    %v1345 = vld [vmem:[%s9 + $0x140] sm:$0xf]
    %v1346 = vld [vmem:[%s9 + $0x144] sm:$0xf]
    %v1347 = vld [vmem:[%s9 + $0x148] sm:$0xf]
    %v1348 = vld [vmem:[%s9 + $0x14c] sm:$0xf]
    %v1349 = vld [vmem:[%s9 + $0x150] sm:$0xf]
    %v1350 = vld [vmem:[%s9 + $0x154] sm:$0xf]
    %v1351 = vld [vmem:[%s9 + $0x158] sm:$0xf]
    %v1352 = vld [vmem:[%s9 + $0x15c] sm:$0xf]
    %v1353 = vld [vmem:[%s9 + $0x160] sm:$0xf]
    %v1354 = vld [vmem:[%s9 + $0x164] sm:$0xf]
    %v1355 = vld [vmem:[%s9 + $0x168] sm:$0xf]
    %v1356 = vld [vmem:[%s9 + $0x16c] sm:$0xf]
    %v1357 = vld [vmem:[%s9 + $0x170] sm:$0xf]
    %v1358 = vld [vmem:[%s9 + $0x174] sm:$0xf]
    %v1359 = vld [vmem:[%s9 + $0x178] sm:$0xf]
    %v1360 = vld [vmem:[%s9 + $0x17c] sm:$0xf]
    %v1361 = vld [vmem:[%s9 + $0x180] sm:$0xf]
    %v1362 = vld [vmem:[%s9 + $0x184] sm:$0xf]
    %v1363 = vld [vmem:[%s9 + $0x188] sm:$0xf]
    %v1364 = vld [vmem:[%s9 + $0x18c] sm:$0xf]
    %v1365 = vld [vmem:[%s9 + $0x190] sm:$0xf]
    %v1366 = vld [vmem:[%s9 + $0x194] sm:$0xf]
    %v1367 = vld [vmem:[%s9 + $0x198] sm:$0xf]
    %v1368 = vld [vmem:[%s9 + $0x19c] sm:$0xf]
    %v1369 = vld [vmem:[%s9 + $0x1a0] sm:$0xf]
    %v1370 = vld [vmem:[%s9 + $0x1a4] sm:$0xf]
    %v1371 = vld [vmem:[%s9 + $0x1a8] sm:$0xf]
    %v1372 = vld [vmem:[%s9 + $0x1ac] sm:$0xf]
    %v1373 = vld [vmem:[%s9 + $0x1b0] sm:$0xf]
    %v1374 = vld [vmem:[%s9 + $0x1b4] sm:$0xf]
    %v1375 = vld [vmem:[%s9 + $0x1b8] sm:$0xf]
    %v1376 = vld [vmem:[%s9 + $0x1bc] sm:$0xf]
    %v1377 = vld [vmem:[%s9 + $0x1c0] sm:$0xf]
    %v1378 = vld [vmem:[%s9 + $0x1c4] sm:$0xf]
    %v1379 = vld [vmem:[%s9 + $0x1c8] sm:$0xf]
    %v1380 = vld [vmem:[%s9 + $0x1cc] sm:$0xf]
    %v1381 = vld [vmem:[%s9 + $0x1d0] sm:$0xf]
    %v1382 = vld [vmem:[%s9 + $0x1d4] sm:$0xf]
    %v1383 = vld [vmem:[%s9 + $0x1d8] sm:$0xf]
    %v1384 = vld [vmem:[%s9 + $0x1dc] sm:$0xf]
    %v1385 = vld [vmem:[%s9 + $0x1e0] sm:$0xf]
    %v1386 = vld [vmem:[%s9 + $0x1e4] sm:$0xf]
    %v1387 = vld [vmem:[%s9 + $0x1e8] sm:$0xf]
    %v1388 = vld [vmem:[%s9 + $0x1ec] sm:$0xf]
    %v1389 = vld [vmem:[%s9 + $0x1f0] sm:$0xf]
    %v1390 = vld [vmem:[%s9 + $0x1f4] sm:$0xf]
    %v1391 = vld [vmem:[%s9 + $0x1f8] sm:$0xf]
    %v1392 = vld [vmem:[%s9 + $0x1fc] sm:$0xf]
    %v1393 = vld [vmem:[%s9 + $0x200] sm:$0xf]
    %v1394 = vld [vmem:[%s9 + $0x204] sm:$0xf]
    %v1395 = vld [vmem:[%s9 + $0x208] sm:$0xf]
    %v1396 = vld [vmem:[%s9 + $0x20c] sm:$0xf]
    %v1397 = vld [vmem:[%s9 + $0x210] sm:$0xf]
    %v1398 = vld [vmem:[%s9 + $0x214] sm:$0xf]
    %v1399 = vld [vmem:[%s9 + $0x218] sm:$0xf]
    %v1400 = vld [vmem:[%s9 + $0x21c] sm:$0xf]
    %v1401 = vld [vmem:[%s9 + $0x220] sm:$0xf]
    %v1402 = vld [vmem:[%s9 + $0x224] sm:$0xf]
    %v1403 = vld [vmem:[%s9 + $0x228] sm:$0xf]
    %v1404 = vld [vmem:[%s9 + $0x22c] sm:$0xf]
    %v1405 = vld [vmem:[%s9 + $0x230] sm:$0xf]
    %v1406 = vld [vmem:[%s9 + $0x234] sm:$0xf]
    %v1407 = vld [vmem:[%s9 + $0x238] sm:$0xf]
    %v1408 = vld [vmem:[%s9 + $0x23c] sm:$0xf]
    %v1409 = vld [vmem:[%s9 + $0x240] sm:$0xf]
    %v1410 = vld [vmem:[%s9 + $0x244] sm:$0xf]
    %v1411 = vld [vmem:[%s9 + $0x248] sm:$0xf]
    %v1412 = vld [vmem:[%s9 + $0x24c] sm:$0xf]
    %v1413 = vld [vmem:[%s9 + $0x250] sm:$0xf]
    %v1414 = vld [vmem:[%s9 + $0x254] sm:$0xf]
    %v1415 = vld [vmem:[%s9 + $0x258] sm:$0xf]
    %v1416 = vld [vmem:[%s9 + $0x25c] sm:$0xf]
    %v1417 = vld [vmem:[%s9 + $0x260] sm:$0xf]
    %v1418 = vld [vmem:[%s9 + $0x264] sm:$0xf]
    %v1419 = vld [vmem:[%s9 + $0x268] sm:$0xf]
    %v1420 = vld [vmem:[%s9 + $0x26c] sm:$0xf]
    %v1421 = vld [vmem:[%s9 + $0x270] sm:$0xf]
    %v1422 = vld [vmem:[%s9 + $0x274] sm:$0xf]
    %v1423 = vld [vmem:[%s9 + $0x278] sm:$0xf]
    %v1424 = vld [vmem:[%s9 + $0x27c] sm:$0xf]
    %v1425 = vld [vmem:[%s9 + $0x280] sm:$0xf]
    %v1426 = vld [vmem:[%s9 + $0x284] sm:$0xf]
    %v1427 = vld [vmem:[%s9 + $0x288] sm:$0xf]
    %v1428 = vld [vmem:[%s9 + $0x28c] sm:$0xf]
    %v1429 = vld [vmem:[%s9 + $0x290] sm:$0xf]
    %v1430 = vld [vmem:[%s9 + $0x294] sm:$0xf]
    %v1431 = vld [vmem:[%s9 + $0x298] sm:$0xf]
    %v1432 = vld [vmem:[%s9 + $0x29c] sm:$0xf]
    %v1433 = vld [vmem:[%s9 + $0x2a0] sm:$0xf]
    %v1434 = vld [vmem:[%s9 + $0x2a4] sm:$0xf]
    %v1435 = vld [vmem:[%s9 + $0x2a8] sm:$0xf]
    %v1436 = vld [vmem:[%s9 + $0x2ac] sm:$0xf]
    %v1437 = vld [vmem:[%s9 + $0x2b0] sm:$0xf]
    %v1438 = vld [vmem:[%s9 + $0x2b4] sm:$0xf]
    %v1439 = vld [vmem:[%s9 + $0x2b8] sm:$0xf]
    %v1440 = vld [vmem:[%s9 + $0x2bc] sm:$0xf]
    %v1441 = vld [vmem:[%s9 + $0x2c0] sm:$0xf]
    %v1442 = vld [vmem:[%s9 + $0x2c4] sm:$0xf]
    %v1443 = vld [vmem:[%s9 + $0x2c8] sm:$0xf]
    %v1444 = vld [vmem:[%s9 + $0x2cc] sm:$0xf]
    %v1445 = vld [vmem:[%s9 + $0x2d0] sm:$0xf]
    %v1446 = vld [vmem:[%s9 + $0x2d4] sm:$0xf]
    %v1447 = vld [vmem:[%s9 + $0x2d8] sm:$0xf]
    %v1448 = vld [vmem:[%s9 + $0x2dc] sm:$0xf]
    %v1449 = vld [vmem:[%s9 + $0x2e0] sm:$0xf]
    %v1450 = vld [vmem:[%s9 + $0x2e4] sm:$0xf]
    %v1451 = vld [vmem:[%s9 + $0x2e8] sm:$0xf]
    %v1452 = vld [vmem:[%s9 + $0x2ec] sm:$0xf]
    %v1453 = vld [vmem:[%s9 + $0x2f0] sm:$0xf]
    %v1454 = vld [vmem:[%s9 + $0x2f4] sm:$0xf]
    %v1455 = vld [vmem:[%s9 + $0x2f8] sm:$0xf]
    %v1456 = vld [vmem:[%s9 + $0x2fc] sm:$0xf]
    %v1457 = vld [vmem:[%s9 + $0x300] sm:$0xf]
    %v1458 = vld [vmem:[%s9 + $0x304] sm:$0xf]
    %v1459 = vld [vmem:[%s9 + $0x308] sm:$0xf]
    %v1460 = vld [vmem:[%s9 + $0x30c] sm:$0xf]
    %v1461 = vld [vmem:[%s9 + $0x310] sm:$0xf]
    %v1462 = vld [vmem:[%s9 + $0x314] sm:$0xf]
    %v1463 = vld [vmem:[%s9 + $0x318] sm:$0xf]
    %v1464 = vld [vmem:[%s9 + $0x31c] sm:$0xf]
    %v1465 = vld [vmem:[%s9 + $0x320] sm:$0xf]
    %v1466 = vld [vmem:[%s9 + $0x324] sm:$0xf]
    %v1467 = vld [vmem:[%s9 + $0x328] sm:$0xf]
    %v1468 = vld [vmem:[%s9 + $0x32c] sm:$0xf]
    %v1469 = vld [vmem:[%s9 + $0x330] sm:$0xf]
    %v1470 = vld [vmem:[%s9 + $0x334] sm:$0xf]
    %v1471 = vld [vmem:[%s9 + $0x338] sm:$0xf]
    %v1472 = vld [vmem:[%s9 + $0x33c] sm:$0xf]
    %v1473 = vld [vmem:[%s9 + $0x340] sm:$0xf]
    %v1474 = vld [vmem:[%s9 + $0x344] sm:$0xf]
    %v1475 = vld [vmem:[%s9 + $0x348] sm:$0xf]
    %v1476 = vld [vmem:[%s9 + $0x34c] sm:$0xf]
    %v1477 = vld [vmem:[%s9 + $0x350] sm:$0xf]
    %v1478 = vld [vmem:[%s9 + $0x354] sm:$0xf]
    %v1479 = vld [vmem:[%s9 + $0x358] sm:$0xf]
    %v1480 = vld [vmem:[%s9 + $0x35c] sm:$0xf]
    %v1481 = vld [vmem:[%s9 + $0x360] sm:$0xf]
    %v1482 = vld [vmem:[%s9 + $0x364] sm:$0xf]
    %v1483 = vld [vmem:[%s9 + $0x368] sm:$0xf]
    %v1484 = vld [vmem:[%s9 + $0x36c] sm:$0xf]
    %v1485 = vld [vmem:[%s9 + $0x370] sm:$0xf]
    %v1486 = vld [vmem:[%s9 + $0x374] sm:$0xf]
    %v1487 = vld [vmem:[%s9 + $0x378] sm:$0xf]
    %v1488 = vld [vmem:[%s9 + $0x37c] sm:$0xf]
    %v1489 = vld [vmem:[%s9 + $0x380] sm:$0xf]
    %v1490 = vld [vmem:[%s9 + $0x384] sm:$0xf]
    %v1491 = vld [vmem:[%s9 + $0x388] sm:$0xf]
    %v1492 = vld [vmem:[%s9 + $0x38c] sm:$0xf]
    %v1493 = vld [vmem:[%s9 + $0x390] sm:$0xf]
    %v1494 = vld [vmem:[%s9 + $0x394] sm:$0xf]
    %v1495 = vld [vmem:[%s9 + $0x398] sm:$0xf]
    %v1496 = vld [vmem:[%s9 + $0x39c] sm:$0xf]
    %v1497 = vld [vmem:[%s9 + $0x3a0] sm:$0xf]
    %v1498 = vld [vmem:[%s9 + $0x3a4] sm:$0xf]
    %v1499 = vld [vmem:[%s9 + $0x3a8] sm:$0xf]
    %v1500 = vld [vmem:[%s9 + $0x3ac] sm:$0xf]
    %v1501 = vld [vmem:[%s9 + $0x3b0] sm:$0xf]
    %v1502 = vld [vmem:[%s9 + $0x3b4] sm:$0xf]
    %v1503 = vld [vmem:[%s9 + $0x3b8] sm:$0xf]
    %v1504 = vld [vmem:[%s9 + $0x3bc] sm:$0xf]
    %v1505 = vld [vmem:[%s9 + $0x3c0] sm:$0xf]
    %v1506 = vld [vmem:[%s9 + $0x3c4] sm:$0xf]
    %v1507 = vld [vmem:[%s9 + $0x3c8] sm:$0xf]
    %v1508 = vld [vmem:[%s9 + $0x3cc] sm:$0xf]
    %v1509 = vld [vmem:[%s9 + $0x3d0] sm:$0xf]
    %v1510 = vld [vmem:[%s9 + $0x3d4] sm:$0xf]
    %v1511 = vld [vmem:[%s9 + $0x3d8] sm:$0xf]
    %v1512 = vld [vmem:[%s9 + $0x3dc] sm:$0xf]
    %v1513 = vld [vmem:[%s9 + $0x3e0] sm:$0xf]
    %v1514 = vld [vmem:[%s9 + $0x3e4] sm:$0xf]
    %v1515 = vld [vmem:[%s9 + $0x3e8] sm:$0xf]
    %v1516 = vld [vmem:[%s9 + $0x3ec] sm:$0xf]
    %v1517 = vld [vmem:[%s9 + $0x3f0] sm:$0xf]
    %v1518 = vld [vmem:[%s9 + $0x3f4] sm:$0xf]
    %v1519 = vld [vmem:[%s9 + $0x3f8] sm:$0xf]
    %v1520 = vld [vmem:[%s9 + $0x3fc] sm:$0xf]
    %v1521 = vld [vmem:[%s10] sm:$0x1]
    %v1523 = vperm.slane %v1521, 0
    %v1781 = vunpack.c.l.b16 %v1265
    %v1782 = vunpack.c.l.b16 %v1266
    %v1783 = vunpack.c.l.b16 %v1267
    %v1784 = vunpack.c.l.b16 %v1268
    %v1785 = vunpack.c.l.b16 %v1269
    %v1786 = vunpack.c.l.b16 %v1270
    %v1787 = vunpack.c.l.b16 %v1271
    %v1788 = vunpack.c.l.b16 %v1272
    %v1789 = vunpack.c.l.b16 %v1273
    %v1790 = vunpack.c.l.b16 %v1274
    %v1791 = vunpack.c.l.b16 %v1275
    %v1792 = vunpack.c.l.b16 %v1276
    %v1793 = vunpack.c.l.b16 %v1277
    %v1794 = vunpack.c.l.b16 %v1278
    %v1795 = vunpack.c.l.b16 %v1279
    %v1796 = vunpack.c.l.b16 %v1280
    %v1797 = vunpack.c.l.b16 %v1281
    %v1798 = vunpack.c.l.b16 %v1282
    %v1799 = vunpack.c.l.b16 %v1283
    %v1800 = vunpack.c.l.b16 %v1284
    %v1801 = vunpack.c.l.b16 %v1285
    %v1802 = vunpack.c.l.b16 %v1286
    %v1803 = vunpack.c.l.b16 %v1287
    %v1804 = vunpack.c.l.b16 %v1288
    %v1805 = vunpack.c.l.b16 %v1289
    %v1806 = vunpack.c.l.b16 %v1290
    %v1807 = vunpack.c.l.b16 %v1291
    %v1808 = vunpack.c.l.b16 %v1292
    %v1809 = vunpack.c.l.b16 %v1293
    %v1810 = vunpack.c.l.b16 %v1294
    %v1811 = vunpack.c.l.b16 %v1295
    %v1812 = vunpack.c.l.b16 %v1296
    %v1813 = vunpack.c.l.b16 %v1297
    %v1814 = vunpack.c.l.b16 %v1298
    %v1815 = vunpack.c.l.b16 %v1299
    %v1816 = vunpack.c.l.b16 %v1300
    %v1817 = vunpack.c.l.b16 %v1301
    %v1818 = vunpack.c.l.b16 %v1302
    %v1819 = vunpack.c.l.b16 %v1303
    %v1820 = vunpack.c.l.b16 %v1304
    %v1821 = vunpack.c.l.b16 %v1305
    %v1822 = vunpack.c.l.b16 %v1306
    %v1823 = vunpack.c.l.b16 %v1307
    %v1824 = vunpack.c.l.b16 %v1308
    %v1825 = vunpack.c.l.b16 %v1309
    %v1826 = vunpack.c.l.b16 %v1310
    %v1827 = vunpack.c.l.b16 %v1311
    %v1828 = vunpack.c.l.b16 %v1312
    %v1829 = vunpack.c.l.b16 %v1313
    %v1830 = vunpack.c.l.b16 %v1314
    %v1831 = vunpack.c.l.b16 %v1315
    %v1832 = vunpack.c.l.b16 %v1316
    %v1833 = vunpack.c.l.b16 %v1317
    %v1834 = vunpack.c.l.b16 %v1318
    %v1835 = vunpack.c.l.b16 %v1319
    %v1836 = vunpack.c.l.b16 %v1320
    %v1837 = vunpack.c.l.b16 %v1321
    %v1838 = vunpack.c.l.b16 %v1322
    %v1839 = vunpack.c.l.b16 %v1323
    %v1840 = vunpack.c.l.b16 %v1324
    %v1841 = vunpack.c.l.b16 %v1325
    %v1842 = vunpack.c.l.b16 %v1326
    %v1843 = vunpack.c.l.b16 %v1327
    %v1844 = vunpack.c.l.b16 %v1328
    %v1845 = vunpack.c.l.b16 %v1329
    %v1846 = vunpack.c.l.b16 %v1330
    %v1847 = vunpack.c.l.b16 %v1331
    %v1848 = vunpack.c.l.b16 %v1332
    %v1849 = vunpack.c.l.b16 %v1333
    %v1850 = vunpack.c.l.b16 %v1334
    %v1851 = vunpack.c.l.b16 %v1335
    %v1852 = vunpack.c.l.b16 %v1336
    %v1853 = vunpack.c.l.b16 %v1337
    %v1854 = vunpack.c.l.b16 %v1338
    %v1855 = vunpack.c.l.b16 %v1339
    %v1856 = vunpack.c.l.b16 %v1340
    %v1857 = vunpack.c.l.b16 %v1341
    %v1858 = vunpack.c.l.b16 %v1342
    %v1859 = vunpack.c.l.b16 %v1343
    %v1860 = vunpack.c.l.b16 %v1344
    %v1861 = vunpack.c.l.b16 %v1345
    %v1862 = vunpack.c.l.b16 %v1346
    %v1863 = vunpack.c.l.b16 %v1347
    %v1864 = vunpack.c.l.b16 %v1348
    %v1865 = vunpack.c.l.b16 %v1349
    %v1866 = vunpack.c.l.b16 %v1350
    %v1867 = vunpack.c.l.b16 %v1351
    %v1868 = vunpack.c.l.b16 %v1352
    %v1869 = vunpack.c.l.b16 %v1353
    %v1870 = vunpack.c.l.b16 %v1354
    %v1871 = vunpack.c.l.b16 %v1355
    %v1872 = vunpack.c.l.b16 %v1356
    %v1873 = vunpack.c.l.b16 %v1357
    %v1874 = vunpack.c.l.b16 %v1358
    %v1875 = vunpack.c.l.b16 %v1359
    %v1876 = vunpack.c.l.b16 %v1360
    %v1877 = vunpack.c.l.b16 %v1361
    %v1878 = vunpack.c.l.b16 %v1362
    %v1879 = vunpack.c.l.b16 %v1363
    %v1880 = vunpack.c.l.b16 %v1364
    %v1881 = vunpack.c.l.b16 %v1365
    %v1882 = vunpack.c.l.b16 %v1366
    %v1883 = vunpack.c.l.b16 %v1367
    %v1884 = vunpack.c.l.b16 %v1368
    %v1885 = vunpack.c.l.b16 %v1369
    %v1886 = vunpack.c.l.b16 %v1370
    %v1887 = vunpack.c.l.b16 %v1371
    %v1888 = vunpack.c.l.b16 %v1372
    %v1889 = vunpack.c.l.b16 %v1373
    %v1890 = vunpack.c.l.b16 %v1374
    %v1891 = vunpack.c.l.b16 %v1375
    %v1892 = vunpack.c.l.b16 %v1376
    %v1893 = vunpack.c.l.b16 %v1377
    %v1894 = vunpack.c.l.b16 %v1378
    %v1895 = vunpack.c.l.b16 %v1379
    %v1896 = vunpack.c.l.b16 %v1380
    %v1897 = vunpack.c.l.b16 %v1381
    %v1898 = vunpack.c.l.b16 %v1382
    %v1899 = vunpack.c.l.b16 %v1383
    %v1900 = vunpack.c.l.b16 %v1384
    %v1901 = vunpack.c.l.b16 %v1385
    %v1902 = vunpack.c.l.b16 %v1386
    %v1903 = vunpack.c.l.b16 %v1387
    %v1904 = vunpack.c.l.b16 %v1388
    %v1905 = vunpack.c.l.b16 %v1389
    %v1906 = vunpack.c.l.b16 %v1390
    %v1907 = vunpack.c.l.b16 %v1391
    %v1908 = vunpack.c.l.b16 %v1392
    %v1909 = vunpack.c.l.b16 %v1393
    %v1910 = vunpack.c.l.b16 %v1394
    %v1911 = vunpack.c.l.b16 %v1395
    %v1912 = vunpack.c.l.b16 %v1396
    %v1913 = vunpack.c.l.b16 %v1397
    %v1914 = vunpack.c.l.b16 %v1398
    %v1915 = vunpack.c.l.b16 %v1399
    %v1916 = vunpack.c.l.b16 %v1400
    %v1917 = vunpack.c.l.b16 %v1401
    %v1918 = vunpack.c.l.b16 %v1402
    %v1919 = vunpack.c.l.b16 %v1403
    %v1920 = vunpack.c.l.b16 %v1404
    %v1921 = vunpack.c.l.b16 %v1405
    %v1922 = vunpack.c.l.b16 %v1406
    %v1923 = vunpack.c.l.b16 %v1407
    %v1924 = vunpack.c.l.b16 %v1408
    %v1925 = vunpack.c.l.b16 %v1409
    %v1926 = vunpack.c.l.b16 %v1410
    %v1927 = vunpack.c.l.b16 %v1411
    %v1928 = vunpack.c.l.b16 %v1412
    %v1929 = vunpack.c.l.b16 %v1413
    %v1930 = vunpack.c.l.b16 %v1414
    %v1931 = vunpack.c.l.b16 %v1415
    %v1932 = vunpack.c.l.b16 %v1416
    %v1933 = vunpack.c.l.b16 %v1417
    %v1934 = vunpack.c.l.b16 %v1418
    %v1935 = vunpack.c.l.b16 %v1419
    %v1936 = vunpack.c.l.b16 %v1420
    %v1937 = vunpack.c.l.b16 %v1421
    %v1938 = vunpack.c.l.b16 %v1422
    %v1939 = vunpack.c.l.b16 %v1423
    %v1940 = vunpack.c.l.b16 %v1424
    %v1941 = vunpack.c.l.b16 %v1425
    %v1942 = vunpack.c.l.b16 %v1426
    %v1943 = vunpack.c.l.b16 %v1427
    %v1944 = vunpack.c.l.b16 %v1428
    %v1945 = vunpack.c.l.b16 %v1429
    %v1946 = vunpack.c.l.b16 %v1430
    %v1947 = vunpack.c.l.b16 %v1431
    %v1948 = vunpack.c.l.b16 %v1432
    %v1949 = vunpack.c.l.b16 %v1433
    %v1950 = vunpack.c.l.b16 %v1434
    %v1951 = vunpack.c.l.b16 %v1435
    %v1952 = vunpack.c.l.b16 %v1436
    %v1953 = vunpack.c.l.b16 %v1437
    %v1954 = vunpack.c.l.b16 %v1438
    %v1955 = vunpack.c.l.b16 %v1439
    %v1956 = vunpack.c.l.b16 %v1440
    %v1957 = vunpack.c.l.b16 %v1441
    %v1958 = vunpack.c.l.b16 %v1442
    %v1959 = vunpack.c.l.b16 %v1443
    %v1960 = vunpack.c.l.b16 %v1444
    %v1961 = vunpack.c.l.b16 %v1445
    %v1962 = vunpack.c.l.b16 %v1446
    %v1963 = vunpack.c.l.b16 %v1447
    %v1964 = vunpack.c.l.b16 %v1448
    %v1965 = vunpack.c.l.b16 %v1449
    %v1966 = vunpack.c.l.b16 %v1450
    %v1967 = vunpack.c.l.b16 %v1451
    %v1968 = vunpack.c.l.b16 %v1452
    %v1969 = vunpack.c.l.b16 %v1453
    %v1970 = vunpack.c.l.b16 %v1454
    %v1971 = vunpack.c.l.b16 %v1455
    %v1972 = vunpack.c.l.b16 %v1456
    %v1973 = vunpack.c.l.b16 %v1457
    %v1974 = vunpack.c.l.b16 %v1458
    %v1975 = vunpack.c.l.b16 %v1459
    %v1976 = vunpack.c.l.b16 %v1460
    %v1977 = vunpack.c.l.b16 %v1461
    %v1978 = vunpack.c.l.b16 %v1462
    %v1979 = vunpack.c.l.b16 %v1463
    %v1980 = vunpack.c.l.b16 %v1464
    %v1981 = vunpack.c.l.b16 %v1465
    %v1982 = vunpack.c.l.b16 %v1466
    %v1983 = vunpack.c.l.b16 %v1467
    %v1984 = vunpack.c.l.b16 %v1468
    %v1985 = vunpack.c.l.b16 %v1469
    %v1986 = vunpack.c.l.b16 %v1470
    %v1987 = vunpack.c.l.b16 %v1471
    %v1988 = vunpack.c.l.b16 %v1472
    %v1989 = vunpack.c.l.b16 %v1473
    %v1990 = vunpack.c.l.b16 %v1474
    %v1991 = vunpack.c.l.b16 %v1475
    %v1992 = vunpack.c.l.b16 %v1476
    %v1993 = vunpack.c.l.b16 %v1477
    %v1994 = vunpack.c.l.b16 %v1478
    %v1995 = vunpack.c.l.b16 %v1479
    %v1996 = vunpack.c.l.b16 %v1480
    %v1997 = vunpack.c.l.b16 %v1481
    %v1998 = vunpack.c.l.b16 %v1482
    %v1999 = vunpack.c.l.b16 %v1483
    %v2000 = vunpack.c.l.b16 %v1484
    %v2001 = vunpack.c.l.b16 %v1485
    %v2002 = vunpack.c.l.b16 %v1486
    %v2003 = vunpack.c.l.b16 %v1487
    %v2004 = vunpack.c.l.b16 %v1488
    %v2005 = vunpack.c.l.b16 %v1489
    %v2006 = vunpack.c.l.b16 %v1490
    %v2007 = vunpack.c.l.b16 %v1491
    %v2008 = vunpack.c.l.b16 %v1492
    %v2009 = vunpack.c.l.b16 %v1493
    %v2010 = vunpack.c.l.b16 %v1494
    %v2011 = vunpack.c.l.b16 %v1495
    %v2012 = vunpack.c.l.b16 %v1496
    %v2013 = vunpack.c.l.b16 %v1497
    %v2014 = vunpack.c.l.b16 %v1498
    %v2015 = vunpack.c.l.b16 %v1499
    %v2016 = vunpack.c.l.b16 %v1500
    %v2017 = vunpack.c.l.b16 %v1501
    %v2018 = vunpack.c.l.b16 %v1502
    %v2019 = vunpack.c.l.b16 %v1503
    %v2020 = vunpack.c.l.b16 %v1504
    %v2021 = vunpack.c.l.b16 %v1505
    %v2022 = vunpack.c.l.b16 %v1506
    %v2023 = vunpack.c.l.b16 %v1507
    %v2024 = vunpack.c.l.b16 %v1508
    %v2025 = vunpack.c.l.b16 %v1509
    %v2026 = vunpack.c.l.b16 %v1510
    %v2027 = vunpack.c.l.b16 %v1511
    %v2028 = vunpack.c.l.b16 %v1512
    %v2029 = vunpack.c.l.b16 %v1513
    %v2030 = vunpack.c.l.b16 %v1514
    %v2031 = vunpack.c.l.b16 %v1515
    %v2032 = vunpack.c.l.b16 %v1516
    %v2033 = vunpack.c.l.b16 %v1517
    %v2034 = vunpack.c.l.b16 %v1518
    %v2035 = vunpack.c.l.b16 %v1519
    %v2036 = vunpack.c.l.b16 %v1520
    %v2037 = vpack.c.b16 %v1782, %v1781
    %v2038 = vpack.c.b16 %v1784, %v1783
    %v2039 = vpack.c.b16 %v1786, %v1785
    %v2040 = vpack.c.b16 %v1788, %v1787
    %v2041 = vpack.c.b16 %v1790, %v1789
    %v2042 = vpack.c.b16 %v1792, %v1791
    %v2043 = vpack.c.b16 %v1794, %v1793
    %v2044 = vpack.c.b16 %v1796, %v1795
    %v2045 = vpack.c.b16 %v1798, %v1797
    %v2046 = vpack.c.b16 %v1800, %v1799
    %v2047 = vpack.c.b16 %v1802, %v1801
    %v2048 = vpack.c.b16 %v1804, %v1803
    %v2049 = vpack.c.b16 %v1806, %v1805
    %v2050 = vpack.c.b16 %v1808, %v1807
    %v2051 = vpack.c.b16 %v1810, %v1809
    %v2052 = vpack.c.b16 %v1812, %v1811
    %v2053 = vpack.c.b16 %v1814, %v1813
    %v2054 = vpack.c.b16 %v1816, %v1815
    %v2055 = vpack.c.b16 %v1818, %v1817
    %v2056 = vpack.c.b16 %v1820, %v1819
    %v2057 = vpack.c.b16 %v1822, %v1821
    %v2058 = vpack.c.b16 %v1824, %v1823
    %v2059 = vpack.c.b16 %v1826, %v1825
    %v2060 = vpack.c.b16 %v1828, %v1827
    %v2061 = vpack.c.b16 %v1830, %v1829
    %v2062 = vpack.c.b16 %v1832, %v1831
    %v2063 = vpack.c.b16 %v1834, %v1833
    %v2064 = vpack.c.b16 %v1836, %v1835
    %v2065 = vpack.c.b16 %v1838, %v1837
    %v2066 = vpack.c.b16 %v1840, %v1839
    %v2067 = vpack.c.b16 %v1842, %v1841
    %v2068 = vpack.c.b16 %v1844, %v1843
    %v2069 = vpack.c.b16 %v1846, %v1845
    %v2070 = vpack.c.b16 %v1848, %v1847
    %v2071 = vpack.c.b16 %v1850, %v1849
    %v2072 = vpack.c.b16 %v1852, %v1851
    %v2073 = vpack.c.b16 %v1854, %v1853
    %v2074 = vpack.c.b16 %v1856, %v1855
    %v2075 = vpack.c.b16 %v1858, %v1857
    %v2076 = vpack.c.b16 %v1860, %v1859
    %v2077 = vpack.c.b16 %v1862, %v1861
    %v2078 = vpack.c.b16 %v1864, %v1863
    %v2079 = vpack.c.b16 %v1866, %v1865
    %v2080 = vpack.c.b16 %v1868, %v1867
    %v2081 = vpack.c.b16 %v1870, %v1869
    %v2082 = vpack.c.b16 %v1872, %v1871
    %v2083 = vpack.c.b16 %v1874, %v1873
    %v2084 = vpack.c.b16 %v1876, %v1875
    %v2085 = vpack.c.b16 %v1878, %v1877
    %v2086 = vpack.c.b16 %v1880, %v1879
    %v2087 = vpack.c.b16 %v1882, %v1881
    %v2088 = vpack.c.b16 %v1884, %v1883
    %v2089 = vpack.c.b16 %v1886, %v1885
    %v2090 = vpack.c.b16 %v1888, %v1887
    %v2091 = vpack.c.b16 %v1890, %v1889
    %v2092 = vpack.c.b16 %v1892, %v1891
    %v2093 = vpack.c.b16 %v1894, %v1893
    %v2094 = vpack.c.b16 %v1896, %v1895
    %v2095 = vpack.c.b16 %v1898, %v1897
    %v2096 = vpack.c.b16 %v1900, %v1899
    %v2097 = vpack.c.b16 %v1902, %v1901
    %v2098 = vpack.c.b16 %v1904, %v1903
    %v2099 = vpack.c.b16 %v1906, %v1905
    %v2100 = vpack.c.b16 %v1908, %v1907
    %v2101 = vpack.c.b16 %v1910, %v1909
    %v2102 = vpack.c.b16 %v1912, %v1911
    %v2103 = vpack.c.b16 %v1914, %v1913
    %v2104 = vpack.c.b16 %v1916, %v1915
    %v2105 = vpack.c.b16 %v1918, %v1917
    %v2106 = vpack.c.b16 %v1920, %v1919
    %v2107 = vpack.c.b16 %v1922, %v1921
    %v2108 = vpack.c.b16 %v1924, %v1923
    %v2109 = vpack.c.b16 %v1926, %v1925
    %v2110 = vpack.c.b16 %v1928, %v1927
    %v2111 = vpack.c.b16 %v1930, %v1929
    %v2112 = vpack.c.b16 %v1932, %v1931
    %v2113 = vpack.c.b16 %v1934, %v1933
    %v2114 = vpack.c.b16 %v1936, %v1935
    %v2115 = vpack.c.b16 %v1938, %v1937
    %v2116 = vpack.c.b16 %v1940, %v1939
    %v2117 = vpack.c.b16 %v1942, %v1941
    %v2118 = vpack.c.b16 %v1944, %v1943
    %v2119 = vpack.c.b16 %v1946, %v1945
    %v2120 = vpack.c.b16 %v1948, %v1947
    %v2121 = vpack.c.b16 %v1950, %v1949
    %v2122 = vpack.c.b16 %v1952, %v1951
    %v2123 = vpack.c.b16 %v1954, %v1953
    %v2124 = vpack.c.b16 %v1956, %v1955
    %v2125 = vpack.c.b16 %v1958, %v1957
    %v2126 = vpack.c.b16 %v1960, %v1959
    %v2127 = vpack.c.b16 %v1962, %v1961
    %v2128 = vpack.c.b16 %v1964, %v1963
    %v2129 = vpack.c.b16 %v1966, %v1965
    %v2130 = vpack.c.b16 %v1968, %v1967
    %v2131 = vpack.c.b16 %v1970, %v1969
    %v2132 = vpack.c.b16 %v1972, %v1971
    %v2133 = vpack.c.b16 %v1974, %v1973
    %v2134 = vpack.c.b16 %v1976, %v1975
    %v2135 = vpack.c.b16 %v1978, %v1977
    %v2136 = vpack.c.b16 %v1980, %v1979
    %v2137 = vpack.c.b16 %v1982, %v1981
    %v2138 = vpack.c.b16 %v1984, %v1983
    %v2139 = vpack.c.b16 %v1986, %v1985
    %v2140 = vpack.c.b16 %v1988, %v1987
    %v2141 = vpack.c.b16 %v1990, %v1989
    %v2142 = vpack.c.b16 %v1992, %v1991
    %v2143 = vpack.c.b16 %v1994, %v1993
    %v2144 = vpack.c.b16 %v1996, %v1995
    %v2145 = vpack.c.b16 %v1998, %v1997
    %v2146 = vpack.c.b16 %v2000, %v1999
    %v2147 = vpack.c.b16 %v2002, %v2001
    %v2148 = vpack.c.b16 %v2004, %v2003
    %v2149 = vpack.c.b16 %v2006, %v2005
    %v2150 = vpack.c.b16 %v2008, %v2007
    %v2151 = vpack.c.b16 %v2010, %v2009
    %v2152 = vpack.c.b16 %v2012, %v2011
    %v2153 = vpack.c.b16 %v2014, %v2013
    %v2154 = vpack.c.b16 %v2016, %v2015
    %v2155 = vpack.c.b16 %v2018, %v2017
    %v2156 = vpack.c.b16 %v2020, %v2019
    %v2157 = vpack.c.b16 %v2022, %v2021
    %v2158 = vpack.c.b16 %v2024, %v2023
    %v2159 = vpack.c.b16 %v2026, %v2025
    %v2160 = vpack.c.b16 %v2028, %v2027
    %v2161 = vpack.c.b16 %v2030, %v2029
    %v2162 = vpack.c.b16 %v2032, %v2031
    %v2163 = vpack.c.b16 %v2034, %v2033
    %v2164 = vpack.c.b16 %v2036, %v2035
    %2293 = vmatpush.bf16.msra.mxu0 %v2044
    %2294 = vmatpush.bf16.msra.mxu0 %v2043
    %2295 = vmatpush.bf16.msra.mxu0 %v2042
    %2296 = vmatpush.bf16.msra.mxu0 %v2041
    %2297 = vmatpush.bf16.msra.mxu0 %v2040
    %2298 = vmatpush.bf16.msra.mxu0 %v2039
    %2299 = vmatpush.bf16.msra.mxu0 %v2038
    %2300 = vmatpush.bf16.msra.mxu0 %v2037
    %2301 = vmatmul.bf16.gmra.mxu0 %v1249
    %v2302 = vpop.f32.mrf.mxu0
    %v2303 = vadd.f32 %v1523, %v2302
    %v2304 = vpop.f32.mrf.mxu0
    %v2305 = vadd.f32 %v1523, %v2304
    %2306 = vdwg.mxu0
    %2307 = vmatpush.bf16.msra.mxu0 %v2052
    %2308 = vmatpush.bf16.msra.mxu0 %v2051
    %2309 = vmatpush.bf16.msra.mxu0 %v2050
    %2310 = vmatpush.bf16.msra.mxu0 %v2049
    %2311 = vmatpush.bf16.msra.mxu0 %v2048
    %2312 = vmatpush.bf16.msra.mxu0 %v2047
    %2313 = vmatpush.bf16.msra.mxu0 %v2046
    %2314 = vmatpush.bf16.msra.mxu0 %v2045
    %2315 = vmatmul.bf16.gmra.mxu0 %v1250
    %v2316 = vpop.f32.mrf.mxu0
    %v2317 = vadd.f32 %v2303, %v2316
    %v2318 = vpop.f32.mrf.mxu0
    %v2319 = vadd.f32 %v2305, %v2318
    %2320 = vdwg.mxu0
    %2321 = vmatpush.bf16.msra.mxu0 %v2060
    %2322 = vmatpush.bf16.msra.mxu0 %v2059
    %2323 = vmatpush.bf16.msra.mxu0 %v2058
    %2324 = vmatpush.bf16.msra.mxu0 %v2057
    %2325 = vmatpush.bf16.msra.mxu0 %v2056
    %2326 = vmatpush.bf16.msra.mxu0 %v2055
    %2327 = vmatpush.bf16.msra.mxu0 %v2054
    %2328 = vmatpush.bf16.msra.mxu0 %v2053
    %2329 = vmatmul.bf16.gmra.mxu0 %v1251
    %v2330 = vpop.f32.mrf.mxu0
    %v2331 = vadd.f32 %v2317, %v2330
    %v2332 = vpop.f32.mrf.mxu0
    %v2333 = vadd.f32 %v2319, %v2332
    %2334 = vdwg.mxu0
    %2335 = vmatpush.bf16.msra.mxu0 %v2068
    %2336 = vmatpush.bf16.msra.mxu0 %v2067
    %2337 = vmatpush.bf16.msra.mxu0 %v2066
    %2338 = vmatpush.bf16.msra.mxu0 %v2065
    %2339 = vmatpush.bf16.msra.mxu0 %v2064
    %2340 = vmatpush.bf16.msra.mxu0 %v2063
    %2341 = vmatpush.bf16.msra.mxu0 %v2062
    %2342 = vmatpush.bf16.msra.mxu0 %v2061
    %2343 = vmatmul.bf16.gmra.mxu0 %v1252
    %v2344 = vpop.f32.mrf.mxu0
    %v2345 = vadd.f32 %v2331, %v2344
    %v2346 = vpop.f32.mrf.mxu0
    %v2347 = vadd.f32 %v2333, %v2346
    %2348 = vdwg.mxu0
    %2349 = vmatpush.bf16.msra.mxu0 %v2076
    %2350 = vmatpush.bf16.msra.mxu0 %v2075
    %2351 = vmatpush.bf16.msra.mxu0 %v2074
    %2352 = vmatpush.bf16.msra.mxu0 %v2073
    %2353 = vmatpush.bf16.msra.mxu0 %v2072
    %2354 = vmatpush.bf16.msra.mxu0 %v2071
    %2355 = vmatpush.bf16.msra.mxu0 %v2070
    %2356 = vmatpush.bf16.msra.mxu0 %v2069
    %2357 = vmatmul.bf16.gmra.mxu0 %v1253
    %v2358 = vpop.f32.mrf.mxu0
    %v2359 = vadd.f32 %v2345, %v2358
    %v2360 = vpop.f32.mrf.mxu0
    %v2361 = vadd.f32 %v2347, %v2360
    %2362 = vdwg.mxu0
    %2363 = vmatpush.bf16.msra.mxu0 %v2084
    %2364 = vmatpush.bf16.msra.mxu0 %v2083
    %2365 = vmatpush.bf16.msra.mxu0 %v2082
    %2366 = vmatpush.bf16.msra.mxu0 %v2081
    %2367 = vmatpush.bf16.msra.mxu0 %v2080
    %2368 = vmatpush.bf16.msra.mxu0 %v2079
    %2369 = vmatpush.bf16.msra.mxu0 %v2078
    %2370 = vmatpush.bf16.msra.mxu0 %v2077
    %2371 = vmatmul.bf16.gmra.mxu0 %v1254
    %v2372 = vpop.f32.mrf.mxu0
    %v2373 = vadd.f32 %v2359, %v2372
    %v2374 = vpop.f32.mrf.mxu0
    %v2375 = vadd.f32 %v2361, %v2374
    %2376 = vdwg.mxu0
    %2377 = vmatpush.bf16.msra.mxu0 %v2092
    %2378 = vmatpush.bf16.msra.mxu0 %v2091
    %2379 = vmatpush.bf16.msra.mxu0 %v2090
    %2380 = vmatpush.bf16.msra.mxu0 %v2089
    %2381 = vmatpush.bf16.msra.mxu0 %v2088
    %2382 = vmatpush.bf16.msra.mxu0 %v2087
    %2383 = vmatpush.bf16.msra.mxu0 %v2086
    %2384 = vmatpush.bf16.msra.mxu0 %v2085
    %2385 = vmatmul.bf16.gmra.mxu0 %v1255
    %v2386 = vpop.f32.mrf.mxu0
    %v2387 = vadd.f32 %v2373, %v2386
    %v2388 = vpop.f32.mrf.mxu0
    %v2389 = vadd.f32 %v2375, %v2388
    %2390 = vdwg.mxu0
    %2391 = vmatpush.bf16.msra.mxu0 %v2100
    %2392 = vmatpush.bf16.msra.mxu0 %v2099
    %2393 = vmatpush.bf16.msra.mxu0 %v2098
    %2394 = vmatpush.bf16.msra.mxu0 %v2097
    %2395 = vmatpush.bf16.msra.mxu0 %v2096
    %2396 = vmatpush.bf16.msra.mxu0 %v2095
    %2397 = vmatpush.bf16.msra.mxu0 %v2094
    %2398 = vmatpush.bf16.msra.mxu0 %v2093
    %2399 = vmatmul.bf16.gmra.mxu0 %v1256
    %v2400 = vpop.f32.mrf.mxu0
    %v2401 = vadd.f32 %v2387, %v2400
    %v2402 = vpop.f32.mrf.mxu0
    %v2403 = vadd.f32 %v2389, %v2402
    %2404 = vdwg.mxu0
    %2405 = vmatpush.bf16.msra.mxu0 %v2108
    %2406 = vmatpush.bf16.msra.mxu0 %v2107
    %2407 = vmatpush.bf16.msra.mxu0 %v2106
    %2408 = vmatpush.bf16.msra.mxu0 %v2105
    %2409 = vmatpush.bf16.msra.mxu0 %v2104
    %2410 = vmatpush.bf16.msra.mxu0 %v2103
    %2411 = vmatpush.bf16.msra.mxu0 %v2102
    %2412 = vmatpush.bf16.msra.mxu0 %v2101
    %2413 = vmatmul.bf16.gmra.mxu0 %v1257
    %v2414 = vpop.f32.mrf.mxu0
    %v2415 = vadd.f32 %v2401, %v2414
    %v2416 = vpop.f32.mrf.mxu0
    %v2417 = vadd.f32 %v2403, %v2416
    %2418 = vdwg.mxu0
    %2419 = vmatpush.bf16.msra.mxu0 %v2116
    %2420 = vmatpush.bf16.msra.mxu0 %v2115
    %2421 = vmatpush.bf16.msra.mxu0 %v2114
    %2422 = vmatpush.bf16.msra.mxu0 %v2113
    %2423 = vmatpush.bf16.msra.mxu0 %v2112
    %2424 = vmatpush.bf16.msra.mxu0 %v2111
    %2425 = vmatpush.bf16.msra.mxu0 %v2110
    %2426 = vmatpush.bf16.msra.mxu0 %v2109
    %2427 = vmatmul.bf16.gmra.mxu0 %v1258
    %v2428 = vpop.f32.mrf.mxu0
    %v2429 = vadd.f32 %v2415, %v2428
    %v2430 = vpop.f32.mrf.mxu0
    %v2431 = vadd.f32 %v2417, %v2430
    %2432 = vdwg.mxu0
    %2433 = vmatpush.bf16.msra.mxu0 %v2124
    %2434 = vmatpush.bf16.msra.mxu0 %v2123
    %2435 = vmatpush.bf16.msra.mxu0 %v2122
    %2436 = vmatpush.bf16.msra.mxu0 %v2121
    %2437 = vmatpush.bf16.msra.mxu0 %v2120
    %2438 = vmatpush.bf16.msra.mxu0 %v2119
    %2439 = vmatpush.bf16.msra.mxu0 %v2118
    %2440 = vmatpush.bf16.msra.mxu0 %v2117
    %2441 = vmatmul.bf16.gmra.mxu0 %v1259
    %v2442 = vpop.f32.mrf.mxu0
    %v2443 = vadd.f32 %v2429, %v2442
    %v2444 = vpop.f32.mrf.mxu0
    %v2445 = vadd.f32 %v2431, %v2444
    %2446 = vdwg.mxu0
    %2447 = vmatpush.bf16.msra.mxu0 %v2132
    %2448 = vmatpush.bf16.msra.mxu0 %v2131
    %2449 = vmatpush.bf16.msra.mxu0 %v2130
    %2450 = vmatpush.bf16.msra.mxu0 %v2129
    %2451 = vmatpush.bf16.msra.mxu0 %v2128
    %2452 = vmatpush.bf16.msra.mxu0 %v2127
    %2453 = vmatpush.bf16.msra.mxu0 %v2126
    %2454 = vmatpush.bf16.msra.mxu0 %v2125
    %2455 = vmatmul.bf16.gmra.mxu0 %v1260
    %v2456 = vpop.f32.mrf.mxu0
    %v2457 = vadd.f32 %v2443, %v2456
    %v2458 = vpop.f32.mrf.mxu0
    %v2459 = vadd.f32 %v2445, %v2458
    %2460 = vdwg.mxu0
    %2461 = vmatpush.bf16.msra.mxu0 %v2140
    %2462 = vmatpush.bf16.msra.mxu0 %v2139
    %2463 = vmatpush.bf16.msra.mxu0 %v2138
    %2464 = vmatpush.bf16.msra.mxu0 %v2137
    %2465 = vmatpush.bf16.msra.mxu0 %v2136
    %2466 = vmatpush.bf16.msra.mxu0 %v2135
    %2467 = vmatpush.bf16.msra.mxu0 %v2134
    %2468 = vmatpush.bf16.msra.mxu0 %v2133
    %2469 = vmatmul.bf16.gmra.mxu0 %v1261
    %v2470 = vpop.f32.mrf.mxu0
    %v2471 = vadd.f32 %v2457, %v2470
    %v2472 = vpop.f32.mrf.mxu0
    %v2473 = vadd.f32 %v2459, %v2472
    %2474 = vdwg.mxu0
    %2475 = vmatpush.bf16.msra.mxu0 %v2148
    %2476 = vmatpush.bf16.msra.mxu0 %v2147
    %2477 = vmatpush.bf16.msra.mxu0 %v2146
    %2478 = vmatpush.bf16.msra.mxu0 %v2145
    %2479 = vmatpush.bf16.msra.mxu0 %v2144
    %2480 = vmatpush.bf16.msra.mxu0 %v2143
    %2481 = vmatpush.bf16.msra.mxu0 %v2142
    %2482 = vmatpush.bf16.msra.mxu0 %v2141
    %2483 = vmatmul.bf16.gmra.mxu0 %v1262
    %v2484 = vpop.f32.mrf.mxu0
    %v2485 = vadd.f32 %v2471, %v2484
    %v2486 = vpop.f32.mrf.mxu0
    %v2487 = vadd.f32 %v2473, %v2486
    %2488 = vdwg.mxu0
    %2489 = vmatpush.bf16.msra.mxu0 %v2156
    %2490 = vmatpush.bf16.msra.mxu0 %v2155
    %2491 = vmatpush.bf16.msra.mxu0 %v2154
    %2492 = vmatpush.bf16.msra.mxu0 %v2153
    %2493 = vmatpush.bf16.msra.mxu0 %v2152
    %2494 = vmatpush.bf16.msra.mxu0 %v2151
    %2495 = vmatpush.bf16.msra.mxu0 %v2150
    %2496 = vmatpush.bf16.msra.mxu0 %v2149
    %2497 = vmatmul.bf16.gmra.mxu0 %v1263
    %v2498 = vpop.f32.mrf.mxu0
    %v2499 = vadd.f32 %v2485, %v2498
    %v2500 = vpop.f32.mrf.mxu0
    %v2501 = vadd.f32 %v2487, %v2500
    %2502 = vdwg.mxu0
    %2503 = vmatpush.bf16.msra.mxu0 %v2164
    %2504 = vmatpush.bf16.msra.mxu0 %v2163
    %2505 = vmatpush.bf16.msra.mxu0 %v2162
    %2506 = vmatpush.bf16.msra.mxu0 %v2161
    %2507 = vmatpush.bf16.msra.mxu0 %v2160
    %2508 = vmatpush.bf16.msra.mxu0 %v2159
    %2509 = vmatpush.bf16.msra.mxu0 %v2158
    %2510 = vmatpush.bf16.msra.mxu0 %v2157
    %2511 = vmatmul.bf16.gmra.mxu0 %v1264
    %v2512 = vpop.f32.mrf.mxu0
    %v2513 = vadd.f32 %v2499, %v2512
    %v2514 = vpop.f32.mrf.mxu0
    %v2515 = vadd.f32 %v2501, %v2514
    %2516 = vdwg.mxu0
    %v2517 = vadd.f32 %v759, %v2513
    %v2518 = vadd.f32 %v760, %v2515
    %v2519 = vld [vmem:[%s11] sm:$0x1]
    %v2520 = vld [vmem:[%s12] sm:$0x1]
    %v2521 = vsel %vm111, %v2517, 0.0
    %2522 = vadd.xlane.f32.xlu0 %v2521
    %v2523 = vpop.xlane.xlu0 %2522
    %v2524 = vsel %vm111, %v2518, 0.0
    %2525 = vadd.xlane.f32.xlu0 %v2524
    %v2526 = vpop.xlane.xlu0 %2525
    %v2527 = vmul.f32 %v2523, %v708
    %v2528 = vmul.f32 %v2526, %v708
    %v2529 = vmul.f32 %v2517, %v2517
    %v2530 = vmul.f32 %v2518, %v2518
    %v2531 = vsel %vm111, %v2529, 0.0
    %2532 = vadd.xlane.f32.xlu0 %v2531
    %v2533 = vpop.xlane.xlu0 %2532
    %v2534 = vsel %vm111, %v2530, 0.0
    %2535 = vadd.xlane.f32.xlu0 %v2534
    %v2536 = vpop.xlane.xlu0 %2535
    %v2537 = vmul.f32 %v2533, %v708
    %v2538 = vmul.f32 %v2536, %v708
    %v2539 = vmul.f32 %v2527, %v2527
    %v2540 = vmul.f32 %v2528, %v2528
    %v2541 = vsub.f32 %v2537, %v2539
    %v2542 = vsub.f32 %v2538, %v2540
    %v2543 = vsub.f32 %v2517, %v2527
    %v2544 = vsub.f32 %v2518, %v2528
    %v2545 = vadd.f32 %v2541, 1e-05
    %v2546 = vadd.f32 %v2542, 1e-05
    %v2547 = vrsqrt.pop %v2545
    %v2548 = vmul.f32 %v2547, %v2545
    %v2549 = vmul.f32 %v2548, %v2547
    %v2550 = vmul.f32 0.5, %v2549
    %v2551 = vsub.f32 1.5, %v2550
    %v2552 = vmul.f32 %v2547, %v2551
    %vm2553 = vweird.f32 %v2545
    %vm2554 = vweird.f32 %v2547
    %vm2555 = vmor %vm2553, %vm2554
    %v2556 = vsel %vm2555, %v2547, %v2552
    %v2557 = vrsqrt.pop %v2546
    %v2558 = vmul.f32 %v2557, %v2546
    %v2559 = vmul.f32 %v2558, %v2557
    %v2560 = vmul.f32 0.5, %v2559
    %v2561 = vsub.f32 1.5, %v2560
    %v2562 = vmul.f32 %v2557, %v2561
    %vm2563 = vweird.f32 %v2546
    %vm2564 = vweird.f32 %v2557
    %vm2565 = vmor %vm2563, %vm2564
    %v2566 = vsel %vm2565, %v2557, %v2562
    %v2567 = vmul.f32 %v2543, %v2556
    %v2568 = vmul.f32 %v2544, %v2566
    %v2570 = vperm.slane %v2519, 0
    %v2572 = vmul.f32 %v2567, %v2570
    %v2573 = vmul.f32 %v2568, %v2570
    %v2575 = vperm.slane %v2520, 0
    %v2577 = vadd.f32 %v2572, %v2575
    %v2578 = vadd.f32 %v2573, %v2575
    %v2579 = vpack.c.bf16 %v2578, %v2577
    %v2580 = vld [vmem:[%s13] sm:$0xf]
    %v2581 = vld [vmem:[%s13 + $0x4] sm:$0xf]
    %v2582 = vld [vmem:[%s13 + $0x8] sm:$0xf]
    %v2583 = vld [vmem:[%s13 + $0xc] sm:$0xf]
    %v2584 = vld [vmem:[%s14] sm:$0x1]
    %v2586 = vperm.slane %v2584, 0
    %v2592 = vunpack.c.l.b16 %v2580
    %v2593 = vunpack.c.l.b16 %v2581
    %v2594 = vunpack.c.l.b16 %v2582
    %v2595 = vunpack.c.l.b16 %v2583
    %v2596 = vpack.c.b16 %v2593, %v2592
    %v2597 = vpack.c.b16 %v2595, %v2594
    %v2601 = vsel %vm111, %v2579, 0
    %2603 = vmatpush.bf16.msra.mxu0 0
    %2604 = vmatpush.bf16.msra.mxu0 0
    %2605 = vmatpush.bf16.msra.mxu0 0
    %2606 = vmatpush.bf16.msra.mxu0 0
    %2607 = vmatpush.bf16.msra.mxu0 0
    %2608 = vmatpush.bf16.msra.mxu0 0
    %2609 = vmatpush.bf16.msra.mxu0 %v2597
    %2610 = vmatpush.bf16.msra.mxu0 %v2596
    %2611 = vmatmul.bf16.gmra.mxu0 %v2601
    %v2612 = vpop.f32.mrf.mxu0
    %v2613 = vadd.f32 %v2586, %v2612
    %v2614 = vpop.f32.mrf.mxu0
    %v2615 = vadd.f32 %v2586, %v2614
    %2616 = vdwg.mxu0
    %v2617 = vpack.c.bf16 %v2613, %v2613
    %v2618 = vpack.c.bf16 %v2615, %v2615
    %v2620 = vunpack.c.l.b16 %v2617
    %v2621 = vpack.c.b16 %v2620, %v2620
    %2622 = vrot.lane.b32.xlu0 %v2621, 96
    %v2623 = vpop.permute.xlu0 %2622
    %v2625 = vsel %vm136, %v2617, 0
    %v2628 = vsel %vm136, %v2623, 0
    %2630 = vmatpush.bf16.xpose.msra.mxu0 0
    %2631 = vmatpush.bf16.xpose.msra.mxu0 0
    %2632 = vmatpush.bf16.xpose.msra.mxu0 0
    %2633 = vmatpush.bf16.xpose.msra.mxu0 0
    %2634 = vmatpush.bf16.xpose.msra.mxu0 0
    %2635 = vmatpush.bf16.xpose.msra.mxu0 0
    %2636 = vmatpush.bf16.xpose.msra.mxu0 0
    %2637 = vmatpush.bf16.xpose.msra.mxu0 %v2628
    %2638 = vmatmul.bf16.gmra.mxu0 %v2625
    %v2639 = vpop.f32.mrf.mxu0
    %v2640 = vadd.f32 0.0, %v2639
    %v2641 = vpop.f32.mrf.mxu0
    %2642 = vdwg.mxu0
    %v2644 = vunpack.c.l.b16 %v2618
    %v2645 = vpack.c.b16 %v2644, %v2644
    %2646 = vrot.lane.b32.xlu0 %v2645, 96
    %v2647 = vpop.permute.xlu0 %2646
    %v2649 = vsel %vm136, %v2618, 0
    %v2652 = vsel %vm136, %v2647, 0
    %2654 = vmatpush.bf16.xpose.msra.mxu0 0
    %2655 = vmatpush.bf16.xpose.msra.mxu0 0
    %2656 = vmatpush.bf16.xpose.msra.mxu0 0
    %2657 = vmatpush.bf16.xpose.msra.mxu0 0
    %2658 = vmatpush.bf16.xpose.msra.mxu0 0
    %2659 = vmatpush.bf16.xpose.msra.mxu0 0
    %2660 = vmatpush.bf16.xpose.msra.mxu0 0
    %2661 = vmatpush.bf16.xpose.msra.mxu0 %v2652
    %2662 = vmatmul.bf16.gmra.mxu0 %v2649
    %v2663 = vpop.f32.mrf.mxu0
    %v2664 = vadd.f32 0.0, %v2663
    %v2665 = vpop.f32.mrf.mxu0
    %2666 = vdwg.mxu0
    %v2667 = vmul.f32 %v2640, 0.35355338
    %v2668 = vmul.f32 %v2664, 0.35355338
    %v2669 = vsel %vm136, %v2667, -inf
    %2670 = vmax.xlane.f32.xlu0 %v2669
    %v2671 = vpop.xlane.xlu0 %2670
    %v2672 = vsel %vm136, %v2668, -inf
    %2673 = vmax.xlane.f32.xlu0 %v2672
    %v2674 = vpop.xlane.xlu0 %2673
    %v2675 = vsub.f32 %v2667, %v2671
    %v2676 = vsub.f32 %v2668, %v2674
    %v2677 = vmul.f32 %v2675, 1.442695
    %v2678 = vpow.pop %v2677
    %v2679 = vmul.f32 %v2676, 1.442695
    %v2680 = vpow.pop %v2679
    %v2681 = vsel %vm136, %v2678, 0.0
    %2682 = vadd.xlane.f32.xlu0 %v2681
    %v2683 = vpop.xlane.xlu0 %2682
    %v2684 = vsel %vm136, %v2680, 0.0
    %2685 = vadd.xlane.f32.xlu0 %v2684
    %v2686 = vpop.xlane.xlu0 %2685
    %v2687 = vrcp.pop %v2683
    %v2688 = vrcp.pop %v2686
    %v2689 = vmul.f32 %v2678, %v2687
    %v2690 = vmul.f32 %v2680, %v2688
    %v2691 = vpack.c.bf16 %v2689, %v2689
    %v2692 = vpack.c.bf16 %v2690, %v2690
    %2693 = vrot.lane.b32.xlu0 %v2621, 64
    %v2694 = vpop.permute.xlu0 %2693
    %v2696 = vsel %vm136, %v2691, 0
    %v2699 = vsel %vm211, %v2694, 0
    %2701 = vmatpush.bf16.msra.mxu0 0
    %2702 = vmatpush.bf16.msra.mxu0 0
    %2703 = vmatpush.bf16.msra.mxu0 0
    %2704 = vmatpush.bf16.msra.mxu0 0
    %2705 = vmatpush.bf16.msra.mxu0 0
    %2706 = vmatpush.bf16.msra.mxu0 0
    %2707 = vmatpush.bf16.msra.mxu0 0
    %2708 = vmatpush.bf16.msra.mxu0 %v2699
    %2709 = vmatmul.bf16.gmra.mxu0 %v2696
    %v2710 = vpop.f32.mrf.mxu0
    %v2711 = vadd.f32 0.0, %v2710
    %v2712 = vpop.f32.mrf.mxu0
    %2713 = vdwg.mxu0
    %2714 = vrot.lane.b32.xlu0 %v2645, 64
    %v2715 = vpop.permute.xlu0 %2714
    %v2717 = vsel %vm136, %v2692, 0
    %v2720 = vsel %vm211, %v2715, 0
    %2722 = vmatpush.bf16.msra.mxu0 0
    %2723 = vmatpush.bf16.msra.mxu0 0
    %2724 = vmatpush.bf16.msra.mxu0 0
    %2725 = vmatpush.bf16.msra.mxu0 0
    %2726 = vmatpush.bf16.msra.mxu0 0
    %2727 = vmatpush.bf16.msra.mxu0 0
    %2728 = vmatpush.bf16.msra.mxu0 0
    %2729 = vmatpush.bf16.msra.mxu0 %v2720
    %2730 = vmatmul.bf16.gmra.mxu0 %v2717
    %v2731 = vpop.f32.mrf.mxu0
    %v2732 = vadd.f32 0.0, %v2731
    %v2733 = vpop.f32.mrf.mxu0
    %2734 = vdwg.mxu0
    %v2735 = vpack.c.bf16 %v2732, %v2711
    %v2736 = vld [vmem:[%s15] sm:$0xf]
    %2737 = vrot.lane.b32.xlu0 %v2621, 120
    %v2738 = vpop.permute.xlu0 %2737
    %2739 = vrot.lane.b32.xlu0 %v2621, 88
    %v2740 = vpop.permute.xlu0 %2739
    %v2742 = vsel %vm136, %v2738, 0
    %v2745 = vsel %vm136, %v2740, 0
    %2747 = vmatpush.bf16.xpose.msra.mxu0 0
    %2748 = vmatpush.bf16.xpose.msra.mxu0 0
    %2749 = vmatpush.bf16.xpose.msra.mxu0 0
    %2750 = vmatpush.bf16.xpose.msra.mxu0 0
    %2751 = vmatpush.bf16.xpose.msra.mxu0 0
    %2752 = vmatpush.bf16.xpose.msra.mxu0 0
    %2753 = vmatpush.bf16.xpose.msra.mxu0 0
    %2754 = vmatpush.bf16.xpose.msra.mxu0 %v2745
    %2755 = vmatmul.bf16.gmra.mxu0 %v2742
    %v2756 = vpop.f32.mrf.mxu0
    %v2757 = vadd.f32 0.0, %v2756
    %v2758 = vpop.f32.mrf.mxu0
    %2759 = vdwg.mxu0
    %2760 = vrot.lane.b32.xlu0 %v2645, 120
    %v2761 = vpop.permute.xlu0 %2760
    %2762 = vrot.lane.b32.xlu0 %v2645, 88
    %v2763 = vpop.permute.xlu0 %2762
    %v2765 = vsel %vm136, %v2761, 0
    %v2768 = vsel %vm136, %v2763, 0
    %2770 = vmatpush.bf16.xpose.msra.mxu0 0
    %2771 = vmatpush.bf16.xpose.msra.mxu0 0
    %2772 = vmatpush.bf16.xpose.msra.mxu0 0
    %2773 = vmatpush.bf16.xpose.msra.mxu0 0
    %2774 = vmatpush.bf16.xpose.msra.mxu0 0
    %2775 = vmatpush.bf16.xpose.msra.mxu0 0
    %2776 = vmatpush.bf16.xpose.msra.mxu0 0
    %2777 = vmatpush.bf16.xpose.msra.mxu0 %v2768
    %2778 = vmatmul.bf16.gmra.mxu0 %v2765
    %v2779 = vpop.f32.mrf.mxu0
    %v2780 = vadd.f32 0.0, %v2779
    %v2781 = vpop.f32.mrf.mxu0
    %2782 = vdwg.mxu0
    %v2783 = vmul.f32 %v2757, 0.35355338
    %v2784 = vmul.f32 %v2780, 0.35355338
    %v2785 = vsel %vm136, %v2783, -inf
    %2786 = vmax.xlane.f32.xlu0 %v2785
    %v2787 = vpop.xlane.xlu0 %2786
    %v2788 = vsel %vm136, %v2784, -inf
    %2789 = vmax.xlane.f32.xlu0 %v2788
    %v2790 = vpop.xlane.xlu0 %2789
    %v2791 = vsub.f32 %v2783, %v2787
    %v2792 = vsub.f32 %v2784, %v2790
    %v2793 = vmul.f32 %v2791, 1.442695
    %v2794 = vpow.pop %v2793
    %v2795 = vmul.f32 %v2792, 1.442695
    %v2796 = vpow.pop %v2795
    %v2797 = vsel %vm136, %v2794, 0.0
    %2798 = vadd.xlane.f32.xlu0 %v2797
    %v2799 = vpop.xlane.xlu0 %2798
    %v2800 = vsel %vm136, %v2796, 0.0
    %2801 = vadd.xlane.f32.xlu0 %v2800
    %v2802 = vpop.xlane.xlu0 %2801
    %v2803 = vrcp.pop %v2799
    %v2804 = vrcp.pop %v2802
    %v2805 = vmul.f32 %v2794, %v2803
    %v2806 = vmul.f32 %v2796, %v2804
    %v2807 = vpack.c.bf16 %v2805, %v2805
    %v2808 = vpack.c.bf16 %v2806, %v2806
    %2809 = vrot.lane.b32.xlu0 %v2621, 56
    %v2810 = vpop.permute.xlu0 %2809
    %v2812 = vsel %vm136, %v2807, 0
    %v2815 = vsel %vm211, %v2810, 0
    %2817 = vmatpush.bf16.msra.mxu0 0
    %2818 = vmatpush.bf16.msra.mxu0 0
    %2819 = vmatpush.bf16.msra.mxu0 0
    %2820 = vmatpush.bf16.msra.mxu0 0
    %2821 = vmatpush.bf16.msra.mxu0 0
    %2822 = vmatpush.bf16.msra.mxu0 0
    %2823 = vmatpush.bf16.msra.mxu0 0
    %2824 = vmatpush.bf16.msra.mxu0 %v2815
    %2825 = vmatmul.bf16.gmra.mxu0 %v2812
    %v2826 = vpop.f32.mrf.mxu0
    %v2827 = vadd.f32 0.0, %v2826
    %v2828 = vpop.f32.mrf.mxu0
    %2829 = vdwg.mxu0
    %2830 = vrot.lane.b32.xlu0 %v2645, 56
    %v2831 = vpop.permute.xlu0 %2830
    %v2833 = vsel %vm136, %v2808, 0
    %v2836 = vsel %vm211, %v2831, 0
    %2838 = vmatpush.bf16.msra.mxu0 0
    %2839 = vmatpush.bf16.msra.mxu0 0
    %2840 = vmatpush.bf16.msra.mxu0 0
    %2841 = vmatpush.bf16.msra.mxu0 0
    %2842 = vmatpush.bf16.msra.mxu0 0
    %2843 = vmatpush.bf16.msra.mxu0 0
    %2844 = vmatpush.bf16.msra.mxu0 0
    %2845 = vmatpush.bf16.msra.mxu0 %v2836
    %2846 = vmatmul.bf16.gmra.mxu0 %v2833
    %v2847 = vpop.f32.mrf.mxu0
    %v2848 = vadd.f32 0.0, %v2847
    %v2849 = vpop.f32.mrf.mxu0
    %2850 = vdwg.mxu0
    %v2851 = vpack.c.bf16 %v2848, %v2827
    %s2852 = scalar_lea.vmem %s15, 4
    %v2853 = vld [vmem:[%s2852] sm:$0xf]
    %v2855 = vsel %vm136, %v2851, 0
    %v2858 = vsel %vm211, %v2853, 0
    %2860 = vmatpush.bf16.msra.mxu0 0
    %2861 = vmatpush.bf16.msra.mxu0 0
    %2862 = vmatpush.bf16.msra.mxu0 0
    %2863 = vmatpush.bf16.msra.mxu0 0
    %2864 = vmatpush.bf16.msra.mxu0 0
    %2865 = vmatpush.bf16.msra.mxu0 0
    %2866 = vmatpush.bf16.msra.mxu0 0
    %2867 = vmatpush.bf16.msra.mxu0 %v2858
    %2868 = vmatmul.bf16.gmra.mxu0 %v2855
    %v2869 = vpop.f32.mrf.mxu0
    %v2870 = vadd.f32 0.0, %v2869
    %v2871 = vpop.f32.mrf.mxu0
    %v2872 = vadd.f32 0.0, %v2871
    %2873 = vdwg.mxu0
    %v2875 = vsel %vm136, %v2735, 0
    %v2878 = vsel %vm211, %v2736, 0
    %2880 = vmatpush.bf16.msra.mxu0 0
    %2881 = vmatpush.bf16.msra.mxu0 0
    %2882 = vmatpush.bf16.msra.mxu0 0
    %2883 = vmatpush.bf16.msra.mxu0 0
    %2884 = vmatpush.bf16.msra.mxu0 0
    %2885 = vmatpush.bf16.msra.mxu0 0
    %2886 = vmatpush.bf16.msra.mxu0 0
    %2887 = vmatpush.bf16.msra.mxu0 %v2878
    %2888 = vmatmul.bf16.gmra.mxu0 %v2875
    %v2889 = vpop.f32.mrf.mxu0
    %v2890 = vadd.f32 %v2870, %v2889
    %v2891 = vpop.f32.mrf.mxu0
    %v2892 = vadd.f32 %v2872, %v2891
    %2893 = vdwg.mxu0
    %2894 = vrot.lane.b32.xlu0 %v2621, 112
    %v2895 = vpop.permute.xlu0 %2894
    %2896 = vrot.lane.b32.xlu0 %v2621, 80
    %v2897 = vpop.permute.xlu0 %2896
    %v2899 = vsel %vm136, %v2895, 0
    %v2902 = vsel %vm136, %v2897, 0
    %2904 = vmatpush.bf16.xpose.msra.mxu0 0
    %2905 = vmatpush.bf16.xpose.msra.mxu0 0
    %2906 = vmatpush.bf16.xpose.msra.mxu0 0
    %2907 = vmatpush.bf16.xpose.msra.mxu0 0
    %2908 = vmatpush.bf16.xpose.msra.mxu0 0
    %2909 = vmatpush.bf16.xpose.msra.mxu0 0
    %2910 = vmatpush.bf16.xpose.msra.mxu0 0
    %2911 = vmatpush.bf16.xpose.msra.mxu0 %v2902
    %2912 = vmatmul.bf16.gmra.mxu0 %v2899
    %v2913 = vpop.f32.mrf.mxu0
    %v2914 = vadd.f32 0.0, %v2913
    %v2915 = vpop.f32.mrf.mxu0
    %2916 = vdwg.mxu0
    %2917 = vrot.lane.b32.xlu0 %v2645, 112
    %v2918 = vpop.permute.xlu0 %2917
    %2919 = vrot.lane.b32.xlu0 %v2645, 80
    %v2920 = vpop.permute.xlu0 %2919
    %v2922 = vsel %vm136, %v2918, 0
    %v2925 = vsel %vm136, %v2920, 0
    %2927 = vmatpush.bf16.xpose.msra.mxu0 0
    %2928 = vmatpush.bf16.xpose.msra.mxu0 0
    %2929 = vmatpush.bf16.xpose.msra.mxu0 0
    %2930 = vmatpush.bf16.xpose.msra.mxu0 0
    %2931 = vmatpush.bf16.xpose.msra.mxu0 0
    %2932 = vmatpush.bf16.xpose.msra.mxu0 0
    %2933 = vmatpush.bf16.xpose.msra.mxu0 0
    %2934 = vmatpush.bf16.xpose.msra.mxu0 %v2925
    %2935 = vmatmul.bf16.gmra.mxu0 %v2922
    %v2936 = vpop.f32.mrf.mxu0
    %v2937 = vadd.f32 0.0, %v2936
    %v2938 = vpop.f32.mrf.mxu0
    %2939 = vdwg.mxu0
    %v2940 = vmul.f32 %v2914, 0.35355338
    %v2941 = vmul.f32 %v2937, 0.35355338
    %v2942 = vsel %vm136, %v2940, -inf
    %2943 = vmax.xlane.f32.xlu0 %v2942
    %v2944 = vpop.xlane.xlu0 %2943
    %v2945 = vsel %vm136, %v2941, -inf
    %2946 = vmax.xlane.f32.xlu0 %v2945
    %v2947 = vpop.xlane.xlu0 %2946
    %v2948 = vsub.f32 %v2940, %v2944
    %v2949 = vsub.f32 %v2941, %v2947
    %v2950 = vmul.f32 %v2948, 1.442695
    %v2951 = vpow.pop %v2950
    %v2952 = vmul.f32 %v2949, 1.442695
    %v2953 = vpow.pop %v2952
    %v2954 = vsel %vm136, %v2951, 0.0
    %2955 = vadd.xlane.f32.xlu0 %v2954
    %v2956 = vpop.xlane.xlu0 %2955
    %v2957 = vsel %vm136, %v2953, 0.0
    %2958 = vadd.xlane.f32.xlu0 %v2957
    %v2959 = vpop.xlane.xlu0 %2958
    %v2960 = vrcp.pop %v2956
    %v2961 = vrcp.pop %v2959
    %v2962 = vmul.f32 %v2951, %v2960
    %v2963 = vmul.f32 %v2953, %v2961
    %v2964 = vpack.c.bf16 %v2962, %v2962
    %v2965 = vpack.c.bf16 %v2963, %v2963
    %2966 = vrot.lane.b32.xlu0 %v2621, 48
    %v2967 = vpop.permute.xlu0 %2966
    %v2969 = vsel %vm136, %v2964, 0
    %v2972 = vsel %vm211, %v2967, 0
    %2974 = vmatpush.bf16.msra.mxu0 0
    %2975 = vmatpush.bf16.msra.mxu0 0
    %2976 = vmatpush.bf16.msra.mxu0 0
    %2977 = vmatpush.bf16.msra.mxu0 0
    %2978 = vmatpush.bf16.msra.mxu0 0
    %2979 = vmatpush.bf16.msra.mxu0 0
    %2980 = vmatpush.bf16.msra.mxu0 0
    %2981 = vmatpush.bf16.msra.mxu0 %v2972
    %2982 = vmatmul.bf16.gmra.mxu0 %v2969
    %v2983 = vpop.f32.mrf.mxu0
    %v2984 = vadd.f32 0.0, %v2983
    %v2985 = vpop.f32.mrf.mxu0
    %2986 = vdwg.mxu0
    %2987 = vrot.lane.b32.xlu0 %v2645, 48
    %v2988 = vpop.permute.xlu0 %2987
    %v2990 = vsel %vm136, %v2965, 0
    %v2993 = vsel %vm211, %v2988, 0
    %2995 = vmatpush.bf16.msra.mxu0 0
    %2996 = vmatpush.bf16.msra.mxu0 0
    %2997 = vmatpush.bf16.msra.mxu0 0
    %2998 = vmatpush.bf16.msra.mxu0 0
    %2999 = vmatpush.bf16.msra.mxu0 0
    %3000 = vmatpush.bf16.msra.mxu0 0
    %3001 = vmatpush.bf16.msra.mxu0 0
    %3002 = vmatpush.bf16.msra.mxu0 %v2993
    %3003 = vmatmul.bf16.gmra.mxu0 %v2990
    %v3004 = vpop.f32.mrf.mxu0
    %v3005 = vadd.f32 0.0, %v3004
    %v3006 = vpop.f32.mrf.mxu0
    %3007 = vdwg.mxu0
    %v3008 = vpack.c.bf16 %v3005, %v2984
    %s3009 = scalar_lea.vmem %s15, 8
    %v3010 = vld [vmem:[%s3009] sm:$0xf]
    %v3012 = vsel %vm136, %v3008, 0
    %v3015 = vsel %vm211, %v3010, 0
    %3017 = vmatpush.bf16.msra.mxu0 0
    %3018 = vmatpush.bf16.msra.mxu0 0
    %3019 = vmatpush.bf16.msra.mxu0 0
    %3020 = vmatpush.bf16.msra.mxu0 0
    %3021 = vmatpush.bf16.msra.mxu0 0
    %3022 = vmatpush.bf16.msra.mxu0 0
    %3023 = vmatpush.bf16.msra.mxu0 0
    %3024 = vmatpush.bf16.msra.mxu0 %v3015
    %3025 = vmatmul.bf16.gmra.mxu0 %v3012
    %v3026 = vpop.f32.mrf.mxu0
    %v3027 = vadd.f32 0.0, %v3026
    %v3028 = vpop.f32.mrf.mxu0
    %v3029 = vadd.f32 0.0, %v3028
    %3030 = vdwg.mxu0
    %v3031 = vadd.f32 %v2890, %v3027
    %v3032 = vadd.f32 %v2892, %v3029
    %3033 = vrot.lane.b32.xlu0 %v2621, 104
    %v3034 = vpop.permute.xlu0 %3033
    %3035 = vrot.lane.b32.xlu0 %v2621, 72
    %v3036 = vpop.permute.xlu0 %3035
    %v3038 = vsel %vm136, %v3034, 0
    %v3041 = vsel %vm136, %v3036, 0
    %3043 = vmatpush.bf16.xpose.msra.mxu0 0
    %3044 = vmatpush.bf16.xpose.msra.mxu0 0
    %3045 = vmatpush.bf16.xpose.msra.mxu0 0
    %3046 = vmatpush.bf16.xpose.msra.mxu0 0
    %3047 = vmatpush.bf16.xpose.msra.mxu0 0
    %3048 = vmatpush.bf16.xpose.msra.mxu0 0
    %3049 = vmatpush.bf16.xpose.msra.mxu0 0
    %3050 = vmatpush.bf16.xpose.msra.mxu0 %v3041
    %3051 = vmatmul.bf16.gmra.mxu0 %v3038
    %v3052 = vpop.f32.mrf.mxu0
    %v3053 = vadd.f32 0.0, %v3052
    %v3054 = vpop.f32.mrf.mxu0
    %3055 = vdwg.mxu0
    %3056 = vrot.lane.b32.xlu0 %v2645, 104
    %v3057 = vpop.permute.xlu0 %3056
    %3058 = vrot.lane.b32.xlu0 %v2645, 72
    %v3059 = vpop.permute.xlu0 %3058
    %v3061 = vsel %vm136, %v3057, 0
    %v3064 = vsel %vm136, %v3059, 0
    %3066 = vmatpush.bf16.xpose.msra.mxu0 0
    %3067 = vmatpush.bf16.xpose.msra.mxu0 0
    %3068 = vmatpush.bf16.xpose.msra.mxu0 0
    %3069 = vmatpush.bf16.xpose.msra.mxu0 0
    %3070 = vmatpush.bf16.xpose.msra.mxu0 0
    %3071 = vmatpush.bf16.xpose.msra.mxu0 0
    %3072 = vmatpush.bf16.xpose.msra.mxu0 0
    %3073 = vmatpush.bf16.xpose.msra.mxu0 %v3064
    %3074 = vmatmul.bf16.gmra.mxu0 %v3061
    %v3075 = vpop.f32.mrf.mxu0
    %v3076 = vadd.f32 0.0, %v3075
    %v3077 = vpop.f32.mrf.mxu0
    %3078 = vdwg.mxu0
    %v3079 = vmul.f32 %v3053, 0.35355338
    %v3080 = vmul.f32 %v3076, 0.35355338
    %v3081 = vsel %vm136, %v3079, -inf
    %3082 = vmax.xlane.f32.xlu0 %v3081
    %v3083 = vpop.xlane.xlu0 %3082
    %v3084 = vsel %vm136, %v3080, -inf
    %3085 = vmax.xlane.f32.xlu0 %v3084
    %v3086 = vpop.xlane.xlu0 %3085
    %v3087 = vsub.f32 %v3079, %v3083
    %v3088 = vsub.f32 %v3080, %v3086
    %v3089 = vmul.f32 %v3087, 1.442695
    %v3090 = vpow.pop %v3089
    %v3091 = vmul.f32 %v3088, 1.442695
    %v3092 = vpow.pop %v3091
    %v3093 = vsel %vm136, %v3090, 0.0
    %3094 = vadd.xlane.f32.xlu0 %v3093
    %v3095 = vpop.xlane.xlu0 %3094
    %v3096 = vsel %vm136, %v3092, 0.0
    %3097 = vadd.xlane.f32.xlu0 %v3096
    %v3098 = vpop.xlane.xlu0 %3097
    %v3099 = vrcp.pop %v3095
    %v3100 = vrcp.pop %v3098
    %v3101 = vmul.f32 %v3090, %v3099
    %v3102 = vmul.f32 %v3092, %v3100
    %v3103 = vpack.c.bf16 %v3101, %v3101
    %v3104 = vpack.c.bf16 %v3102, %v3102
    %3105 = vrot.lane.b32.xlu0 %v2621, 40
    %v3106 = vpop.permute.xlu0 %3105
    %v3108 = vsel %vm136, %v3103, 0
    %v3111 = vsel %vm211, %v3106, 0
    %3113 = vmatpush.bf16.msra.mxu0 0
    %3114 = vmatpush.bf16.msra.mxu0 0
    %3115 = vmatpush.bf16.msra.mxu0 0
    %3116 = vmatpush.bf16.msra.mxu0 0
    %3117 = vmatpush.bf16.msra.mxu0 0
    %3118 = vmatpush.bf16.msra.mxu0 0
    %3119 = vmatpush.bf16.msra.mxu0 0
    %3120 = vmatpush.bf16.msra.mxu0 %v3111
    %3121 = vmatmul.bf16.gmra.mxu0 %v3108
    %v3122 = vpop.f32.mrf.mxu0
    %v3123 = vadd.f32 0.0, %v3122
    %v3124 = vpop.f32.mrf.mxu0
    %3125 = vdwg.mxu0
    %3126 = vrot.lane.b32.xlu0 %v2645, 40
    %v3127 = vpop.permute.xlu0 %3126
    %v3129 = vsel %vm136, %v3104, 0
    %v3132 = vsel %vm211, %v3127, 0
    %3134 = vmatpush.bf16.msra.mxu0 0
    %3135 = vmatpush.bf16.msra.mxu0 0
    %3136 = vmatpush.bf16.msra.mxu0 0
    %3137 = vmatpush.bf16.msra.mxu0 0
    %3138 = vmatpush.bf16.msra.mxu0 0
    %3139 = vmatpush.bf16.msra.mxu0 0
    %3140 = vmatpush.bf16.msra.mxu0 0
    %3141 = vmatpush.bf16.msra.mxu0 %v3132
    %3142 = vmatmul.bf16.gmra.mxu0 %v3129
    %v3143 = vpop.f32.mrf.mxu0
    %v3144 = vadd.f32 0.0, %v3143
    %v3145 = vpop.f32.mrf.mxu0
    %3146 = vdwg.mxu0
    %v3147 = vpack.c.bf16 %v3144, %v3123
    %s3148 = scalar_lea.vmem %s15, 12
    %v3149 = vld [vmem:[%s3148] sm:$0xf]
    %v3151 = vsel %vm136, %v3147, 0
    %v3154 = vsel %vm211, %v3149, 0
    %3156 = vmatpush.bf16.msra.mxu0 0
    %3157 = vmatpush.bf16.msra.mxu0 0
    %3158 = vmatpush.bf16.msra.mxu0 0
    %3159 = vmatpush.bf16.msra.mxu0 0
    %3160 = vmatpush.bf16.msra.mxu0 0
    %3161 = vmatpush.bf16.msra.mxu0 0
    %3162 = vmatpush.bf16.msra.mxu0 0
    %3163 = vmatpush.bf16.msra.mxu0 %v3154
    %3164 = vmatmul.bf16.gmra.mxu0 %v3151
    %v3165 = vpop.f32.mrf.mxu0
    %v3166 = vadd.f32 0.0, %v3165
    %v3167 = vpop.f32.mrf.mxu0
    %v3168 = vadd.f32 0.0, %v3167
    %3169 = vdwg.mxu0
    %v3170 = vadd.f32 %v3031, %v3166
    %v3171 = vadd.f32 %v3032, %v3168
    %v3172 = vld [vmem:[%s16] sm:$0x1]
    %v3174 = vperm.slane %v3172, 0
    %v3176 = vadd.f32 %v3170, %v3174
    %v3177 = vadd.f32 %v3171, %v3174
    %v3178 = vadd.f32 %v2577, %v3176
    %v3179 = vadd.f32 %v2578, %v3177
    %v3180 = vld [vmem:[%s17] sm:$0x1]
    %v3181 = vld [vmem:[%s18] sm:$0x1]
    %v3182 = vsel %vm111, %v3178, 0.0
    %3183 = vadd.xlane.f32.xlu0 %v3182
    %v3184 = vpop.xlane.xlu0 %3183
    %v3185 = vsel %vm111, %v3179, 0.0
    %3186 = vadd.xlane.f32.xlu0 %v3185
    %v3187 = vpop.xlane.xlu0 %3186
    %v3188 = vmul.f32 %v3184, %v708
    %v3189 = vmul.f32 %v3187, %v708
    %v3190 = vmul.f32 %v3178, %v3178
    %v3191 = vmul.f32 %v3179, %v3179
    %v3192 = vsel %vm111, %v3190, 0.0
    %3193 = vadd.xlane.f32.xlu0 %v3192
    %v3194 = vpop.xlane.xlu0 %3193
    %v3195 = vsel %vm111, %v3191, 0.0
    %3196 = vadd.xlane.f32.xlu0 %v3195
    %v3197 = vpop.xlane.xlu0 %3196
    %v3198 = vmul.f32 %v3194, %v708
    %v3199 = vmul.f32 %v3197, %v708
    %v3200 = vmul.f32 %v3188, %v3188
    %v3201 = vmul.f32 %v3189, %v3189
    %v3202 = vsub.f32 %v3198, %v3200
    %v3203 = vsub.f32 %v3199, %v3201
    %v3204 = vsub.f32 %v3178, %v3188
    %v3205 = vsub.f32 %v3179, %v3189
    %v3206 = vadd.f32 %v3202, 1e-05
    %v3207 = vadd.f32 %v3203, 1e-05
    %v3208 = vrsqrt.pop %v3206
    %v3209 = vmul.f32 %v3208, %v3206
    %v3210 = vmul.f32 %v3209, %v3208
    %v3211 = vmul.f32 0.5, %v3210
    %v3212 = vsub.f32 1.5, %v3211
    %v3213 = vmul.f32 %v3208, %v3212
    %vm3214 = vweird.f32 %v3206
    %vm3215 = vweird.f32 %v3208
    %vm3216 = vmor %vm3214, %vm3215
    %v3217 = vsel %vm3216, %v3208, %v3213
    %v3218 = vrsqrt.pop %v3207
    %v3219 = vmul.f32 %v3218, %v3207
    %v3220 = vmul.f32 %v3219, %v3218
    %v3221 = vmul.f32 0.5, %v3220
    %v3222 = vsub.f32 1.5, %v3221
    %v3223 = vmul.f32 %v3218, %v3222
    %vm3224 = vweird.f32 %v3207
    %vm3225 = vweird.f32 %v3218
    %vm3226 = vmor %vm3224, %vm3225
    %v3227 = vsel %vm3226, %v3218, %v3223
    %v3228 = vmul.f32 %v3204, %v3217
    %v3229 = vmul.f32 %v3205, %v3227
    %v3231 = vperm.slane %v3180, 0
    %v3233 = vmul.f32 %v3228, %v3231
    %v3234 = vmul.f32 %v3229, %v3231
    %v3236 = vperm.slane %v3181, 0
    %v3238 = vadd.f32 %v3233, %v3236
    %v3239 = vadd.f32 %v3234, %v3236
    %v3240 = vpack.c.bf16 %v3239, %v3238
    %v3241 = vld [vmem:[%s19] sm:$0xff]
    %v3242 = vld [vmem:[%s19 + $0x8] sm:$0xff]
    %v3243 = vld [vmem:[%s19 + $0x10] sm:$0xff]
    %v3244 = vld [vmem:[%s19 + $0x18] sm:$0xff]
    %v3245 = vld [vmem:[%s19 + $0x20] sm:$0xff]
    %v3246 = vld [vmem:[%s19 + $0x28] sm:$0xff]
    %v3247 = vld [vmem:[%s19 + $0x30] sm:$0xff]
    %v3248 = vld [vmem:[%s19 + $0x38] sm:$0xff]
    %v3249 = vld [vmem:[%s19 + $0x40] sm:$0xff]
    %v3250 = vld [vmem:[%s19 + $0x48] sm:$0xff]
    %v3251 = vld [vmem:[%s19 + $0x50] sm:$0xff]
    %v3252 = vld [vmem:[%s19 + $0x58] sm:$0xff]
    %v3253 = vld [vmem:[%s19 + $0x60] sm:$0xff]
    %v3254 = vld [vmem:[%s19 + $0x68] sm:$0xff]
    %v3255 = vld [vmem:[%s19 + $0x70] sm:$0xff]
    %v3256 = vld [vmem:[%s19 + $0x78] sm:$0xff]
    %v3257 = vld [vmem:[%s19 + $0x80] sm:$0xff]
    %v3258 = vld [vmem:[%s19 + $0x88] sm:$0xff]
    %v3259 = vld [vmem:[%s19 + $0x90] sm:$0xff]
    %v3260 = vld [vmem:[%s19 + $0x98] sm:$0xff]
    %v3261 = vld [vmem:[%s19 + $0xa0] sm:$0xff]
    %v3262 = vld [vmem:[%s19 + $0xa8] sm:$0xff]
    %v3263 = vld [vmem:[%s19 + $0xb0] sm:$0xff]
    %v3264 = vld [vmem:[%s19 + $0xb8] sm:$0xff]
    %v3265 = vld [vmem:[%s19 + $0xc0] sm:$0xff]
    %v3266 = vld [vmem:[%s19 + $0xc8] sm:$0xff]
    %v3267 = vld [vmem:[%s19 + $0xd0] sm:$0xff]
    %v3268 = vld [vmem:[%s19 + $0xd8] sm:$0xff]
    %v3269 = vld [vmem:[%s19 + $0xe0] sm:$0xff]
    %v3270 = vld [vmem:[%s19 + $0xe8] sm:$0xff]
    %v3271 = vld [vmem:[%s19 + $0xf0] sm:$0xff]
    %v3272 = vld [vmem:[%s19 + $0xf8] sm:$0xff]
    %v3273 = vld [vmem:[%s20] sm:$0xff]
    %v3274 = vld [vmem:[%s20 + $0x8] sm:$0xff]
    %v3277 = vperm.slane %v3273, 0
    %v3278 = vperm.slane %v3273, 1
    %v3279 = vperm.slane %v3273, 2
    %v3280 = vperm.slane %v3273, 3
    %v3281 = vperm.slane %v3273, 4
    %v3282 = vperm.slane %v3273, 5
    %v3283 = vperm.slane %v3273, 6
    %v3284 = vperm.slane %v3273, 7
    %v3285 = vperm.slane %v3274, 0
    %v3286 = vperm.slane %v3274, 1
    %v3287 = vperm.slane %v3274, 2
    %v3288 = vperm.slane %v3274, 3
    %v3289 = vperm.slane %v3274, 4
    %v3290 = vperm.slane %v3274, 5
    %v3291 = vperm.slane %v3274, 6
    %v3292 = vperm.slane %v3274, 7
    %v3341 = vunpack.c.l.b16 %v3241
    %v3342 = vunpack.c.h.b16 %v3241
    %v3343 = vunpack.c.l.b16 %v3242
    %v3344 = vunpack.c.h.b16 %v3242
    %v3345 = vunpack.c.l.b16 %v3243
    %v3346 = vunpack.c.h.b16 %v3243
    %v3347 = vunpack.c.l.b16 %v3244
    %v3348 = vunpack.c.h.b16 %v3244
    %v3349 = vunpack.c.l.b16 %v3245
    %v3350 = vunpack.c.h.b16 %v3245
    %v3351 = vunpack.c.l.b16 %v3246
    %v3352 = vunpack.c.h.b16 %v3246
    %v3353 = vunpack.c.l.b16 %v3247
    %v3354 = vunpack.c.h.b16 %v3247
    %v3355 = vunpack.c.l.b16 %v3248
    %v3356 = vunpack.c.h.b16 %v3248
    %v3357 = vunpack.c.l.b16 %v3249
    %v3358 = vunpack.c.h.b16 %v3249
    %v3359 = vunpack.c.l.b16 %v3250
    %v3360 = vunpack.c.h.b16 %v3250
    %v3361 = vunpack.c.l.b16 %v3251
    %v3362 = vunpack.c.h.b16 %v3251
    %v3363 = vunpack.c.l.b16 %v3252
    %v3364 = vunpack.c.h.b16 %v3252
    %v3365 = vunpack.c.l.b16 %v3253
    %v3366 = vunpack.c.h.b16 %v3253
    %v3367 = vunpack.c.l.b16 %v3254
    %v3368 = vunpack.c.h.b16 %v3254
    %v3369 = vunpack.c.l.b16 %v3255
    %v3370 = vunpack.c.h.b16 %v3255
    %v3371 = vunpack.c.l.b16 %v3256
    %v3372 = vunpack.c.h.b16 %v3256
    %v3373 = vunpack.c.l.b16 %v3257
    %v3374 = vunpack.c.h.b16 %v3257
    %v3375 = vunpack.c.l.b16 %v3258
    %v3376 = vunpack.c.h.b16 %v3258
    %v3377 = vunpack.c.l.b16 %v3259
    %v3378 = vunpack.c.h.b16 %v3259
    %v3379 = vunpack.c.l.b16 %v3260
    %v3380 = vunpack.c.h.b16 %v3260
    %v3381 = vunpack.c.l.b16 %v3261
    %v3382 = vunpack.c.h.b16 %v3261
    %v3383 = vunpack.c.l.b16 %v3262
    %v3384 = vunpack.c.h.b16 %v3262
    %v3385 = vunpack.c.l.b16 %v3263
    %v3386 = vunpack.c.h.b16 %v3263
    %v3387 = vunpack.c.l.b16 %v3264
    %v3388 = vunpack.c.h.b16 %v3264
    %v3389 = vunpack.c.l.b16 %v3265
    %v3390 = vunpack.c.h.b16 %v3265
    %v3391 = vunpack.c.l.b16 %v3266
    %v3392 = vunpack.c.h.b16 %v3266
    %v3393 = vunpack.c.l.b16 %v3267
    %v3394 = vunpack.c.h.b16 %v3267
    %v3395 = vunpack.c.l.b16 %v3268
    %v3396 = vunpack.c.h.b16 %v3268
    %v3397 = vunpack.c.l.b16 %v3269
    %v3398 = vunpack.c.h.b16 %v3269
    %v3399 = vunpack.c.l.b16 %v3270
    %v3400 = vunpack.c.h.b16 %v3270
    %v3401 = vunpack.c.l.b16 %v3271
    %v3402 = vunpack.c.h.b16 %v3271
    %v3403 = vunpack.c.l.b16 %v3272
    %v3404 = vunpack.c.h.b16 %v3272
    %v3405 = vpack.c.b16 %v3357, %v3341
    %v3406 = vpack.c.b16 %v3358, %v3342
    %v3407 = vpack.c.b16 %v3359, %v3343
    %v3408 = vpack.c.b16 %v3360, %v3344
    %v3409 = vpack.c.b16 %v3361, %v3345
    %v3410 = vpack.c.b16 %v3362, %v3346
    %v3411 = vpack.c.b16 %v3363, %v3347
    %v3412 = vpack.c.b16 %v3364, %v3348
    %v3413 = vpack.c.b16 %v3365, %v3349
    %v3414 = vpack.c.b16 %v3366, %v3350
    %v3415 = vpack.c.b16 %v3367, %v3351
    %v3416 = vpack.c.b16 %v3368, %v3352
    %v3417 = vpack.c.b16 %v3369, %v3353
    %v3418 = vpack.c.b16 %v3370, %v3354
    %v3419 = vpack.c.b16 %v3371, %v3355
    %v3420 = vpack.c.b16 %v3372, %v3356
    %v3421 = vpack.c.b16 %v3389, %v3373
    %v3422 = vpack.c.b16 %v3390, %v3374
    %v3423 = vpack.c.b16 %v3391, %v3375
    %v3424 = vpack.c.b16 %v3392, %v3376
    %v3425 = vpack.c.b16 %v3393, %v3377
    %v3426 = vpack.c.b16 %v3394, %v3378
    %v3427 = vpack.c.b16 %v3395, %v3379
    %v3428 = vpack.c.b16 %v3396, %v3380
    %v3429 = vpack.c.b16 %v3397, %v3381
    %v3430 = vpack.c.b16 %v3398, %v3382
    %v3431 = vpack.c.b16 %v3399, %v3383
    %v3432 = vpack.c.b16 %v3400, %v3384
    %v3433 = vpack.c.b16 %v3401, %v3385
    %v3434 = vpack.c.b16 %v3402, %v3386
    %v3435 = vpack.c.b16 %v3403, %v3387
    %v3436 = vpack.c.b16 %v3404, %v3388
    %v3470 = vsel %vm111, %v3240, 0
    %3472 = vmatpush.bf16.msra.mxu0 0
    %3473 = vmatpush.bf16.msra.mxu0 0
    %3474 = vmatpush.bf16.msra.mxu0 0
    %3475 = vmatpush.bf16.msra.mxu0 0
    %3476 = vmatpush.bf16.msra.mxu0 0
    %3477 = vmatpush.bf16.msra.mxu0 0
    %3478 = vmatpush.bf16.msra.mxu0 %v3421
    %3479 = vmatpush.bf16.msra.mxu0 %v3405
    %3480 = vmatmul.bf16.gmra.mxu0 %v3470
    %v3481 = vpop.f32.mrf.mxu0
    %v3482 = vadd.f32 %v3277, %v3481
    %v3483 = vpop.f32.mrf.mxu0
    %v3484 = vadd.f32 %v3277, %v3483
    %3485 = vdwg.mxu0
    %3486 = vmatpush.bf16.msra.mxu0 0
    %3487 = vmatpush.bf16.msra.mxu0 0
    %3488 = vmatpush.bf16.msra.mxu0 0
    %3489 = vmatpush.bf16.msra.mxu0 0
    %3490 = vmatpush.bf16.msra.mxu0 0
    %3491 = vmatpush.bf16.msra.mxu0 0
    %3492 = vmatpush.bf16.msra.mxu0 %v3422
    %3493 = vmatpush.bf16.msra.mxu0 %v3406
    %3494 = vmatmul.bf16.gmra.mxu0 %v3470
    %v3495 = vpop.f32.mrf.mxu0
    %v3496 = vadd.f32 %v3278, %v3495
    %v3497 = vpop.f32.mrf.mxu0
    %v3498 = vadd.f32 %v3278, %v3497
    %3499 = vdwg.mxu0
    %3500 = vmatpush.bf16.msra.mxu0 0
    %3501 = vmatpush.bf16.msra.mxu0 0
    %3502 = vmatpush.bf16.msra.mxu0 0
    %3503 = vmatpush.bf16.msra.mxu0 0
    %3504 = vmatpush.bf16.msra.mxu0 0
    %3505 = vmatpush.bf16.msra.mxu0 0
    %3506 = vmatpush.bf16.msra.mxu0 %v3423
    %3507 = vmatpush.bf16.msra.mxu0 %v3407
    %3508 = vmatmul.bf16.gmra.mxu0 %v3470
    %v3509 = vpop.f32.mrf.mxu0
    %v3510 = vadd.f32 %v3279, %v3509
    %v3511 = vpop.f32.mrf.mxu0
    %v3512 = vadd.f32 %v3279, %v3511
    %3513 = vdwg.mxu0
    %3514 = vmatpush.bf16.msra.mxu0 0
    %3515 = vmatpush.bf16.msra.mxu0 0
    %3516 = vmatpush.bf16.msra.mxu0 0
    %3517 = vmatpush.bf16.msra.mxu0 0
    %3518 = vmatpush.bf16.msra.mxu0 0
    %3519 = vmatpush.bf16.msra.mxu0 0
    %3520 = vmatpush.bf16.msra.mxu0 %v3424
    %3521 = vmatpush.bf16.msra.mxu0 %v3408
    %3522 = vmatmul.bf16.gmra.mxu0 %v3470
    %v3523 = vpop.f32.mrf.mxu0
    %v3524 = vadd.f32 %v3280, %v3523
    %v3525 = vpop.f32.mrf.mxu0
    %v3526 = vadd.f32 %v3280, %v3525
    %3527 = vdwg.mxu0
    %3528 = vmatpush.bf16.msra.mxu0 0
    %3529 = vmatpush.bf16.msra.mxu0 0
    %3530 = vmatpush.bf16.msra.mxu0 0
    %3531 = vmatpush.bf16.msra.mxu0 0
    %3532 = vmatpush.bf16.msra.mxu0 0
    %3533 = vmatpush.bf16.msra.mxu0 0
    %3534 = vmatpush.bf16.msra.mxu0 %v3425
    %3535 = vmatpush.bf16.msra.mxu0 %v3409
    %3536 = vmatmul.bf16.gmra.mxu0 %v3470
    %v3537 = vpop.f32.mrf.mxu0
    %v3538 = vadd.f32 %v3281, %v3537
    %v3539 = vpop.f32.mrf.mxu0
    %v3540 = vadd.f32 %v3281, %v3539
    %3541 = vdwg.mxu0
    %3542 = vmatpush.bf16.msra.mxu0 0
    %3543 = vmatpush.bf16.msra.mxu0 0
    %3544 = vmatpush.bf16.msra.mxu0 0
    %3545 = vmatpush.bf16.msra.mxu0 0
    %3546 = vmatpush.bf16.msra.mxu0 0
    %3547 = vmatpush.bf16.msra.mxu0 0
    %3548 = vmatpush.bf16.msra.mxu0 %v3426
    %3549 = vmatpush.bf16.msra.mxu0 %v3410
    %3550 = vmatmul.bf16.gmra.mxu0 %v3470
    %v3551 = vpop.f32.mrf.mxu0
    %v3552 = vadd.f32 %v3282, %v3551
    %v3553 = vpop.f32.mrf.mxu0
    %v3554 = vadd.f32 %v3282, %v3553
    %3555 = vdwg.mxu0
    %3556 = vmatpush.bf16.msra.mxu0 0
    %3557 = vmatpush.bf16.msra.mxu0 0
    %3558 = vmatpush.bf16.msra.mxu0 0
    %3559 = vmatpush.bf16.msra.mxu0 0
    %3560 = vmatpush.bf16.msra.mxu0 0
    %3561 = vmatpush.bf16.msra.mxu0 0
    %3562 = vmatpush.bf16.msra.mxu0 %v3427
    %3563 = vmatpush.bf16.msra.mxu0 %v3411
    %3564 = vmatmul.bf16.gmra.mxu0 %v3470
    %v3565 = vpop.f32.mrf.mxu0
    %v3566 = vadd.f32 %v3283, %v3565
    %v3567 = vpop.f32.mrf.mxu0
    %v3568 = vadd.f32 %v3283, %v3567
    %3569 = vdwg.mxu0
    %3570 = vmatpush.bf16.msra.mxu0 0
    %3571 = vmatpush.bf16.msra.mxu0 0
    %3572 = vmatpush.bf16.msra.mxu0 0
    %3573 = vmatpush.bf16.msra.mxu0 0
    %3574 = vmatpush.bf16.msra.mxu0 0
    %3575 = vmatpush.bf16.msra.mxu0 0
    %3576 = vmatpush.bf16.msra.mxu0 %v3428
    %3577 = vmatpush.bf16.msra.mxu0 %v3412
    %3578 = vmatmul.bf16.gmra.mxu0 %v3470
    %v3579 = vpop.f32.mrf.mxu0
    %v3580 = vadd.f32 %v3284, %v3579
    %v3581 = vpop.f32.mrf.mxu0
    %v3582 = vadd.f32 %v3284, %v3581
    %3583 = vdwg.mxu0
    %3584 = vmatpush.bf16.msra.mxu0 0
    %3585 = vmatpush.bf16.msra.mxu0 0
    %3586 = vmatpush.bf16.msra.mxu0 0
    %3587 = vmatpush.bf16.msra.mxu0 0
    %3588 = vmatpush.bf16.msra.mxu0 0
    %3589 = vmatpush.bf16.msra.mxu0 0
    %3590 = vmatpush.bf16.msra.mxu0 %v3429
    %3591 = vmatpush.bf16.msra.mxu0 %v3413
    %3592 = vmatmul.bf16.gmra.mxu0 %v3470
    %v3593 = vpop.f32.mrf.mxu0
    %v3594 = vadd.f32 %v3285, %v3593
    %v3595 = vpop.f32.mrf.mxu0
    %v3596 = vadd.f32 %v3285, %v3595
    %3597 = vdwg.mxu0
    %3598 = vmatpush.bf16.msra.mxu0 0
    %3599 = vmatpush.bf16.msra.mxu0 0
    %3600 = vmatpush.bf16.msra.mxu0 0
    %3601 = vmatpush.bf16.msra.mxu0 0
    %3602 = vmatpush.bf16.msra.mxu0 0
    %3603 = vmatpush.bf16.msra.mxu0 0
    %3604 = vmatpush.bf16.msra.mxu0 %v3430
    %3605 = vmatpush.bf16.msra.mxu0 %v3414
    %3606 = vmatmul.bf16.gmra.mxu0 %v3470
    %v3607 = vpop.f32.mrf.mxu0
    %v3608 = vadd.f32 %v3286, %v3607
    %v3609 = vpop.f32.mrf.mxu0
    %v3610 = vadd.f32 %v3286, %v3609
    %3611 = vdwg.mxu0
    %3612 = vmatpush.bf16.msra.mxu0 0
    %3613 = vmatpush.bf16.msra.mxu0 0
    %3614 = vmatpush.bf16.msra.mxu0 0
    %3615 = vmatpush.bf16.msra.mxu0 0
    %3616 = vmatpush.bf16.msra.mxu0 0
    %3617 = vmatpush.bf16.msra.mxu0 0
    %3618 = vmatpush.bf16.msra.mxu0 %v3431
    %3619 = vmatpush.bf16.msra.mxu0 %v3415
    %3620 = vmatmul.bf16.gmra.mxu0 %v3470
    %v3621 = vpop.f32.mrf.mxu0
    %v3622 = vadd.f32 %v3287, %v3621
    %v3623 = vpop.f32.mrf.mxu0
    %v3624 = vadd.f32 %v3287, %v3623
    %3625 = vdwg.mxu0
    %3626 = vmatpush.bf16.msra.mxu0 0
    %3627 = vmatpush.bf16.msra.mxu0 0
    %3628 = vmatpush.bf16.msra.mxu0 0
    %3629 = vmatpush.bf16.msra.mxu0 0
    %3630 = vmatpush.bf16.msra.mxu0 0
    %3631 = vmatpush.bf16.msra.mxu0 0
    %3632 = vmatpush.bf16.msra.mxu0 %v3432
    %3633 = vmatpush.bf16.msra.mxu0 %v3416
    %3634 = vmatmul.bf16.gmra.mxu0 %v3470
    %v3635 = vpop.f32.mrf.mxu0
    %v3636 = vadd.f32 %v3288, %v3635
    %v3637 = vpop.f32.mrf.mxu0
    %v3638 = vadd.f32 %v3288, %v3637
    %3639 = vdwg.mxu0
    %3640 = vmatpush.bf16.msra.mxu0 0
    %3641 = vmatpush.bf16.msra.mxu0 0
    %3642 = vmatpush.bf16.msra.mxu0 0
    %3643 = vmatpush.bf16.msra.mxu0 0
    %3644 = vmatpush.bf16.msra.mxu0 0
    %3645 = vmatpush.bf16.msra.mxu0 0
    %3646 = vmatpush.bf16.msra.mxu0 %v3433
    %3647 = vmatpush.bf16.msra.mxu0 %v3417
    %3648 = vmatmul.bf16.gmra.mxu0 %v3470
    %v3649 = vpop.f32.mrf.mxu0
    %v3650 = vadd.f32 %v3289, %v3649
    %v3651 = vpop.f32.mrf.mxu0
    %v3652 = vadd.f32 %v3289, %v3651
    %3653 = vdwg.mxu0
    %3654 = vmatpush.bf16.msra.mxu0 0
    %3655 = vmatpush.bf16.msra.mxu0 0
    %3656 = vmatpush.bf16.msra.mxu0 0
    %3657 = vmatpush.bf16.msra.mxu0 0
    %3658 = vmatpush.bf16.msra.mxu0 0
    %3659 = vmatpush.bf16.msra.mxu0 0
    %3660 = vmatpush.bf16.msra.mxu0 %v3434
    %3661 = vmatpush.bf16.msra.mxu0 %v3418
    %3662 = vmatmul.bf16.gmra.mxu0 %v3470
    %v3663 = vpop.f32.mrf.mxu0
    %v3664 = vadd.f32 %v3290, %v3663
    %v3665 = vpop.f32.mrf.mxu0
    %v3666 = vadd.f32 %v3290, %v3665
    %3667 = vdwg.mxu0
    %3668 = vmatpush.bf16.msra.mxu0 0
    %3669 = vmatpush.bf16.msra.mxu0 0
    %3670 = vmatpush.bf16.msra.mxu0 0
    %3671 = vmatpush.bf16.msra.mxu0 0
    %3672 = vmatpush.bf16.msra.mxu0 0
    %3673 = vmatpush.bf16.msra.mxu0 0
    %3674 = vmatpush.bf16.msra.mxu0 %v3435
    %3675 = vmatpush.bf16.msra.mxu0 %v3419
    %3676 = vmatmul.bf16.gmra.mxu0 %v3470
    %v3677 = vpop.f32.mrf.mxu0
    %v3678 = vadd.f32 %v3291, %v3677
    %v3679 = vpop.f32.mrf.mxu0
    %v3680 = vadd.f32 %v3291, %v3679
    %3681 = vdwg.mxu0
    %3682 = vmatpush.bf16.msra.mxu0 0
    %3683 = vmatpush.bf16.msra.mxu0 0
    %3684 = vmatpush.bf16.msra.mxu0 0
    %3685 = vmatpush.bf16.msra.mxu0 0
    %3686 = vmatpush.bf16.msra.mxu0 0
    %3687 = vmatpush.bf16.msra.mxu0 0
    %3688 = vmatpush.bf16.msra.mxu0 %v3436
    %3689 = vmatpush.bf16.msra.mxu0 %v3420
    %3690 = vmatmul.bf16.gmra.mxu0 %v3470
    %v3691 = vpop.f32.mrf.mxu0
    %v3692 = vadd.f32 %v3292, %v3691
    %v3693 = vpop.f32.mrf.mxu0
    %v3694 = vadd.f32 %v3292, %v3693
    %3695 = vdwg.mxu0
    %v3696 = vmax.f32 %v3482, 0.0
    %v3697 = vmax.f32 %v3496, 0.0
    %v3698 = vmax.f32 %v3510, 0.0
    %v3699 = vmax.f32 %v3524, 0.0
    %v3700 = vmax.f32 %v3538, 0.0
    %v3701 = vmax.f32 %v3552, 0.0
    %v3702 = vmax.f32 %v3566, 0.0
    %v3703 = vmax.f32 %v3580, 0.0
    %v3704 = vmax.f32 %v3594, 0.0
    %v3705 = vmax.f32 %v3608, 0.0
    %v3706 = vmax.f32 %v3622, 0.0
    %v3707 = vmax.f32 %v3636, 0.0
    %v3708 = vmax.f32 %v3650, 0.0
    %v3709 = vmax.f32 %v3664, 0.0
    %v3710 = vmax.f32 %v3678, 0.0
    %v3711 = vmax.f32 %v3692, 0.0
    %v3712 = vmax.f32 %v3484, 0.0
    %v3713 = vmax.f32 %v3498, 0.0
    %v3714 = vmax.f32 %v3512, 0.0
    %v3715 = vmax.f32 %v3526, 0.0
    %v3716 = vmax.f32 %v3540, 0.0
    %v3717 = vmax.f32 %v3554, 0.0
    %v3718 = vmax.f32 %v3568, 0.0
    %v3719 = vmax.f32 %v3582, 0.0
    %v3720 = vmax.f32 %v3596, 0.0
    %v3721 = vmax.f32 %v3610, 0.0
    %v3722 = vmax.f32 %v3624, 0.0
    %v3723 = vmax.f32 %v3638, 0.0
    %v3724 = vmax.f32 %v3652, 0.0
    %v3725 = vmax.f32 %v3666, 0.0
    %v3726 = vmax.f32 %v3680, 0.0
    %v3727 = vmax.f32 %v3694, 0.0
    %v3728 = vpack.c.bf16 %v3712, %v3696
    %v3729 = vpack.c.bf16 %v3713, %v3697
    %v3730 = vpack.c.bf16 %v3714, %v3698
    %v3731 = vpack.c.bf16 %v3715, %v3699
    %v3732 = vpack.c.bf16 %v3716, %v3700
    %v3733 = vpack.c.bf16 %v3717, %v3701
    %v3734 = vpack.c.bf16 %v3718, %v3702
    %v3735 = vpack.c.bf16 %v3719, %v3703
    %v3736 = vpack.c.bf16 %v3720, %v3704
    %v3737 = vpack.c.bf16 %v3721, %v3705
    %v3738 = vpack.c.bf16 %v3722, %v3706
    %v3739 = vpack.c.bf16 %v3723, %v3707
    %v3740 = vpack.c.bf16 %v3724, %v3708
    %v3741 = vpack.c.bf16 %v3725, %v3709
    %v3742 = vpack.c.bf16 %v3726, %v3710
    %v3743 = vpack.c.bf16 %v3727, %v3711
    %v3744 = vld [vmem:[%s21] sm:$0xf]
    %v3745 = vld [vmem:[%s21 + $0x4] sm:$0xf]
    %v3746 = vld [vmem:[%s21 + $0x8] sm:$0xf]
    %v3747 = vld [vmem:[%s21 + $0xc] sm:$0xf]
    %v3748 = vld [vmem:[%s21 + $0x10] sm:$0xf]
    %v3749 = vld [vmem:[%s21 + $0x14] sm:$0xf]
    %v3750 = vld [vmem:[%s21 + $0x18] sm:$0xf]
    %v3751 = vld [vmem:[%s21 + $0x1c] sm:$0xf]
    %v3752 = vld [vmem:[%s21 + $0x20] sm:$0xf]
    %v3753 = vld [vmem:[%s21 + $0x24] sm:$0xf]
    %v3754 = vld [vmem:[%s21 + $0x28] sm:$0xf]
    %v3755 = vld [vmem:[%s21 + $0x2c] sm:$0xf]
    %v3756 = vld [vmem:[%s21 + $0x30] sm:$0xf]
    %v3757 = vld [vmem:[%s21 + $0x34] sm:$0xf]
    %v3758 = vld [vmem:[%s21 + $0x38] sm:$0xf]
    %v3759 = vld [vmem:[%s21 + $0x3c] sm:$0xf]
    %v3760 = vld [vmem:[%s21 + $0x40] sm:$0xf]
    %v3761 = vld [vmem:[%s21 + $0x44] sm:$0xf]
    %v3762 = vld [vmem:[%s21 + $0x48] sm:$0xf]
    %v3763 = vld [vmem:[%s21 + $0x4c] sm:$0xf]
    %v3764 = vld [vmem:[%s21 + $0x50] sm:$0xf]
    %v3765 = vld [vmem:[%s21 + $0x54] sm:$0xf]
    %v3766 = vld [vmem:[%s21 + $0x58] sm:$0xf]
    %v3767 = vld [vmem:[%s21 + $0x5c] sm:$0xf]
    %v3768 = vld [vmem:[%s21 + $0x60] sm:$0xf]
    %v3769 = vld [vmem:[%s21 + $0x64] sm:$0xf]
    %v3770 = vld [vmem:[%s21 + $0x68] sm:$0xf]
    %v3771 = vld [vmem:[%s21 + $0x6c] sm:$0xf]
    %v3772 = vld [vmem:[%s21 + $0x70] sm:$0xf]
    %v3773 = vld [vmem:[%s21 + $0x74] sm:$0xf]
    %v3774 = vld [vmem:[%s21 + $0x78] sm:$0xf]
    %v3775 = vld [vmem:[%s21 + $0x7c] sm:$0xf]
    %v3776 = vld [vmem:[%s21 + $0x80] sm:$0xf]
    %v3777 = vld [vmem:[%s21 + $0x84] sm:$0xf]
    %v3778 = vld [vmem:[%s21 + $0x88] sm:$0xf]
    %v3779 = vld [vmem:[%s21 + $0x8c] sm:$0xf]
    %v3780 = vld [vmem:[%s21 + $0x90] sm:$0xf]
    %v3781 = vld [vmem:[%s21 + $0x94] sm:$0xf]
    %v3782 = vld [vmem:[%s21 + $0x98] sm:$0xf]
    %v3783 = vld [vmem:[%s21 + $0x9c] sm:$0xf]
    %v3784 = vld [vmem:[%s21 + $0xa0] sm:$0xf]
    %v3785 = vld [vmem:[%s21 + $0xa4] sm:$0xf]
    %v3786 = vld [vmem:[%s21 + $0xa8] sm:$0xf]
    %v3787 = vld [vmem:[%s21 + $0xac] sm:$0xf]
    %v3788 = vld [vmem:[%s21 + $0xb0] sm:$0xf]
    %v3789 = vld [vmem:[%s21 + $0xb4] sm:$0xf]
    %v3790 = vld [vmem:[%s21 + $0xb8] sm:$0xf]
    %v3791 = vld [vmem:[%s21 + $0xbc] sm:$0xf]
    %v3792 = vld [vmem:[%s21 + $0xc0] sm:$0xf]
    %v3793 = vld [vmem:[%s21 + $0xc4] sm:$0xf]
    %v3794 = vld [vmem:[%s21 + $0xc8] sm:$0xf]
    %v3795 = vld [vmem:[%s21 + $0xcc] sm:$0xf]
    %v3796 = vld [vmem:[%s21 + $0xd0] sm:$0xf]
    %v3797 = vld [vmem:[%s21 + $0xd4] sm:$0xf]
    %v3798 = vld [vmem:[%s21 + $0xd8] sm:$0xf]
    %v3799 = vld [vmem:[%s21 + $0xdc] sm:$0xf]
    %v3800 = vld [vmem:[%s21 + $0xe0] sm:$0xf]
    %v3801 = vld [vmem:[%s21 + $0xe4] sm:$0xf]
    %v3802 = vld [vmem:[%s21 + $0xe8] sm:$0xf]
    %v3803 = vld [vmem:[%s21 + $0xec] sm:$0xf]
    %v3804 = vld [vmem:[%s21 + $0xf0] sm:$0xf]
    %v3805 = vld [vmem:[%s21 + $0xf4] sm:$0xf]
    %v3806 = vld [vmem:[%s21 + $0xf8] sm:$0xf]
    %v3807 = vld [vmem:[%s21 + $0xfc] sm:$0xf]
    %v3808 = vld [vmem:[%s21 + $0x100] sm:$0xf]
    %v3809 = vld [vmem:[%s21 + $0x104] sm:$0xf]
    %v3810 = vld [vmem:[%s21 + $0x108] sm:$0xf]
    %v3811 = vld [vmem:[%s21 + $0x10c] sm:$0xf]
    %v3812 = vld [vmem:[%s21 + $0x110] sm:$0xf]
    %v3813 = vld [vmem:[%s21 + $0x114] sm:$0xf]
    %v3814 = vld [vmem:[%s21 + $0x118] sm:$0xf]
    %v3815 = vld [vmem:[%s21 + $0x11c] sm:$0xf]
    %v3816 = vld [vmem:[%s21 + $0x120] sm:$0xf]
    %v3817 = vld [vmem:[%s21 + $0x124] sm:$0xf]
    %v3818 = vld [vmem:[%s21 + $0x128] sm:$0xf]
    %v3819 = vld [vmem:[%s21 + $0x12c] sm:$0xf]
    %v3820 = vld [vmem:[%s21 + $0x130] sm:$0xf]
    %v3821 = vld [vmem:[%s21 + $0x134] sm:$0xf]
    %v3822 = vld [vmem:[%s21 + $0x138] sm:$0xf]
    %v3823 = vld [vmem:[%s21 + $0x13c] sm:$0xf]
    %v3824 = vld [vmem:[%s21 + $0x140] sm:$0xf]
    %v3825 = vld [vmem:[%s21 + $0x144] sm:$0xf]
    %v3826 = vld [vmem:[%s21 + $0x148] sm:$0xf]
    %v3827 = vld [vmem:[%s21 + $0x14c] sm:$0xf]
    %v3828 = vld [vmem:[%s21 + $0x150] sm:$0xf]
    %v3829 = vld [vmem:[%s21 + $0x154] sm:$0xf]
    %v3830 = vld [vmem:[%s21 + $0x158] sm:$0xf]
    %v3831 = vld [vmem:[%s21 + $0x15c] sm:$0xf]
    %v3832 = vld [vmem:[%s21 + $0x160] sm:$0xf]
    %v3833 = vld [vmem:[%s21 + $0x164] sm:$0xf]
    %v3834 = vld [vmem:[%s21 + $0x168] sm:$0xf]
    %v3835 = vld [vmem:[%s21 + $0x16c] sm:$0xf]
    %v3836 = vld [vmem:[%s21 + $0x170] sm:$0xf]
    %v3837 = vld [vmem:[%s21 + $0x174] sm:$0xf]
    %v3838 = vld [vmem:[%s21 + $0x178] sm:$0xf]
    %v3839 = vld [vmem:[%s21 + $0x17c] sm:$0xf]
    %v3840 = vld [vmem:[%s21 + $0x180] sm:$0xf]
    %v3841 = vld [vmem:[%s21 + $0x184] sm:$0xf]
    %v3842 = vld [vmem:[%s21 + $0x188] sm:$0xf]
    %v3843 = vld [vmem:[%s21 + $0x18c] sm:$0xf]
    %v3844 = vld [vmem:[%s21 + $0x190] sm:$0xf]
    %v3845 = vld [vmem:[%s21 + $0x194] sm:$0xf]
    %v3846 = vld [vmem:[%s21 + $0x198] sm:$0xf]
    %v3847 = vld [vmem:[%s21 + $0x19c] sm:$0xf]
    %v3848 = vld [vmem:[%s21 + $0x1a0] sm:$0xf]
    %v3849 = vld [vmem:[%s21 + $0x1a4] sm:$0xf]
    %v3850 = vld [vmem:[%s21 + $0x1a8] sm:$0xf]
    %v3851 = vld [vmem:[%s21 + $0x1ac] sm:$0xf]
    %v3852 = vld [vmem:[%s21 + $0x1b0] sm:$0xf]
    %v3853 = vld [vmem:[%s21 + $0x1b4] sm:$0xf]
    %v3854 = vld [vmem:[%s21 + $0x1b8] sm:$0xf]
    %v3855 = vld [vmem:[%s21 + $0x1bc] sm:$0xf]
    %v3856 = vld [vmem:[%s21 + $0x1c0] sm:$0xf]
    %v3857 = vld [vmem:[%s21 + $0x1c4] sm:$0xf]
    %v3858 = vld [vmem:[%s21 + $0x1c8] sm:$0xf]
    %v3859 = vld [vmem:[%s21 + $0x1cc] sm:$0xf]
    %v3860 = vld [vmem:[%s21 + $0x1d0] sm:$0xf]
    %v3861 = vld [vmem:[%s21 + $0x1d4] sm:$0xf]
    %v3862 = vld [vmem:[%s21 + $0x1d8] sm:$0xf]
    %v3863 = vld [vmem:[%s21 + $0x1dc] sm:$0xf]
    %v3864 = vld [vmem:[%s21 + $0x1e0] sm:$0xf]
    %v3865 = vld [vmem:[%s21 + $0x1e4] sm:$0xf]
    %v3866 = vld [vmem:[%s21 + $0x1e8] sm:$0xf]
    %v3867 = vld [vmem:[%s21 + $0x1ec] sm:$0xf]
    %v3868 = vld [vmem:[%s21 + $0x1f0] sm:$0xf]
    %v3869 = vld [vmem:[%s21 + $0x1f4] sm:$0xf]
    %v3870 = vld [vmem:[%s21 + $0x1f8] sm:$0xf]
    %v3871 = vld [vmem:[%s21 + $0x1fc] sm:$0xf]
    %v3872 = vld [vmem:[%s21 + $0x200] sm:$0xf]
    %v3873 = vld [vmem:[%s21 + $0x204] sm:$0xf]
    %v3874 = vld [vmem:[%s21 + $0x208] sm:$0xf]
    %v3875 = vld [vmem:[%s21 + $0x20c] sm:$0xf]
    %v3876 = vld [vmem:[%s21 + $0x210] sm:$0xf]
    %v3877 = vld [vmem:[%s21 + $0x214] sm:$0xf]
    %v3878 = vld [vmem:[%s21 + $0x218] sm:$0xf]
    %v3879 = vld [vmem:[%s21 + $0x21c] sm:$0xf]
    %v3880 = vld [vmem:[%s21 + $0x220] sm:$0xf]
    %v3881 = vld [vmem:[%s21 + $0x224] sm:$0xf]
    %v3882 = vld [vmem:[%s21 + $0x228] sm:$0xf]
    %v3883 = vld [vmem:[%s21 + $0x22c] sm:$0xf]
    %v3884 = vld [vmem:[%s21 + $0x230] sm:$0xf]
    %v3885 = vld [vmem:[%s21 + $0x234] sm:$0xf]
    %v3886 = vld [vmem:[%s21 + $0x238] sm:$0xf]
    %v3887 = vld [vmem:[%s21 + $0x23c] sm:$0xf]
    %v3888 = vld [vmem:[%s21 + $0x240] sm:$0xf]
    %v3889 = vld [vmem:[%s21 + $0x244] sm:$0xf]
    %v3890 = vld [vmem:[%s21 + $0x248] sm:$0xf]
    %v3891 = vld [vmem:[%s21 + $0x24c] sm:$0xf]
    %v3892 = vld [vmem:[%s21 + $0x250] sm:$0xf]
    %v3893 = vld [vmem:[%s21 + $0x254] sm:$0xf]
    %v3894 = vld [vmem:[%s21 + $0x258] sm:$0xf]
    %v3895 = vld [vmem:[%s21 + $0x25c] sm:$0xf]
    %v3896 = vld [vmem:[%s21 + $0x260] sm:$0xf]
    %v3897 = vld [vmem:[%s21 + $0x264] sm:$0xf]
    %v3898 = vld [vmem:[%s21 + $0x268] sm:$0xf]
    %v3899 = vld [vmem:[%s21 + $0x26c] sm:$0xf]
    %v3900 = vld [vmem:[%s21 + $0x270] sm:$0xf]
    %v3901 = vld [vmem:[%s21 + $0x274] sm:$0xf]
    %v3902 = vld [vmem:[%s21 + $0x278] sm:$0xf]
    %v3903 = vld [vmem:[%s21 + $0x27c] sm:$0xf]
    %v3904 = vld [vmem:[%s21 + $0x280] sm:$0xf]
    %v3905 = vld [vmem:[%s21 + $0x284] sm:$0xf]
    %v3906 = vld [vmem:[%s21 + $0x288] sm:$0xf]
    %v3907 = vld [vmem:[%s21 + $0x28c] sm:$0xf]
    %v3908 = vld [vmem:[%s21 + $0x290] sm:$0xf]
    %v3909 = vld [vmem:[%s21 + $0x294] sm:$0xf]
    %v3910 = vld [vmem:[%s21 + $0x298] sm:$0xf]
    %v3911 = vld [vmem:[%s21 + $0x29c] sm:$0xf]
    %v3912 = vld [vmem:[%s21 + $0x2a0] sm:$0xf]
    %v3913 = vld [vmem:[%s21 + $0x2a4] sm:$0xf]
    %v3914 = vld [vmem:[%s21 + $0x2a8] sm:$0xf]
    %v3915 = vld [vmem:[%s21 + $0x2ac] sm:$0xf]
    %v3916 = vld [vmem:[%s21 + $0x2b0] sm:$0xf]
    %v3917 = vld [vmem:[%s21 + $0x2b4] sm:$0xf]
    %v3918 = vld [vmem:[%s21 + $0x2b8] sm:$0xf]
    %v3919 = vld [vmem:[%s21 + $0x2bc] sm:$0xf]
    %v3920 = vld [vmem:[%s21 + $0x2c0] sm:$0xf]
    %v3921 = vld [vmem:[%s21 + $0x2c4] sm:$0xf]
    %v3922 = vld [vmem:[%s21 + $0x2c8] sm:$0xf]
    %v3923 = vld [vmem:[%s21 + $0x2cc] sm:$0xf]
    %v3924 = vld [vmem:[%s21 + $0x2d0] sm:$0xf]
    %v3925 = vld [vmem:[%s21 + $0x2d4] sm:$0xf]
    %v3926 = vld [vmem:[%s21 + $0x2d8] sm:$0xf]
    %v3927 = vld [vmem:[%s21 + $0x2dc] sm:$0xf]
    %v3928 = vld [vmem:[%s21 + $0x2e0] sm:$0xf]
    %v3929 = vld [vmem:[%s21 + $0x2e4] sm:$0xf]
    %v3930 = vld [vmem:[%s21 + $0x2e8] sm:$0xf]
    %v3931 = vld [vmem:[%s21 + $0x2ec] sm:$0xf]
    %v3932 = vld [vmem:[%s21 + $0x2f0] sm:$0xf]
    %v3933 = vld [vmem:[%s21 + $0x2f4] sm:$0xf]
    %v3934 = vld [vmem:[%s21 + $0x2f8] sm:$0xf]
    %v3935 = vld [vmem:[%s21 + $0x2fc] sm:$0xf]
    %v3936 = vld [vmem:[%s21 + $0x300] sm:$0xf]
    %v3937 = vld [vmem:[%s21 + $0x304] sm:$0xf]
    %v3938 = vld [vmem:[%s21 + $0x308] sm:$0xf]
    %v3939 = vld [vmem:[%s21 + $0x30c] sm:$0xf]
    %v3940 = vld [vmem:[%s21 + $0x310] sm:$0xf]
    %v3941 = vld [vmem:[%s21 + $0x314] sm:$0xf]
    %v3942 = vld [vmem:[%s21 + $0x318] sm:$0xf]
    %v3943 = vld [vmem:[%s21 + $0x31c] sm:$0xf]
    %v3944 = vld [vmem:[%s21 + $0x320] sm:$0xf]
    %v3945 = vld [vmem:[%s21 + $0x324] sm:$0xf]
    %v3946 = vld [vmem:[%s21 + $0x328] sm:$0xf]
    %v3947 = vld [vmem:[%s21 + $0x32c] sm:$0xf]
    %v3948 = vld [vmem:[%s21 + $0x330] sm:$0xf]
    %v3949 = vld [vmem:[%s21 + $0x334] sm:$0xf]
    %v3950 = vld [vmem:[%s21 + $0x338] sm:$0xf]
    %v3951 = vld [vmem:[%s21 + $0x33c] sm:$0xf]
    %v3952 = vld [vmem:[%s21 + $0x340] sm:$0xf]
    %v3953 = vld [vmem:[%s21 + $0x344] sm:$0xf]
    %v3954 = vld [vmem:[%s21 + $0x348] sm:$0xf]
    %v3955 = vld [vmem:[%s21 + $0x34c] sm:$0xf]
    %v3956 = vld [vmem:[%s21 + $0x350] sm:$0xf]
    %v3957 = vld [vmem:[%s21 + $0x354] sm:$0xf]
    %v3958 = vld [vmem:[%s21 + $0x358] sm:$0xf]
    %v3959 = vld [vmem:[%s21 + $0x35c] sm:$0xf]
    %v3960 = vld [vmem:[%s21 + $0x360] sm:$0xf]
    %v3961 = vld [vmem:[%s21 + $0x364] sm:$0xf]
    %v3962 = vld [vmem:[%s21 + $0x368] sm:$0xf]
    %v3963 = vld [vmem:[%s21 + $0x36c] sm:$0xf]
    %v3964 = vld [vmem:[%s21 + $0x370] sm:$0xf]
    %v3965 = vld [vmem:[%s21 + $0x374] sm:$0xf]
    %v3966 = vld [vmem:[%s21 + $0x378] sm:$0xf]
    %v3967 = vld [vmem:[%s21 + $0x37c] sm:$0xf]
    %v3968 = vld [vmem:[%s21 + $0x380] sm:$0xf]
    %v3969 = vld [vmem:[%s21 + $0x384] sm:$0xf]
    %v3970 = vld [vmem:[%s21 + $0x388] sm:$0xf]
    %v3971 = vld [vmem:[%s21 + $0x38c] sm:$0xf]
    %v3972 = vld [vmem:[%s21 + $0x390] sm:$0xf]
    %v3973 = vld [vmem:[%s21 + $0x394] sm:$0xf]
    %v3974 = vld [vmem:[%s21 + $0x398] sm:$0xf]
    %v3975 = vld [vmem:[%s21 + $0x39c] sm:$0xf]
    %v3976 = vld [vmem:[%s21 + $0x3a0] sm:$0xf]
    %v3977 = vld [vmem:[%s21 + $0x3a4] sm:$0xf]
    %v3978 = vld [vmem:[%s21 + $0x3a8] sm:$0xf]
    %v3979 = vld [vmem:[%s21 + $0x3ac] sm:$0xf]
    %v3980 = vld [vmem:[%s21 + $0x3b0] sm:$0xf]
    %v3981 = vld [vmem:[%s21 + $0x3b4] sm:$0xf]
    %v3982 = vld [vmem:[%s21 + $0x3b8] sm:$0xf]
    %v3983 = vld [vmem:[%s21 + $0x3bc] sm:$0xf]
    %v3984 = vld [vmem:[%s21 + $0x3c0] sm:$0xf]
    %v3985 = vld [vmem:[%s21 + $0x3c4] sm:$0xf]
    %v3986 = vld [vmem:[%s21 + $0x3c8] sm:$0xf]
    %v3987 = vld [vmem:[%s21 + $0x3cc] sm:$0xf]
    %v3988 = vld [vmem:[%s21 + $0x3d0] sm:$0xf]
    %v3989 = vld [vmem:[%s21 + $0x3d4] sm:$0xf]
    %v3990 = vld [vmem:[%s21 + $0x3d8] sm:$0xf]
    %v3991 = vld [vmem:[%s21 + $0x3dc] sm:$0xf]
    %v3992 = vld [vmem:[%s21 + $0x3e0] sm:$0xf]
    %v3993 = vld [vmem:[%s21 + $0x3e4] sm:$0xf]
    %v3994 = vld [vmem:[%s21 + $0x3e8] sm:$0xf]
    %v3995 = vld [vmem:[%s21 + $0x3ec] sm:$0xf]
    %v3996 = vld [vmem:[%s21 + $0x3f0] sm:$0xf]
    %v3997 = vld [vmem:[%s21 + $0x3f4] sm:$0xf]
    %v3998 = vld [vmem:[%s21 + $0x3f8] sm:$0xf]
    %v3999 = vld [vmem:[%s21 + $0x3fc] sm:$0xf]
    %v4000 = vld [vmem:[%s22] sm:$0x1]
    %v4002 = vperm.slane %v4000, 0
    %v4260 = vunpack.c.l.b16 %v3744
    %v4261 = vunpack.c.l.b16 %v3745
    %v4262 = vunpack.c.l.b16 %v3746
    %v4263 = vunpack.c.l.b16 %v3747
    %v4264 = vunpack.c.l.b16 %v3748
    %v4265 = vunpack.c.l.b16 %v3749
    %v4266 = vunpack.c.l.b16 %v3750
    %v4267 = vunpack.c.l.b16 %v3751
    %v4268 = vunpack.c.l.b16 %v3752
    %v4269 = vunpack.c.l.b16 %v3753
    %v4270 = vunpack.c.l.b16 %v3754
    %v4271 = vunpack.c.l.b16 %v3755
    %v4272 = vunpack.c.l.b16 %v3756
    %v4273 = vunpack.c.l.b16 %v3757
    %v4274 = vunpack.c.l.b16 %v3758
    %v4275 = vunpack.c.l.b16 %v3759
    %v4276 = vunpack.c.l.b16 %v3760
    %v4277 = vunpack.c.l.b16 %v3761
    %v4278 = vunpack.c.l.b16 %v3762
    %v4279 = vunpack.c.l.b16 %v3763
    %v4280 = vunpack.c.l.b16 %v3764
    %v4281 = vunpack.c.l.b16 %v3765
    %v4282 = vunpack.c.l.b16 %v3766
    %v4283 = vunpack.c.l.b16 %v3767
    %v4284 = vunpack.c.l.b16 %v3768
    %v4285 = vunpack.c.l.b16 %v3769
    %v4286 = vunpack.c.l.b16 %v3770
    %v4287 = vunpack.c.l.b16 %v3771
    %v4288 = vunpack.c.l.b16 %v3772
    %v4289 = vunpack.c.l.b16 %v3773
    %v4290 = vunpack.c.l.b16 %v3774
    %v4291 = vunpack.c.l.b16 %v3775
    %v4292 = vunpack.c.l.b16 %v3776
    %v4293 = vunpack.c.l.b16 %v3777
    %v4294 = vunpack.c.l.b16 %v3778
    %v4295 = vunpack.c.l.b16 %v3779
    %v4296 = vunpack.c.l.b16 %v3780
    %v4297 = vunpack.c.l.b16 %v3781
    %v4298 = vunpack.c.l.b16 %v3782
    %v4299 = vunpack.c.l.b16 %v3783
    %v4300 = vunpack.c.l.b16 %v3784
    %v4301 = vunpack.c.l.b16 %v3785
    %v4302 = vunpack.c.l.b16 %v3786
    %v4303 = vunpack.c.l.b16 %v3787
    %v4304 = vunpack.c.l.b16 %v3788
    %v4305 = vunpack.c.l.b16 %v3789
    %v4306 = vunpack.c.l.b16 %v3790
    %v4307 = vunpack.c.l.b16 %v3791
    %v4308 = vunpack.c.l.b16 %v3792
    %v4309 = vunpack.c.l.b16 %v3793
    %v4310 = vunpack.c.l.b16 %v3794
    %v4311 = vunpack.c.l.b16 %v3795
    %v4312 = vunpack.c.l.b16 %v3796
    %v4313 = vunpack.c.l.b16 %v3797
    %v4314 = vunpack.c.l.b16 %v3798
    %v4315 = vunpack.c.l.b16 %v3799
    %v4316 = vunpack.c.l.b16 %v3800
    %v4317 = vunpack.c.l.b16 %v3801
    %v4318 = vunpack.c.l.b16 %v3802
    %v4319 = vunpack.c.l.b16 %v3803
    %v4320 = vunpack.c.l.b16 %v3804
    %v4321 = vunpack.c.l.b16 %v3805
    %v4322 = vunpack.c.l.b16 %v3806
    %v4323 = vunpack.c.l.b16 %v3807
    %v4324 = vunpack.c.l.b16 %v3808
    %v4325 = vunpack.c.l.b16 %v3809
    %v4326 = vunpack.c.l.b16 %v3810
    %v4327 = vunpack.c.l.b16 %v3811
    %v4328 = vunpack.c.l.b16 %v3812
    %v4329 = vunpack.c.l.b16 %v3813
    %v4330 = vunpack.c.l.b16 %v3814
    %v4331 = vunpack.c.l.b16 %v3815
    %v4332 = vunpack.c.l.b16 %v3816
    %v4333 = vunpack.c.l.b16 %v3817
    %v4334 = vunpack.c.l.b16 %v3818
    %v4335 = vunpack.c.l.b16 %v3819
    %v4336 = vunpack.c.l.b16 %v3820
    %v4337 = vunpack.c.l.b16 %v3821
    %v4338 = vunpack.c.l.b16 %v3822
    %v4339 = vunpack.c.l.b16 %v3823
    %v4340 = vunpack.c.l.b16 %v3824
    %v4341 = vunpack.c.l.b16 %v3825
    %v4342 = vunpack.c.l.b16 %v3826
    %v4343 = vunpack.c.l.b16 %v3827
    %v4344 = vunpack.c.l.b16 %v3828
    %v4345 = vunpack.c.l.b16 %v3829
    %v4346 = vunpack.c.l.b16 %v3830
    %v4347 = vunpack.c.l.b16 %v3831
    %v4348 = vunpack.c.l.b16 %v3832
    %v4349 = vunpack.c.l.b16 %v3833
    %v4350 = vunpack.c.l.b16 %v3834
    %v4351 = vunpack.c.l.b16 %v3835
    %v4352 = vunpack.c.l.b16 %v3836
    %v4353 = vunpack.c.l.b16 %v3837
    %v4354 = vunpack.c.l.b16 %v3838
    %v4355 = vunpack.c.l.b16 %v3839
    %v4356 = vunpack.c.l.b16 %v3840
    %v4357 = vunpack.c.l.b16 %v3841
    %v4358 = vunpack.c.l.b16 %v3842
    %v4359 = vunpack.c.l.b16 %v3843
    %v4360 = vunpack.c.l.b16 %v3844
    %v4361 = vunpack.c.l.b16 %v3845
    %v4362 = vunpack.c.l.b16 %v3846
    %v4363 = vunpack.c.l.b16 %v3847
    %v4364 = vunpack.c.l.b16 %v3848
    %v4365 = vunpack.c.l.b16 %v3849
    %v4366 = vunpack.c.l.b16 %v3850
    %v4367 = vunpack.c.l.b16 %v3851
    %v4368 = vunpack.c.l.b16 %v3852
    %v4369 = vunpack.c.l.b16 %v3853
    %v4370 = vunpack.c.l.b16 %v3854
    %v4371 = vunpack.c.l.b16 %v3855
    %v4372 = vunpack.c.l.b16 %v3856
    %v4373 = vunpack.c.l.b16 %v3857
    %v4374 = vunpack.c.l.b16 %v3858
    %v4375 = vunpack.c.l.b16 %v3859
    %v4376 = vunpack.c.l.b16 %v3860
    %v4377 = vunpack.c.l.b16 %v3861
    %v4378 = vunpack.c.l.b16 %v3862
    %v4379 = vunpack.c.l.b16 %v3863
    %v4380 = vunpack.c.l.b16 %v3864
    %v4381 = vunpack.c.l.b16 %v3865
    %v4382 = vunpack.c.l.b16 %v3866
    %v4383 = vunpack.c.l.b16 %v3867
    %v4384 = vunpack.c.l.b16 %v3868
    %v4385 = vunpack.c.l.b16 %v3869
    %v4386 = vunpack.c.l.b16 %v3870
    %v4387 = vunpack.c.l.b16 %v3871
    %v4388 = vunpack.c.l.b16 %v3872
    %v4389 = vunpack.c.l.b16 %v3873
    %v4390 = vunpack.c.l.b16 %v3874
    %v4391 = vunpack.c.l.b16 %v3875
    %v4392 = vunpack.c.l.b16 %v3876
    %v4393 = vunpack.c.l.b16 %v3877
    %v4394 = vunpack.c.l.b16 %v3878
    %v4395 = vunpack.c.l.b16 %v3879
    %v4396 = vunpack.c.l.b16 %v3880
    %v4397 = vunpack.c.l.b16 %v3881
    %v4398 = vunpack.c.l.b16 %v3882
    %v4399 = vunpack.c.l.b16 %v3883
    %v4400 = vunpack.c.l.b16 %v3884
    %v4401 = vunpack.c.l.b16 %v3885
    %v4402 = vunpack.c.l.b16 %v3886
    %v4403 = vunpack.c.l.b16 %v3887
    %v4404 = vunpack.c.l.b16 %v3888
    %v4405 = vunpack.c.l.b16 %v3889
    %v4406 = vunpack.c.l.b16 %v3890
    %v4407 = vunpack.c.l.b16 %v3891
    %v4408 = vunpack.c.l.b16 %v3892
    %v4409 = vunpack.c.l.b16 %v3893
    %v4410 = vunpack.c.l.b16 %v3894
    %v4411 = vunpack.c.l.b16 %v3895
    %v4412 = vunpack.c.l.b16 %v3896
    %v4413 = vunpack.c.l.b16 %v3897
    %v4414 = vunpack.c.l.b16 %v3898
    %v4415 = vunpack.c.l.b16 %v3899
    %v4416 = vunpack.c.l.b16 %v3900
    %v4417 = vunpack.c.l.b16 %v3901
    %v4418 = vunpack.c.l.b16 %v3902
    %v4419 = vunpack.c.l.b16 %v3903
    %v4420 = vunpack.c.l.b16 %v3904
    %v4421 = vunpack.c.l.b16 %v3905
    %v4422 = vunpack.c.l.b16 %v3906
    %v4423 = vunpack.c.l.b16 %v3907
    %v4424 = vunpack.c.l.b16 %v3908
    %v4425 = vunpack.c.l.b16 %v3909
    %v4426 = vunpack.c.l.b16 %v3910
    %v4427 = vunpack.c.l.b16 %v3911
    %v4428 = vunpack.c.l.b16 %v3912
    %v4429 = vunpack.c.l.b16 %v3913
    %v4430 = vunpack.c.l.b16 %v3914
    %v4431 = vunpack.c.l.b16 %v3915
    %v4432 = vunpack.c.l.b16 %v3916
    %v4433 = vunpack.c.l.b16 %v3917
    %v4434 = vunpack.c.l.b16 %v3918
    %v4435 = vunpack.c.l.b16 %v3919
    %v4436 = vunpack.c.l.b16 %v3920
    %v4437 = vunpack.c.l.b16 %v3921
    %v4438 = vunpack.c.l.b16 %v3922
    %v4439 = vunpack.c.l.b16 %v3923
    %v4440 = vunpack.c.l.b16 %v3924
    %v4441 = vunpack.c.l.b16 %v3925
    %v4442 = vunpack.c.l.b16 %v3926
    %v4443 = vunpack.c.l.b16 %v3927
    %v4444 = vunpack.c.l.b16 %v3928
    %v4445 = vunpack.c.l.b16 %v3929
    %v4446 = vunpack.c.l.b16 %v3930
    %v4447 = vunpack.c.l.b16 %v3931
    %v4448 = vunpack.c.l.b16 %v3932
    %v4449 = vunpack.c.l.b16 %v3933
    %v4450 = vunpack.c.l.b16 %v3934
    %v4451 = vunpack.c.l.b16 %v3935
    %v4452 = vunpack.c.l.b16 %v3936
    %v4453 = vunpack.c.l.b16 %v3937
    %v4454 = vunpack.c.l.b16 %v3938
    %v4455 = vunpack.c.l.b16 %v3939
    %v4456 = vunpack.c.l.b16 %v3940
    %v4457 = vunpack.c.l.b16 %v3941
    %v4458 = vunpack.c.l.b16 %v3942
    %v4459 = vunpack.c.l.b16 %v3943
    %v4460 = vunpack.c.l.b16 %v3944
    %v4461 = vunpack.c.l.b16 %v3945
    %v4462 = vunpack.c.l.b16 %v3946
    %v4463 = vunpack.c.l.b16 %v3947
    %v4464 = vunpack.c.l.b16 %v3948
    %v4465 = vunpack.c.l.b16 %v3949
    %v4466 = vunpack.c.l.b16 %v3950
    %v4467 = vunpack.c.l.b16 %v3951
    %v4468 = vunpack.c.l.b16 %v3952
    %v4469 = vunpack.c.l.b16 %v3953
    %v4470 = vunpack.c.l.b16 %v3954
    %v4471 = vunpack.c.l.b16 %v3955
    %v4472 = vunpack.c.l.b16 %v3956
    %v4473 = vunpack.c.l.b16 %v3957
    %v4474 = vunpack.c.l.b16 %v3958
    %v4475 = vunpack.c.l.b16 %v3959
    %v4476 = vunpack.c.l.b16 %v3960
    %v4477 = vunpack.c.l.b16 %v3961
    %v4478 = vunpack.c.l.b16 %v3962
    %v4479 = vunpack.c.l.b16 %v3963
    %v4480 = vunpack.c.l.b16 %v3964
    %v4481 = vunpack.c.l.b16 %v3965
    %v4482 = vunpack.c.l.b16 %v3966
    %v4483 = vunpack.c.l.b16 %v3967
    %v4484 = vunpack.c.l.b16 %v3968
    %v4485 = vunpack.c.l.b16 %v3969
    %v4486 = vunpack.c.l.b16 %v3970
    %v4487 = vunpack.c.l.b16 %v3971
    %v4488 = vunpack.c.l.b16 %v3972
    %v4489 = vunpack.c.l.b16 %v3973
    %v4490 = vunpack.c.l.b16 %v3974
    %v4491 = vunpack.c.l.b16 %v3975
    %v4492 = vunpack.c.l.b16 %v3976
    %v4493 = vunpack.c.l.b16 %v3977
    %v4494 = vunpack.c.l.b16 %v3978
    %v4495 = vunpack.c.l.b16 %v3979
    %v4496 = vunpack.c.l.b16 %v3980
    %v4497 = vunpack.c.l.b16 %v3981
    %v4498 = vunpack.c.l.b16 %v3982
    %v4499 = vunpack.c.l.b16 %v3983
    %v4500 = vunpack.c.l.b16 %v3984
    %v4501 = vunpack.c.l.b16 %v3985
    %v4502 = vunpack.c.l.b16 %v3986
    %v4503 = vunpack.c.l.b16 %v3987
    %v4504 = vunpack.c.l.b16 %v3988
    %v4505 = vunpack.c.l.b16 %v3989
    %v4506 = vunpack.c.l.b16 %v3990
    %v4507 = vunpack.c.l.b16 %v3991
    %v4508 = vunpack.c.l.b16 %v3992
    %v4509 = vunpack.c.l.b16 %v3993
    %v4510 = vunpack.c.l.b16 %v3994
    %v4511 = vunpack.c.l.b16 %v3995
    %v4512 = vunpack.c.l.b16 %v3996
    %v4513 = vunpack.c.l.b16 %v3997
    %v4514 = vunpack.c.l.b16 %v3998
    %v4515 = vunpack.c.l.b16 %v3999
    %v4516 = vpack.c.b16 %v4261, %v4260
    %v4517 = vpack.c.b16 %v4263, %v4262
    %v4518 = vpack.c.b16 %v4265, %v4264
    %v4519 = vpack.c.b16 %v4267, %v4266
    %v4520 = vpack.c.b16 %v4269, %v4268
    %v4521 = vpack.c.b16 %v4271, %v4270
    %v4522 = vpack.c.b16 %v4273, %v4272
    %v4523 = vpack.c.b16 %v4275, %v4274
    %v4524 = vpack.c.b16 %v4277, %v4276
    %v4525 = vpack.c.b16 %v4279, %v4278
    %v4526 = vpack.c.b16 %v4281, %v4280
    %v4527 = vpack.c.b16 %v4283, %v4282
    %v4528 = vpack.c.b16 %v4285, %v4284
    %v4529 = vpack.c.b16 %v4287, %v4286
    %v4530 = vpack.c.b16 %v4289, %v4288
    %v4531 = vpack.c.b16 %v4291, %v4290
    %v4532 = vpack.c.b16 %v4293, %v4292
    %v4533 = vpack.c.b16 %v4295, %v4294
    %v4534 = vpack.c.b16 %v4297, %v4296
    %v4535 = vpack.c.b16 %v4299, %v4298
    %v4536 = vpack.c.b16 %v4301, %v4300
    %v4537 = vpack.c.b16 %v4303, %v4302
    %v4538 = vpack.c.b16 %v4305, %v4304
    %v4539 = vpack.c.b16 %v4307, %v4306
    %v4540 = vpack.c.b16 %v4309, %v4308
    %v4541 = vpack.c.b16 %v4311, %v4310
    %v4542 = vpack.c.b16 %v4313, %v4312
    %v4543 = vpack.c.b16 %v4315, %v4314
    %v4544 = vpack.c.b16 %v4317, %v4316
    %v4545 = vpack.c.b16 %v4319, %v4318
    %v4546 = vpack.c.b16 %v4321, %v4320
    %v4547 = vpack.c.b16 %v4323, %v4322
    %v4548 = vpack.c.b16 %v4325, %v4324
    %v4549 = vpack.c.b16 %v4327, %v4326
    %v4550 = vpack.c.b16 %v4329, %v4328
    %v4551 = vpack.c.b16 %v4331, %v4330
    %v4552 = vpack.c.b16 %v4333, %v4332
    %v4553 = vpack.c.b16 %v4335, %v4334
    %v4554 = vpack.c.b16 %v4337, %v4336
    %v4555 = vpack.c.b16 %v4339, %v4338
    %v4556 = vpack.c.b16 %v4341, %v4340
    %v4557 = vpack.c.b16 %v4343, %v4342
    %v4558 = vpack.c.b16 %v4345, %v4344
    %v4559 = vpack.c.b16 %v4347, %v4346
    %v4560 = vpack.c.b16 %v4349, %v4348
    %v4561 = vpack.c.b16 %v4351, %v4350
    %v4562 = vpack.c.b16 %v4353, %v4352
    %v4563 = vpack.c.b16 %v4355, %v4354
    %v4564 = vpack.c.b16 %v4357, %v4356
    %v4565 = vpack.c.b16 %v4359, %v4358
    %v4566 = vpack.c.b16 %v4361, %v4360
    %v4567 = vpack.c.b16 %v4363, %v4362
    %v4568 = vpack.c.b16 %v4365, %v4364
    %v4569 = vpack.c.b16 %v4367, %v4366
    %v4570 = vpack.c.b16 %v4369, %v4368
    %v4571 = vpack.c.b16 %v4371, %v4370
    %v4572 = vpack.c.b16 %v4373, %v4372
    %v4573 = vpack.c.b16 %v4375, %v4374
    %v4574 = vpack.c.b16 %v4377, %v4376
    %v4575 = vpack.c.b16 %v4379, %v4378
    %v4576 = vpack.c.b16 %v4381, %v4380
    %v4577 = vpack.c.b16 %v4383, %v4382
    %v4578 = vpack.c.b16 %v4385, %v4384
    %v4579 = vpack.c.b16 %v4387, %v4386
    %v4580 = vpack.c.b16 %v4389, %v4388
    %v4581 = vpack.c.b16 %v4391, %v4390
    %v4582 = vpack.c.b16 %v4393, %v4392
    %v4583 = vpack.c.b16 %v4395, %v4394
    %v4584 = vpack.c.b16 %v4397, %v4396
    %v4585 = vpack.c.b16 %v4399, %v4398
    %v4586 = vpack.c.b16 %v4401, %v4400
    %v4587 = vpack.c.b16 %v4403, %v4402
    %v4588 = vpack.c.b16 %v4405, %v4404
    %v4589 = vpack.c.b16 %v4407, %v4406
    %v4590 = vpack.c.b16 %v4409, %v4408
    %v4591 = vpack.c.b16 %v4411, %v4410
    %v4592 = vpack.c.b16 %v4413, %v4412
    %v4593 = vpack.c.b16 %v4415, %v4414
    %v4594 = vpack.c.b16 %v4417, %v4416
    %v4595 = vpack.c.b16 %v4419, %v4418
    %v4596 = vpack.c.b16 %v4421, %v4420
    %v4597 = vpack.c.b16 %v4423, %v4422
    %v4598 = vpack.c.b16 %v4425, %v4424
    %v4599 = vpack.c.b16 %v4427, %v4426
    %v4600 = vpack.c.b16 %v4429, %v4428
    %v4601 = vpack.c.b16 %v4431, %v4430
    %v4602 = vpack.c.b16 %v4433, %v4432
    %v4603 = vpack.c.b16 %v4435, %v4434
    %v4604 = vpack.c.b16 %v4437, %v4436
    %v4605 = vpack.c.b16 %v4439, %v4438
    %v4606 = vpack.c.b16 %v4441, %v4440
    %v4607 = vpack.c.b16 %v4443, %v4442
    %v4608 = vpack.c.b16 %v4445, %v4444
    %v4609 = vpack.c.b16 %v4447, %v4446
    %v4610 = vpack.c.b16 %v4449, %v4448
    %v4611 = vpack.c.b16 %v4451, %v4450
    %v4612 = vpack.c.b16 %v4453, %v4452
    %v4613 = vpack.c.b16 %v4455, %v4454
    %v4614 = vpack.c.b16 %v4457, %v4456
    %v4615 = vpack.c.b16 %v4459, %v4458
    %v4616 = vpack.c.b16 %v4461, %v4460
    %v4617 = vpack.c.b16 %v4463, %v4462
    %v4618 = vpack.c.b16 %v4465, %v4464
    %v4619 = vpack.c.b16 %v4467, %v4466
    %v4620 = vpack.c.b16 %v4469, %v4468
    %v4621 = vpack.c.b16 %v4471, %v4470
    %v4622 = vpack.c.b16 %v4473, %v4472
    %v4623 = vpack.c.b16 %v4475, %v4474
    %v4624 = vpack.c.b16 %v4477, %v4476
    %v4625 = vpack.c.b16 %v4479, %v4478
    %v4626 = vpack.c.b16 %v4481, %v4480
    %v4627 = vpack.c.b16 %v4483, %v4482
    %v4628 = vpack.c.b16 %v4485, %v4484
    %v4629 = vpack.c.b16 %v4487, %v4486
    %v4630 = vpack.c.b16 %v4489, %v4488
    %v4631 = vpack.c.b16 %v4491, %v4490
    %v4632 = vpack.c.b16 %v4493, %v4492
    %v4633 = vpack.c.b16 %v4495, %v4494
    %v4634 = vpack.c.b16 %v4497, %v4496
    %v4635 = vpack.c.b16 %v4499, %v4498
    %v4636 = vpack.c.b16 %v4501, %v4500
    %v4637 = vpack.c.b16 %v4503, %v4502
    %v4638 = vpack.c.b16 %v4505, %v4504
    %v4639 = vpack.c.b16 %v4507, %v4506
    %v4640 = vpack.c.b16 %v4509, %v4508
    %v4641 = vpack.c.b16 %v4511, %v4510
    %v4642 = vpack.c.b16 %v4513, %v4512
    %v4643 = vpack.c.b16 %v4515, %v4514
    %4772 = vmatpush.bf16.msra.mxu0 %v4523
    %4773 = vmatpush.bf16.msra.mxu0 %v4522
    %4774 = vmatpush.bf16.msra.mxu0 %v4521
    %4775 = vmatpush.bf16.msra.mxu0 %v4520
    %4776 = vmatpush.bf16.msra.mxu0 %v4519
    %4777 = vmatpush.bf16.msra.mxu0 %v4518
    %4778 = vmatpush.bf16.msra.mxu0 %v4517
    %4779 = vmatpush.bf16.msra.mxu0 %v4516
    %4780 = vmatmul.bf16.gmra.mxu0 %v3728
    %v4781 = vpop.f32.mrf.mxu0
    %v4782 = vadd.f32 %v4002, %v4781
    %v4783 = vpop.f32.mrf.mxu0
    %v4784 = vadd.f32 %v4002, %v4783
    %4785 = vdwg.mxu0
    %4786 = vmatpush.bf16.msra.mxu0 %v4531
    %4787 = vmatpush.bf16.msra.mxu0 %v4530
    %4788 = vmatpush.bf16.msra.mxu0 %v4529
    %4789 = vmatpush.bf16.msra.mxu0 %v4528
    %4790 = vmatpush.bf16.msra.mxu0 %v4527
    %4791 = vmatpush.bf16.msra.mxu0 %v4526
    %4792 = vmatpush.bf16.msra.mxu0 %v4525
    %4793 = vmatpush.bf16.msra.mxu0 %v4524
    %4794 = vmatmul.bf16.gmra.mxu0 %v3729
    %v4795 = vpop.f32.mrf.mxu0
    %v4796 = vadd.f32 %v4782, %v4795
    %v4797 = vpop.f32.mrf.mxu0
    %v4798 = vadd.f32 %v4784, %v4797
    %4799 = vdwg.mxu0
    %4800 = vmatpush.bf16.msra.mxu0 %v4539
    %4801 = vmatpush.bf16.msra.mxu0 %v4538
    %4802 = vmatpush.bf16.msra.mxu0 %v4537
    %4803 = vmatpush.bf16.msra.mxu0 %v4536
    %4804 = vmatpush.bf16.msra.mxu0 %v4535
    %4805 = vmatpush.bf16.msra.mxu0 %v4534
    %4806 = vmatpush.bf16.msra.mxu0 %v4533
    %4807 = vmatpush.bf16.msra.mxu0 %v4532
    %4808 = vmatmul.bf16.gmra.mxu0 %v3730
    %v4809 = vpop.f32.mrf.mxu0
    %v4810 = vadd.f32 %v4796, %v4809
    %v4811 = vpop.f32.mrf.mxu0
    %v4812 = vadd.f32 %v4798, %v4811
    %4813 = vdwg.mxu0
    %4814 = vmatpush.bf16.msra.mxu0 %v4547
    %4815 = vmatpush.bf16.msra.mxu0 %v4546
    %4816 = vmatpush.bf16.msra.mxu0 %v4545
    %4817 = vmatpush.bf16.msra.mxu0 %v4544
    %4818 = vmatpush.bf16.msra.mxu0 %v4543
    %4819 = vmatpush.bf16.msra.mxu0 %v4542
    %4820 = vmatpush.bf16.msra.mxu0 %v4541
    %4821 = vmatpush.bf16.msra.mxu0 %v4540
    %4822 = vmatmul.bf16.gmra.mxu0 %v3731
    %v4823 = vpop.f32.mrf.mxu0
    %v4824 = vadd.f32 %v4810, %v4823
    %v4825 = vpop.f32.mrf.mxu0
    %v4826 = vadd.f32 %v4812, %v4825
    %4827 = vdwg.mxu0
    %4828 = vmatpush.bf16.msra.mxu0 %v4555
    %4829 = vmatpush.bf16.msra.mxu0 %v4554
    %4830 = vmatpush.bf16.msra.mxu0 %v4553
    %4831 = vmatpush.bf16.msra.mxu0 %v4552
    %4832 = vmatpush.bf16.msra.mxu0 %v4551
    %4833 = vmatpush.bf16.msra.mxu0 %v4550
    %4834 = vmatpush.bf16.msra.mxu0 %v4549
    %4835 = vmatpush.bf16.msra.mxu0 %v4548
    %4836 = vmatmul.bf16.gmra.mxu0 %v3732
    %v4837 = vpop.f32.mrf.mxu0
    %v4838 = vadd.f32 %v4824, %v4837
    %v4839 = vpop.f32.mrf.mxu0
    %v4840 = vadd.f32 %v4826, %v4839
    %4841 = vdwg.mxu0
    %4842 = vmatpush.bf16.msra.mxu0 %v4563
    %4843 = vmatpush.bf16.msra.mxu0 %v4562
    %4844 = vmatpush.bf16.msra.mxu0 %v4561
    %4845 = vmatpush.bf16.msra.mxu0 %v4560
    %4846 = vmatpush.bf16.msra.mxu0 %v4559
    %4847 = vmatpush.bf16.msra.mxu0 %v4558
    %4848 = vmatpush.bf16.msra.mxu0 %v4557
    %4849 = vmatpush.bf16.msra.mxu0 %v4556
    %4850 = vmatmul.bf16.gmra.mxu0 %v3733
    %v4851 = vpop.f32.mrf.mxu0
    %v4852 = vadd.f32 %v4838, %v4851
    %v4853 = vpop.f32.mrf.mxu0
    %v4854 = vadd.f32 %v4840, %v4853
    %4855 = vdwg.mxu0
    %4856 = vmatpush.bf16.msra.mxu0 %v4571
    %4857 = vmatpush.bf16.msra.mxu0 %v4570
    %4858 = vmatpush.bf16.msra.mxu0 %v4569
    %4859 = vmatpush.bf16.msra.mxu0 %v4568
    %4860 = vmatpush.bf16.msra.mxu0 %v4567
    %4861 = vmatpush.bf16.msra.mxu0 %v4566
    %4862 = vmatpush.bf16.msra.mxu0 %v4565
    %4863 = vmatpush.bf16.msra.mxu0 %v4564
    %4864 = vmatmul.bf16.gmra.mxu0 %v3734
    %v4865 = vpop.f32.mrf.mxu0
    %v4866 = vadd.f32 %v4852, %v4865
    %v4867 = vpop.f32.mrf.mxu0
    %v4868 = vadd.f32 %v4854, %v4867
    %4869 = vdwg.mxu0
    %4870 = vmatpush.bf16.msra.mxu0 %v4579
    %4871 = vmatpush.bf16.msra.mxu0 %v4578
    %4872 = vmatpush.bf16.msra.mxu0 %v4577
    %4873 = vmatpush.bf16.msra.mxu0 %v4576
    %4874 = vmatpush.bf16.msra.mxu0 %v4575
    %4875 = vmatpush.bf16.msra.mxu0 %v4574
    %4876 = vmatpush.bf16.msra.mxu0 %v4573
    %4877 = vmatpush.bf16.msra.mxu0 %v4572
    %4878 = vmatmul.bf16.gmra.mxu0 %v3735
    %v4879 = vpop.f32.mrf.mxu0
    %v4880 = vadd.f32 %v4866, %v4879
    %v4881 = vpop.f32.mrf.mxu0
    %v4882 = vadd.f32 %v4868, %v4881
    %4883 = vdwg.mxu0
    %4884 = vmatpush.bf16.msra.mxu0 %v4587
    %4885 = vmatpush.bf16.msra.mxu0 %v4586
    %4886 = vmatpush.bf16.msra.mxu0 %v4585
    %4887 = vmatpush.bf16.msra.mxu0 %v4584
    %4888 = vmatpush.bf16.msra.mxu0 %v4583
    %4889 = vmatpush.bf16.msra.mxu0 %v4582
    %4890 = vmatpush.bf16.msra.mxu0 %v4581
    %4891 = vmatpush.bf16.msra.mxu0 %v4580
    %4892 = vmatmul.bf16.gmra.mxu0 %v3736
    %v4893 = vpop.f32.mrf.mxu0
    %v4894 = vadd.f32 %v4880, %v4893
    %v4895 = vpop.f32.mrf.mxu0
    %v4896 = vadd.f32 %v4882, %v4895
    %4897 = vdwg.mxu0
    %4898 = vmatpush.bf16.msra.mxu0 %v4595
    %4899 = vmatpush.bf16.msra.mxu0 %v4594
    %4900 = vmatpush.bf16.msra.mxu0 %v4593
    %4901 = vmatpush.bf16.msra.mxu0 %v4592
    %4902 = vmatpush.bf16.msra.mxu0 %v4591
    %4903 = vmatpush.bf16.msra.mxu0 %v4590
    %4904 = vmatpush.bf16.msra.mxu0 %v4589
    %4905 = vmatpush.bf16.msra.mxu0 %v4588
    %4906 = vmatmul.bf16.gmra.mxu0 %v3737
    %v4907 = vpop.f32.mrf.mxu0
    %v4908 = vadd.f32 %v4894, %v4907
    %v4909 = vpop.f32.mrf.mxu0
    %v4910 = vadd.f32 %v4896, %v4909
    %4911 = vdwg.mxu0
    %4912 = vmatpush.bf16.msra.mxu0 %v4603
    %4913 = vmatpush.bf16.msra.mxu0 %v4602
    %4914 = vmatpush.bf16.msra.mxu0 %v4601
    %4915 = vmatpush.bf16.msra.mxu0 %v4600
    %4916 = vmatpush.bf16.msra.mxu0 %v4599
    %4917 = vmatpush.bf16.msra.mxu0 %v4598
    %4918 = vmatpush.bf16.msra.mxu0 %v4597
    %4919 = vmatpush.bf16.msra.mxu0 %v4596
    %4920 = vmatmul.bf16.gmra.mxu0 %v3738
    %v4921 = vpop.f32.mrf.mxu0
    %v4922 = vadd.f32 %v4908, %v4921
    %v4923 = vpop.f32.mrf.mxu0
    %v4924 = vadd.f32 %v4910, %v4923
    %4925 = vdwg.mxu0
    %4926 = vmatpush.bf16.msra.mxu0 %v4611
    %4927 = vmatpush.bf16.msra.mxu0 %v4610
    %4928 = vmatpush.bf16.msra.mxu0 %v4609
    %4929 = vmatpush.bf16.msra.mxu0 %v4608
    %4930 = vmatpush.bf16.msra.mxu0 %v4607
    %4931 = vmatpush.bf16.msra.mxu0 %v4606
    %4932 = vmatpush.bf16.msra.mxu0 %v4605
    %4933 = vmatpush.bf16.msra.mxu0 %v4604
    %4934 = vmatmul.bf16.gmra.mxu0 %v3739
    %v4935 = vpop.f32.mrf.mxu0
    %v4936 = vadd.f32 %v4922, %v4935
    %v4937 = vpop.f32.mrf.mxu0
    %v4938 = vadd.f32 %v4924, %v4937
    %4939 = vdwg.mxu0
    %4940 = vmatpush.bf16.msra.mxu0 %v4619
    %4941 = vmatpush.bf16.msra.mxu0 %v4618
    %4942 = vmatpush.bf16.msra.mxu0 %v4617
    %4943 = vmatpush.bf16.msra.mxu0 %v4616
    %4944 = vmatpush.bf16.msra.mxu0 %v4615
    %4945 = vmatpush.bf16.msra.mxu0 %v4614
    %4946 = vmatpush.bf16.msra.mxu0 %v4613
    %4947 = vmatpush.bf16.msra.mxu0 %v4612
    %4948 = vmatmul.bf16.gmra.mxu0 %v3740
    %v4949 = vpop.f32.mrf.mxu0
    %v4950 = vadd.f32 %v4936, %v4949
    %v4951 = vpop.f32.mrf.mxu0
    %v4952 = vadd.f32 %v4938, %v4951
    %4953 = vdwg.mxu0
    %4954 = vmatpush.bf16.msra.mxu0 %v4627
    %4955 = vmatpush.bf16.msra.mxu0 %v4626
    %4956 = vmatpush.bf16.msra.mxu0 %v4625
    %4957 = vmatpush.bf16.msra.mxu0 %v4624
    %4958 = vmatpush.bf16.msra.mxu0 %v4623
    %4959 = vmatpush.bf16.msra.mxu0 %v4622
    %4960 = vmatpush.bf16.msra.mxu0 %v4621
    %4961 = vmatpush.bf16.msra.mxu0 %v4620
    %4962 = vmatmul.bf16.gmra.mxu0 %v3741
    %v4963 = vpop.f32.mrf.mxu0
    %v4964 = vadd.f32 %v4950, %v4963
    %v4965 = vpop.f32.mrf.mxu0
    %v4966 = vadd.f32 %v4952, %v4965
    %4967 = vdwg.mxu0
    %4968 = vmatpush.bf16.msra.mxu0 %v4635
    %4969 = vmatpush.bf16.msra.mxu0 %v4634
    %4970 = vmatpush.bf16.msra.mxu0 %v4633
    %4971 = vmatpush.bf16.msra.mxu0 %v4632
    %4972 = vmatpush.bf16.msra.mxu0 %v4631
    %4973 = vmatpush.bf16.msra.mxu0 %v4630
    %4974 = vmatpush.bf16.msra.mxu0 %v4629
    %4975 = vmatpush.bf16.msra.mxu0 %v4628
    %4976 = vmatmul.bf16.gmra.mxu0 %v3742
    %v4977 = vpop.f32.mrf.mxu0
    %v4978 = vadd.f32 %v4964, %v4977
    %v4979 = vpop.f32.mrf.mxu0
    %v4980 = vadd.f32 %v4966, %v4979
    %4981 = vdwg.mxu0
    %4982 = vmatpush.bf16.msra.mxu0 %v4643
    %4983 = vmatpush.bf16.msra.mxu0 %v4642
    %4984 = vmatpush.bf16.msra.mxu0 %v4641
    %4985 = vmatpush.bf16.msra.mxu0 %v4640
    %4986 = vmatpush.bf16.msra.mxu0 %v4639
    %4987 = vmatpush.bf16.msra.mxu0 %v4638
    %4988 = vmatpush.bf16.msra.mxu0 %v4637
    %4989 = vmatpush.bf16.msra.mxu0 %v4636
    %4990 = vmatmul.bf16.gmra.mxu0 %v3743
    %v4991 = vpop.f32.mrf.mxu0
    %v4992 = vadd.f32 %v4978, %v4991
    %v4993 = vpop.f32.mrf.mxu0
    %v4994 = vadd.f32 %v4980, %v4993
    %4995 = vdwg.mxu0
    %v4996 = vadd.f32 %v3238, %v4992
    %v4997 = vadd.f32 %v3239, %v4994
    %v4998 = vld [vmem:[%s23] sm:$0x1]
    %v4999 = vld [vmem:[%s24] sm:$0x1]
    %v5000 = vsel %vm111, %v4996, 0.0
    %5001 = vadd.xlane.f32.xlu0 %v5000
    %v5002 = vpop.xlane.xlu0 %5001
    %v5003 = vsel %vm111, %v4997, 0.0
    %5004 = vadd.xlane.f32.xlu0 %v5003
    %v5005 = vpop.xlane.xlu0 %5004
    %v5006 = vmul.f32 %v5002, %v708
    %v5007 = vmul.f32 %v5005, %v708
    %v5008 = vmul.f32 %v4996, %v4996
    %v5009 = vmul.f32 %v4997, %v4997
    %v5010 = vsel %vm111, %v5008, 0.0
    %5011 = vadd.xlane.f32.xlu0 %v5010
    %v5012 = vpop.xlane.xlu0 %5011
    %v5013 = vsel %vm111, %v5009, 0.0
    %5014 = vadd.xlane.f32.xlu0 %v5013
    %v5015 = vpop.xlane.xlu0 %5014
    %v5016 = vmul.f32 %v5012, %v708
    %v5017 = vmul.f32 %v5015, %v708
    %v5018 = vmul.f32 %v5006, %v5006
    %v5019 = vmul.f32 %v5007, %v5007
    %v5020 = vsub.f32 %v5016, %v5018
    %v5021 = vsub.f32 %v5017, %v5019
    %v5022 = vsub.f32 %v4996, %v5006
    %v5023 = vsub.f32 %v4997, %v5007
    %v5024 = vadd.f32 %v5020, 1e-05
    %v5025 = vadd.f32 %v5021, 1e-05
    %v5026 = vrsqrt.pop %v5024
    %v5027 = vmul.f32 %v5026, %v5024
    %v5028 = vmul.f32 %v5027, %v5026
    %v5029 = vmul.f32 0.5, %v5028
    %v5030 = vsub.f32 1.5, %v5029
    %v5031 = vmul.f32 %v5026, %v5030
    %vm5032 = vweird.f32 %v5024
    %vm5033 = vweird.f32 %v5026
    %vm5034 = vmor %vm5032, %vm5033
    %v5035 = vsel %vm5034, %v5026, %v5031
    %v5036 = vrsqrt.pop %v5025
    %v5037 = vmul.f32 %v5036, %v5025
    %v5038 = vmul.f32 %v5037, %v5036
    %v5039 = vmul.f32 0.5, %v5038
    %v5040 = vsub.f32 1.5, %v5039
    %v5041 = vmul.f32 %v5036, %v5040
    %vm5042 = vweird.f32 %v5025
    %vm5043 = vweird.f32 %v5036
    %vm5044 = vmor %vm5042, %vm5043
    %v5045 = vsel %vm5044, %v5036, %v5041
    %v5046 = vmul.f32 %v5022, %v5035
    %v5047 = vmul.f32 %v5023, %v5045
    %v5049 = vperm.slane %v4998, 0
    %v5051 = vmul.f32 %v5046, %v5049
    %v5052 = vmul.f32 %v5047, %v5049
    %v5054 = vperm.slane %v4999, 0
    %v5056 = vadd.f32 %v5051, %v5054
    %v5057 = vadd.f32 %v5052, %v5054
    %v5058 = vpack.c.bf16 %v5057, %v5056
    %v5059 = vld [vmem:[%s25] sm:$0xf]
    %v5060 = vld [vmem:[%s25 + $0x4] sm:$0xf]
    %v5061 = vld [vmem:[%s25 + $0x8] sm:$0xf]
    %v5062 = vld [vmem:[%s25 + $0xc] sm:$0xf]
    %v5063 = vld [vmem:[%s26] sm:$0x1]
    %v5065 = vperm.slane %v5063, 0
    %v5071 = vunpack.c.l.b16 %v5059
    %v5072 = vunpack.c.l.b16 %v5060
    %v5073 = vunpack.c.l.b16 %v5061
    %v5074 = vunpack.c.l.b16 %v5062
    %v5075 = vpack.c.b16 %v5072, %v5071
    %v5076 = vpack.c.b16 %v5074, %v5073
    %v5080 = vsel %vm111, %v5058, 0
    %5082 = vmatpush.bf16.msra.mxu0 0
    %5083 = vmatpush.bf16.msra.mxu0 0
    %5084 = vmatpush.bf16.msra.mxu0 0
    %5085 = vmatpush.bf16.msra.mxu0 0
    %5086 = vmatpush.bf16.msra.mxu0 0
    %5087 = vmatpush.bf16.msra.mxu0 0
    %5088 = vmatpush.bf16.msra.mxu0 %v5076
    %5089 = vmatpush.bf16.msra.mxu0 %v5075
    %5090 = vmatmul.bf16.gmra.mxu0 %v5080
    %v5091 = vpop.f32.mrf.mxu0
    %v5092 = vadd.f32 %v5065, %v5091
    %v5093 = vpop.f32.mrf.mxu0
    %v5094 = vadd.f32 %v5065, %v5093
    %5095 = vdwg.mxu0
    %v5096 = vmax.f32 %v5092, 0.0
    %v5097 = vmax.f32 %v5094, 0.0
    %5098 = vst.msk [vmem:[#allocation2] sm:$0xff] %vm111, %v5096
    %5099 = vst.msk [vmem:[#allocation2 + $0x8] sm:$0xff] %vm111, %v5097
    // Predicated region
    $region110: #{tpu_custom_call.1} parent=1 // pred_check
      _
    $region111: #{tpu_custom_call.1} parent=1 // pred_check_branch
      %5101 = sbr.rel (0) target = $region113
    $region112: #{tpu_custom_call.1} parent=1 // pred_region
      %5103 = vsyncadd [#allocation3], 0
      %s5104 = sshll.u32 [#allocation2], 4
      %s5105 = int_to_ptr.vmem [resolvable:$true] %s5104
      %s5106 = sshll.u32 %s27, 4
      %s5107 = int_to_ptr.hbm [resolvable:$true] %s5106
      %5112 = dma.vmem_to_hbm [thread:$0]  %s5105, 256, %s5107, [#allocation3], 128, 128, 8
    $region113: #{tpu_custom_call.1} parent=1 // pred_fallthru
      _
    // Predicated region
    $region114: #{tpu_custom_call.1} parent=1 // pred_check
      _
    $region115: #{tpu_custom_call.1} parent=1 // pred_check_branch
      %5114 = sbr.rel (0) target = $region117
    $region116: #{tpu_custom_call.1} parent=1 // pred_region
      %5116 = dma.done [#allocation3], 256
    $region117: #{tpu_custom_call.1} parent=1 // pred_fallthru
      _
    %5117 = vsyncpa [#allocation3], 1

</llo_original>
